<compile_context>
chip_gen: v7x
topology: tpu7x:2x2x1
jax: 0.10.0
libtpu: 0.0.40
codegen_flags: <defaults>
</compile_context>

<pallas_src>
import math
import functools

import jax
import jax.numpy as jnp
from jax.experimental import pallas as pl
from jax.experimental.pallas import tpu as pltpu


def _round_up(x, m):
    return ((x + m - 1) // m) * m


# ----------------------------------------------------------------------------
# Fused multi-layer LSTM kernel (single invocation, no grid).
# ----------------------------------------------------------------------------
def _make_encoder_kernel(layer_dims, seq_len, b_pad):
    """Builds the fused kernel for the stacked LSTM layers.

    Ref order: gx0, wih_1..wih_{L-1}, b_1..b_{L-1}, whh_0..whh_{L-1}, y, gx_scr
      gx0    : (T*Bp, 4*H0)  f32   precomputed layer-0 input gates X@Wih0 + b0
      wih_l  : (Din_l, 4*H_l) bf16 input->gate weights, layers 1..L-1
      b_l    : (1, 4*H_l)    f32   b_ih + b_hh, layers 1..L-1
      whh_l  : (H_l, 4*H_l)  bf16  hidden->gate weights, all layers
      y      : (T*Bp, 128)   f32   output / running activation slab (lane-dense)
      gx_scr : (T*Bp, 128)   f32   scratch for the hoisted input gates
    """
    n_layers = len(layer_dims)

    def kernel(*refs):
        it = iter(refs)
        gx0_ref = next(it)
        wih_refs = [next(it) for _ in range(n_layers - 1)]
        b_refs = [next(it) for _ in range(n_layers - 1)]
        whh_refs = [next(it) for _ in range(n_layers)]
        y_ref = next(it)
        gx_scr = next(it)

        for layer, (din, hsz) in enumerate(layer_dims):
            g4 = 4 * hsz

            # ---- hoisted input projection: one batched bf16 matmul per layer,
            # ---- entirely off the serial time-recurrence critical path.
            if layer == 0:
                gx = gx0_ref                       # precomputed outside (Din=1)
            else:
                x_in = y_ref[:, :din].astype(jnp.bfloat16)
                gx_scr[:, :g4] = (
                    jnp.dot(x_in, wih_refs[layer - 1][...],
                            preferred_element_type=jnp.float32)
                    + b_refs[layer - 1][...]
                )
                gx = gx_scr

            # Recurrent weights loaded ONCE per layer (outside the unrolled
            # loop) so they stay vreg-resident across all timesteps.
            whh = whh_refs[layer][...]             # (H, 4H) bf16

            # ---- serial recurrence: per step only h @ W_hh + nonlinearities.
            def step(t, carry):
                h_prev, c_prev = carry
                r0 = pl.multiple_of(t * b_pad, b_pad)
                gates = gx[pl.ds(r0, b_pad), :g4] + jnp.dot(
                    h_prev.astype(jnp.bfloat16), whh,
                    preferred_element_type=jnp.float32)
                # 2 packed transcendentals instead of 4 per-gate ones.
                sig = jax.nn.sigmoid(gates)
                tnh = jnp.tanh(gates)
                i_g = sig[:, 0 * hsz:1 * hsz]
                f_g = sig[:, 1 * hsz:2 * hsz]
                g_g = tnh[:, 2 * hsz:3 * hsz]
                o_g = sig[:, 3 * hsz:4 * hsz]
                c_new = f_g * c_prev + i_g * g_g
                h_new = o_g * jnp.tanh(c_new)
                y_ref[pl.ds(r0, b_pad), :hsz] = h_new.astype(y_ref.dtype)
                return h_new, c_new

            zeros = jnp.zeros((b_pad, hsz), jnp.float32)
            jax.lax.fori_loop(0, seq_len, step, (zeros, zeros), unroll=True)

    return kernel


# ----------------------------------------------------------------------------
# Forward pass matching EncoderLSTM.forward
# ----------------------------------------------------------------------------
@functools.partial(jax.jit, static_argnames=("layer_dims", "h_out"))
def encoder_lstm_forward(x, wih0, b0, wih_rest, b_rest, whh_all, *,
                         layer_dims, h_out):
    """x: (B, T) float32 -> (B, T, h_out), matching EncoderLSTM.forward."""
    B, T = x.shape
    Bp = _round_up(B, 8)                         # pad batch to a sublane group
    L = len(layer_dims)
    h_max = max(h for _, h in layer_dims)
    slab_lanes = _round_up(h_max, 128)           # lane-dense output slab
    rest_widths = [4 * h for _, h in layer_dims[1:]] or [128]
    g_scr_lanes = _round_up(max(rest_widths), 128)

    # Layer-0 input projection hoisted out of the kernel entirely: Din == 1,
    # so it is a rank-1 broadcast multiply (no K=1 matmul anywhere), kept f32.
    x_tm = jnp.zeros((T, Bp), jnp.float32).at[:, :B].set(jnp.transpose(x))
    gx0 = x_tm.reshape(T * Bp, 1) * wih0 + b0    # (T*Bp, 4*H0) f32

    n_in = 1 + (L - 1) + (L - 1) + L
    y = pl.pallas_call(
        _make_encoder_kernel(layer_dims, T, Bp),
        out_shape=jax.ShapeDtypeStruct((T * Bp, slab_lanes), jnp.float32),
        in_specs=[pl.BlockSpec(memory_space=pltpu.MemorySpace.VMEM)] * n_in,
        out_specs=pl.BlockSpec(memory_space=pltpu.MemorySpace.VMEM),
        scratch_shapes=[pltpu.VMEM((T * Bp, g_scr_lanes), jnp.float32)],
    )(gx0, *wih_rest, *b_rest, *whh_all)

    # (T*Bp, slab) -> (B, T, h_out): drop batch/lane padding, back to batch_first.
    y = y.reshape(T, Bp, slab_lanes)[:, :B, :h_out]
    return jnp.transpose(y, (1, 0, 2))


# ----------------------------------------------------------------------------
# Parameter construction (deterministic, PyTorch-like uniform init) + packing.
# ----------------------------------------------------------------------------
def init_encoder_params(key, input_size, hidden_size, window_size):
    """Raw PyTorch-layout params for the 2*window_size stacked LSTM layers."""
    layer_dims = []
    for l in range(window_size):                        # lstm1
        layer_dims.append((input_size if l == 0 else hidden_size[0], hidden_size[0]))
    for l in range(window_size):                        # lstm2
        layer_dims.append((hidden_size[0] if l == 0 else hidden_size[1], hidden_size[1]))

    layers = []
    for din, h in layer_dims:
        bound = 1.0 / math.sqrt(h)
        key, k1, k2, k3, k4 = jax.random.split(key, 5)
        w_ih = jax.random.uniform(k1, (4 * h, din), minval=-bound, maxval=bound,
                                  dtype=jnp.float32)
        w_hh = jax.random.uniform(k2, (4 * h, h), minval=-bound, maxval=bound,
                                  dtype=jnp.float32)
        b_ih = jax.random.uniform(k3, (4 * h,), minval=-bound, maxval=bound,
                                  dtype=jnp.float32)
        b_hh = jax.random.uniform(k4, (4 * h,), minval=-bound, maxval=bound,
                                  dtype=jnp.float32)
        layers.append((w_ih, w_hh, b_ih, b_hh))
    return layers


def pack_encoder_params(layers):
    """PyTorch layout -> kernel layout.

    Gates stay packed contiguously ([i|f|g|o], each exactly H wide), so W_hh is
    its true (H, 4H) size (no per-gate 128-lane zero padding).  W_hh and W_ih
    (layers >= 1) are cast to bf16 for single-pass MXU matmuls with f32
    accumulation; biases and layer-0's Din=1 projection stay f32.
    """
    layer_dims = tuple((w_ih.shape[1], w_hh.shape[1])
                       for (w_ih, w_hh, _, _) in layers)
    wih0 = b0 = None
    wih_rest, b_rest, whh_all = [], [], []
    for l, (w_ih, w_hh, b_ih, b_hh) in enumerate(layers):
        bias = (b_ih + b_hh).reshape(1, -1).astype(jnp.float32)
        whh_all.append(jnp.transpose(w_hh).astype(jnp.bfloat16))        # (H, 4H)
        if l == 0:
            wih0 = jnp.transpose(w_ih).astype(jnp.float32)              # (1, 4H)
            b0 = bias
        else:
            wih_rest.append(jnp.transpose(w_ih).astype(jnp.bfloat16))   # (Din, 4H)
            b_rest.append(bias)
    return wih0, b0, tuple(wih_rest), tuple(b_rest), tuple(whh_all), layer_dims


# ----------------------------------------------------------------------------
# Pure-JAX reference (lax.scan) used for verification.
# ----------------------------------------------------------------------------
def encoder_lstm_ref(x, layers, *, emulate_kernel_precision=False):
    """Reference.  emulate_kernel_precision=True reproduces the kernel's
    numerics (bf16 matmul operands for W_hh everywhere and W_ih on layers>=1,
    f32 accumulation / gate math) for a tight comparison; False is the
    PyTorch-faithful full-f32 path."""
    bf16 = jnp.bfloat16
    B, T = x.shape
    h_seq = jnp.transpose(x.reshape(B, T, 1), (1, 0, 2))   # (T, B, Din)
    for l, (w_ih, w_hh, b_ih, b_hh) in enumerate(layers):
        h_sz = w_hh.shape[1]
        wih_t = jnp.transpose(w_ih)
        whh_t = jnp.transpose(w_hh)
        b = (b_ih + b_hh).reshape(1, -1)
        if emulate_kernel_precision:
            whh_mm = whh_t.astype(bf16)
            x_mm = h_seq if l == 0 else h_seq.astype(bf16)
            wih_mm = wih_t if l == 0 else wih_t.astype(bf16)
        else:
            whh_mm, x_mm, wih_mm = whh_t, h_seq, wih_t

        gx = jnp.einsum("tbd,dg->tbg", x_mm, wih_mm,
                        preferred_element_type=jnp.float32) + b

        def step(carry, gx_t):
            h, c = carry
            h_mm = h.astype(bf16) if emulate_kernel_precision else h
            gates = gx_t + jnp.dot(h_mm, whh_mm,
                                   preferred_element_type=jnp.float32)
            i_g = jax.nn.sigmoid(gates[:, 0 * h_sz:1 * h_sz])
            f_g = jax.nn.sigmoid(gates[:, 1 * h_sz:2 * h_sz])
            g_g = jnp.tanh(gates[:, 2 * h_sz:3 * h_sz])
            o_g = jax.nn.sigmoid(gates[:, 3 * h_sz:4 * h_sz])
            c = f_g * c + i_g * g_g
            h = o_g * jnp.tanh(c)
            return (h, c), h

        init = (jnp.zeros((B, h_sz), jnp.float32),
                jnp.zeros((B, h_sz), jnp.float32))
        _, h_seq = jax.lax.scan(step, init, gx)
    return jnp.transpose(h_seq, (1, 0, 2))


# ----------------------------------------------------------------------------
if __name__ == "__main__":
    # Module hyperparameters (small, consistent with forward semantics).
    B, T = 2, 8                 # batch, sequence length
    input_size = 1              # forward() views input to (B, T, 1)
    hidden_size = (32, 16)      # hidden_size[0], hidden_size[1]
    window_size = 2             # num_layers of each nn.LSTM
    # dropout_rate unused in forward(); bidirectional=False (see header note).

    key = jax.random.PRNGKey(0)
    kx, kp = jax.random.split(key)
    x = jax.random.normal(kx, (B, T), dtype=jnp.float32)

    layers = init_encoder_params(kp, input_size, hidden_size, window_size)
    wih0, b0, wih_rest, b_rest, whh_all, layer_dims = pack_encoder_params(layers)

    y = encoder_lstm_forward(x, wih0, b0, wih_rest, b_rest, whh_all,
                             layer_dims=layer_dims, h_out=hidden_size[1])
    y = jax.block_until_ready(y)

    # Tight check against a reference that emulates the kernel's bf16-weight /
    # f32-accumulation numerics, plus a loose sanity check against pure f32.
    y_ref_em = encoder_lstm_ref(x, layers, emulate_kernel_precision=True)
    y_ref_f32 = encoder_lstm_ref(x, layers, emulate_kernel_precision=False)

    assert y.shape == (B, T, hidden_size[1]), y.shape
    err_em = float(jnp.max(jnp.abs(y - y_ref_em)))
    err_f32 = float(jnp.max(jnp.abs(y - y_ref_f32)))
    assert err_em < 5e-3, (err_em, err_f32)
    assert err_f32 < 5e-2, (err_em, err_f32)

    print("KERNEL_OK")
</pallas_src>

<mosaic_0001>
module attributes {stable_mosaic.version = 11 : i64} {
  func.func @kernel(%arg0: memref<64x128xf32, #tpu.memory_space<vmem>>, %arg1: memref<32x128xbf16, #tpu.memory_space<vmem>>, %arg2: memref<32x64xbf16, #tpu.memory_space<vmem>>, %arg3: memref<16x64xbf16, #tpu.memory_space<vmem>>, %arg4: memref<1x128xf32, #tpu.memory_space<vmem>>, %arg5: memref<1x64xf32, #tpu.memory_space<vmem>>, %arg6: memref<1x64xf32, #tpu.memory_space<vmem>>, %arg7: memref<32x128xbf16, #tpu.memory_space<vmem>>, %arg8: memref<32x128xbf16, #tpu.memory_space<vmem>>, %arg9: memref<16x64xbf16, #tpu.memory_space<vmem>>, %arg10: memref<16x64xbf16, #tpu.memory_space<vmem>>, %arg11: memref<64x128xf32, #tpu.memory_space<vmem>>, %arg12: memref<64x128xf32, #tpu.memory_space<vmem>>) attributes {dimension_semantics = [], scalar_prefetch = 0 : i64, scratch_operands = 1 : i64, tpu.core_type = #tpu.core_type<tc>} {
    %c0 = arith.constant 0 : index
    %c0_0 = arith.constant 0 : index
    %0 = vector.load %arg7[%c0, %c0_0] : memref<32x128xbf16, #tpu.memory_space<vmem>>, vector<32x128xbf16>
    %cst = arith.constant 0.000000e+00 : f32
    %1 = vector.broadcast %cst : f32 to vector<8x32xf32>
    %c0_i32 = arith.constant 0 : i32
    %c8_i32 = arith.constant 8 : i32
    %2 = arith.muli %c0_i32, %c8_i32 : i32
    %3 = tpu.assume_multiple %2, 8 : i32
    %4 = arith.index_cast %3 : i32 to index
    %c0_1 = arith.constant 0 : index
    %5 = vector.load %arg0[%4, %c0_1] : memref<64x128xf32, #tpu.memory_space<vmem>>, vector<8x128xf32>
    %6 = arith.truncf %1 : vector<8x32xf32> to vector<8x32xbf16>
    %cst_2 = arith.constant dense<0.000000e+00> : vector<8x128xf32>
    %7 = tpu.matmul %6, %0, %cst_2 {dimension_numbers = #tpu.dot_dimension_numbers<[1], [0], [0], [1], [0, 0, 1, 1], [], []>} : vector<8x32xbf16>, vector<32x128xbf16>, vector<8x128xf32> -> vector<8x128xf32>
    %8 = arith.addf %5, %7 : vector<8x128xf32>
    %9 = arith.negf %8 : vector<8x128xf32>
    %10 = math.exp %9 : vector<8x128xf32>
    %cst_3 = arith.constant 1.000000e+00 : f32
    %11 = vector.broadcast %cst_3 : f32 to vector<8x128xf32>
    %12 = arith.addf %11, %10 : vector<8x128xf32>
    %13 = arith.divf %11, %12 : vector<8x128xf32>
    %14 = math.tanh %8 : vector<8x128xf32>
    %15 = vector.extract_strided_slice %13 {offsets = [0, 0], sizes = [8, 32], strides = [1, 1]} : vector<8x128xf32> to vector<8x32xf32>
    %16 = vector.extract_strided_slice %13 {offsets = [0, 32], sizes = [8, 32], strides = [1, 1]} : vector<8x128xf32> to vector<8x32xf32>
    %17 = vector.extract_strided_slice %14 {offsets = [0, 64], sizes = [8, 32], strides = [1, 1]} : vector<8x128xf32> to vector<8x32xf32>
    %18 = vector.extract_strided_slice %13 {offsets = [0, 96], sizes = [8, 32], strides = [1, 1]} : vector<8x128xf32> to vector<8x32xf32>
    %19 = arith.mulf %16, %1 : vector<8x32xf32>
    %20 = arith.mulf %15, %17 : vector<8x32xf32>
    %21 = arith.addf %19, %20 : vector<8x32xf32>
    %22 = math.tanh %21 : vector<8x32xf32>
    %23 = arith.mulf %18, %22 : vector<8x32xf32>
    %24 = arith.index_cast %3 : i32 to index
    %c0_4 = arith.constant 0 : index
    %25 = vector.load %arg11[%24, %c0_4] : memref<64x128xf32, #tpu.memory_space<vmem>>, vector<8x32xf32>
    tpu.vector_store %arg11[%24, %c0_4], %23 {strides = array<i32>} : memref<64x128xf32, #tpu.memory_space<vmem>>, vector<8x32xf32>,
    %c1_i32 = arith.constant 1 : i32
    %c8_i32_5 = arith.constant 8 : i32
    %26 = arith.muli %c1_i32, %c8_i32_5 : i32
    %27 = tpu.assume_multiple %26, 8 : i32
    %28 = arith.index_cast %27 : i32 to index
    %c0_6 = arith.constant 0 : index
    %29 = vector.load %arg0[%28, %c0_6] : memref<64x128xf32, #tpu.memory_space<vmem>>, vector<8x128xf32>
    %30 = arith.truncf %23 : vector<8x32xf32> to vector<8x32xbf16>
    %cst_7 = arith.constant dense<0.000000e+00> : vector<8x128xf32>
    %31 = tpu.matmul %30, %0, %cst_7 {dimension_numbers = #tpu.dot_dimension_numbers<[1], [0], [0], [1], [0, 0, 1, 1], [], []>} : vector<8x32xbf16>, vector<32x128xbf16>, vector<8x128xf32> -> vector<8x128xf32>
    %32 = arith.addf %29, %31 : vector<8x128xf32>
    %33 = arith.negf %32 : vector<8x128xf32>
    %34 = math.exp %33 : vector<8x128xf32>
    %cst_8 = arith.constant 1.000000e+00 : f32
    %35 = vector.broadcast %cst_8 : f32 to vector<8x128xf32>
    %36 = arith.addf %35, %34 : vector<8x128xf32>
    %37 = arith.divf %35, %36 : vector<8x128xf32>
    %38 = math.tanh %32 : vector<8x128xf32>
    %39 = vector.extract_strided_slice %37 {offsets = [0, 0], sizes = [8, 32], strides = [1, 1]} : vector<8x128xf32> to vector<8x32xf32>
    %40 = vector.extract_strided_slice %37 {offsets = [0, 32], sizes = [8, 32], strides = [1, 1]} : vector<8x128xf32> to vector<8x32xf32>
    %41 = vector.extract_strided_slice %38 {offsets = [0, 64], sizes = [8, 32], strides = [1, 1]} : vector<8x128xf32> to vector<8x32xf32>
    %42 = vector.extract_strided_slice %37 {offsets = [0, 96], sizes = [8, 32], strides = [1, 1]} : vector<8x128xf32> to vector<8x32xf32>
    %43 = arith.mulf %40, %21 : vector<8x32xf32>
    %44 = arith.mulf %39, %41 : vector<8x32xf32>
    %45 = arith.addf %43, %44 : vector<8x32xf32>
    %46 = math.tanh %45 : vector<8x32xf32>
    %47 = arith.mulf %42, %46 : vector<8x32xf32>
    %48 = arith.index_cast %27 : i32 to index
    %c0_9 = arith.constant 0 : index
    %49 = vector.load %arg11[%48, %c0_9] : memref<64x128xf32, #tpu.memory_space<vmem>>, vector<8x32xf32>
    tpu.vector_store %arg11[%48, %c0_9], %47 {strides = array<i32>} : memref<64x128xf32, #tpu.memory_space<vmem>>, vector<8x32xf32>,
    %c2_i32 = arith.constant 2 : i32
    %c8_i32_10 = arith.constant 8 : i32
    %50 = arith.muli %c2_i32, %c8_i32_10 : i32
    %51 = tpu.assume_multiple %50, 8 : i32
    %52 = arith.index_cast %51 : i32 to index
    %c0_11 = arith.constant 0 : index
    %53 = vector.load %arg0[%52, %c0_11] : memref<64x128xf32, #tpu.memory_space<vmem>>, vector<8x128xf32>
    %54 = arith.truncf %47 : vector<8x32xf32> to vector<8x32xbf16>
    %cst_12 = arith.constant dense<0.000000e+00> : vector<8x128xf32>
    %55 = tpu.matmul %54, %0, %cst_12 {dimension_numbers = #tpu.dot_dimension_numbers<[1], [0], [0], [1], [0, 0, 1, 1], [], []>} : vector<8x32xbf16>, vector<32x128xbf16>, vector<8x128xf32> -> vector<8x128xf32>
    %56 = arith.addf %53, %55 : vector<8x128xf32>
    %57 = arith.negf %56 : vector<8x128xf32>
    %58 = math.exp %57 : vector<8x128xf32>
    %cst_13 = arith.constant 1.000000e+00 : f32
    %59 = vector.broadcast %cst_13 : f32 to vector<8x128xf32>
    %60 = arith.addf %59, %58 : vector<8x128xf32>
    %61 = arith.divf %59, %60 : vector<8x128xf32>
    %62 = math.tanh %56 : vector<8x128xf32>
    %63 = vector.extract_strided_slice %61 {offsets = [0, 0], sizes = [8, 32], strides = [1, 1]} : vector<8x128xf32> to vector<8x32xf32>
    %64 = vector.extract_strided_slice %61 {offsets = [0, 32], sizes = [8, 32], strides = [1, 1]} : vector<8x128xf32> to vector<8x32xf32>
    %65 = vector.extract_strided_slice %62 {offsets = [0, 64], sizes = [8, 32], strides = [1, 1]} : vector<8x128xf32> to vector<8x32xf32>
    %66 = vector.extract_strided_slice %61 {offsets = [0, 96], sizes = [8, 32], strides = [1, 1]} : vector<8x128xf32> to vector<8x32xf32>
    %67 = arith.mulf %64, %45 : vector<8x32xf32>
    %68 = arith.mulf %63, %65 : vector<8x32xf32>
    %69 = arith.addf %67, %68 : vector<8x32xf32>
    %70 = math.tanh %69 : vector<8x32xf32>
    %71 = arith.mulf %66, %70 : vector<8x32xf32>
    %72 = arith.index_cast %51 : i32 to index
    %c0_14 = arith.constant 0 : index
    %73 = vector.load %arg11[%72, %c0_14] : memref<64x128xf32, #tpu.memory_space<vmem>>, vector<8x32xf32>
    tpu.vector_store %arg11[%72, %c0_14], %71 {strides = array<i32>} : memref<64x128xf32, #tpu.memory_space<vmem>>, vector<8x32xf32>,
    %c3_i32 = arith.constant 3 : i32
    %c8_i32_15 = arith.constant 8 : i32
    %74 = arith.muli %c3_i32, %c8_i32_15 : i32
    %75 = tpu.assume_multiple %74, 8 : i32
    %76 = arith.index_cast %75 : i32 to index
    %c0_16 = arith.constant 0 : index
    %77 = vector.load %arg0[%76, %c0_16] : memref<64x128xf32, #tpu.memory_space<vmem>>, vector<8x128xf32>
    %78 = arith.truncf %71 : vector<8x32xf32> to vector<8x32xbf16>
    %cst_17 = arith.constant dense<0.000000e+00> : vector<8x128xf32>
    %79 = tpu.matmul %78, %0, %cst_17 {dimension_numbers = #tpu.dot_dimension_numbers<[1], [0], [0], [1], [0, 0, 1, 1], [], []>} : vector<8x32xbf16>, vector<32x128xbf16>, vector<8x128xf32> -> vector<8x128xf32>
    %80 = arith.addf %77, %79 : vector<8x128xf32>
    %81 = arith.negf %80 : vector<8x128xf32>
    %82 = math.exp %81 : vector<8x128xf32>
    %cst_18 = arith.constant 1.000000e+00 : f32
    %83 = vector.broadcast %cst_18 : f32 to vector<8x128xf32>
    %84 = arith.addf %83, %82 : vector<8x128xf32>
    %85 = arith.divf %83, %84 : vector<8x128xf32>
    %86 = math.tanh %80 : vector<8x128xf32>
    %87 = vector.extract_strided_slice %85 {offsets = [0, 0], sizes = [8, 32], strides = [1, 1]} : vector<8x128xf32> to vector<8x32xf32>
    %88 = vector.extract_strided_slice %85 {offsets = [0, 32], sizes = [8, 32], strides = [1, 1]} : vector<8x128xf32> to vector<8x32xf32>
    %89 = vector.extract_strided_slice %86 {offsets = [0, 64], sizes = [8, 32], strides = [1, 1]} : vector<8x128xf32> to vector<8x32xf32>
    %90 = vector.extract_strided_slice %85 {offsets = [0, 96], sizes = [8, 32], strides = [1, 1]} : vector<8x128xf32> to vector<8x32xf32>
    %91 = arith.mulf %88, %69 : vector<8x32xf32>
    %92 = arith.mulf %87, %89 : vector<8x32xf32>
    %93 = arith.addf %91, %92 : vector<8x32xf32>
    %94 = math.tanh %93 : vector<8x32xf32>
    %95 = arith.mulf %90, %94 : vector<8x32xf32>
    %96 = arith.index_cast %75 : i32 to index
    %c0_19 = arith.constant 0 : index
    %97 = vector.load %arg11[%96, %c0_19] : memref<64x128xf32, #tpu.memory_space<vmem>>, vector<8x32xf32>
    tpu.vector_store %arg11[%96, %c0_19], %95 {strides = array<i32>} : memref<64x128xf32, #tpu.memory_space<vmem>>, vector<8x32xf32>,
    %c4_i32 = arith.constant 4 : i32
    %c8_i32_20 = arith.constant 8 : i32
    %98 = arith.muli %c4_i32, %c8_i32_20 : i32
    %99 = tpu.assume_multiple %98, 8 : i32
    %100 = arith.index_cast %99 : i32 to index
    %c0_21 = arith.constant 0 : index
    %101 = vector.load %arg0[%100, %c0_21] : memref<64x128xf32, #tpu.memory_space<vmem>>, vector<8x128xf32>
    %102 = arith.truncf %95 : vector<8x32xf32> to vector<8x32xbf16>
    %cst_22 = arith.constant dense<0.000000e+00> : vector<8x128xf32>
    %103 = tpu.matmul %102, %0, %cst_22 {dimension_numbers = #tpu.dot_dimension_numbers<[1], [0], [0], [1], [0, 0, 1, 1], [], []>} : vector<8x32xbf16>, vector<32x128xbf16>, vector<8x128xf32> -> vector<8x128xf32>
    %104 = arith.addf %101, %103 : vector<8x128xf32>
    %105 = arith.negf %104 : vector<8x128xf32>
    %106 = math.exp %105 : vector<8x128xf32>
    %cst_23 = arith.constant 1.000000e+00 : f32
    %107 = vector.broadcast %cst_23 : f32 to vector<8x128xf32>
    %108 = arith.addf %107, %106 : vector<8x128xf32>
    %109 = arith.divf %107, %108 : vector<8x128xf32>
    %110 = math.tanh %104 : vector<8x128xf32>
    %111 = vector.extract_strided_slice %109 {offsets = [0, 0], sizes = [8, 32], strides = [1, 1]} : vector<8x128xf32> to vector<8x32xf32>
    %112 = vector.extract_strided_slice %109 {offsets = [0, 32], sizes = [8, 32], strides = [1, 1]} : vector<8x128xf32> to vector<8x32xf32>
    %113 = vector.extract_strided_slice %110 {offsets = [0, 64], sizes = [8, 32], strides = [1, 1]} : vector<8x128xf32> to vector<8x32xf32>
    %114 = vector.extract_strided_slice %109 {offsets = [0, 96], sizes = [8, 32], strides = [1, 1]} : vector<8x128xf32> to vector<8x32xf32>
    %115 = arith.mulf %112, %93 : vector<8x32xf32>
    %116 = arith.mulf %111, %113 : vector<8x32xf32>
    %117 = arith.addf %115, %116 : vector<8x32xf32>
    %118 = math.tanh %117 : vector<8x32xf32>
    %119 = arith.mulf %114, %118 : vector<8x32xf32>
    %120 = arith.index_cast %99 : i32 to index
    %c0_24 = arith.constant 0 : index
    %121 = vector.load %arg11[%120, %c0_24] : memref<64x128xf32, #tpu.memory_space<vmem>>, vector<8x32xf32>
    tpu.vector_store %arg11[%120, %c0_24], %119 {strides = array<i32>} : memref<64x128xf32, #tpu.memory_space<vmem>>, vector<8x32xf32>,
    %c5_i32 = arith.constant 5 : i32
    %c8_i32_25 = arith.constant 8 : i32
    %122 = arith.muli %c5_i32, %c8_i32_25 : i32
    %123 = tpu.assume_multiple %122, 8 : i32
    %124 = arith.index_cast %123 : i32 to index
    %c0_26 = arith.constant 0 : index
    %125 = vector.load %arg0[%124, %c0_26] : memref<64x128xf32, #tpu.memory_space<vmem>>, vector<8x128xf32>
    %126 = arith.truncf %119 : vector<8x32xf32> to vector<8x32xbf16>
    %cst_27 = arith.constant dense<0.000000e+00> : vector<8x128xf32>
    %127 = tpu.matmul %126, %0, %cst_27 {dimension_numbers = #tpu.dot_dimension_numbers<[1], [0], [0], [1], [0, 0, 1, 1], [], []>} : vector<8x32xbf16>, vector<32x128xbf16>, vector<8x128xf32> -> vector<8x128xf32>
    %128 = arith.addf %125, %127 : vector<8x128xf32>
    %129 = arith.negf %128 : vector<8x128xf32>
    %130 = math.exp %129 : vector<8x128xf32>
    %cst_28 = arith.constant 1.000000e+00 : f32
    %131 = vector.broadcast %cst_28 : f32 to vector<8x128xf32>
    %132 = arith.addf %131, %130 : vector<8x128xf32>
    %133 = arith.divf %131, %132 : vector<8x128xf32>
    %134 = math.tanh %128 : vector<8x128xf32>
    %135 = vector.extract_strided_slice %133 {offsets = [0, 0], sizes = [8, 32], strides = [1, 1]} : vector<8x128xf32> to vector<8x32xf32>
    %136 = vector.extract_strided_slice %133 {offsets = [0, 32], sizes = [8, 32], strides = [1, 1]} : vector<8x128xf32> to vector<8x32xf32>
    %137 = vector.extract_strided_slice %134 {offsets = [0, 64], sizes = [8, 32], strides = [1, 1]} : vector<8x128xf32> to vector<8x32xf32>
    %138 = vector.extract_strided_slice %133 {offsets = [0, 96], sizes = [8, 32], strides = [1, 1]} : vector<8x128xf32> to vector<8x32xf32>
    %139 = arith.mulf %136, %117 : vector<8x32xf32>
    %140 = arith.mulf %135, %137 : vector<8x32xf32>
    %141 = arith.addf %139, %140 : vector<8x32xf32>
    %142 = math.tanh %141 : vector<8x32xf32>
    %143 = arith.mulf %138, %142 : vector<8x32xf32>
    %144 = arith.index_cast %123 : i32 to index
    %c0_29 = arith.constant 0 : index
    %145 = vector.load %arg11[%144, %c0_29] : memref<64x128xf32, #tpu.memory_space<vmem>>, vector<8x32xf32>
    tpu.vector_store %arg11[%144, %c0_29], %143 {strides = array<i32>} : memref<64x128xf32, #tpu.memory_space<vmem>>, vector<8x32xf32>,
    %c6_i32 = arith.constant 6 : i32
    %c8_i32_30 = arith.constant 8 : i32
    %146 = arith.muli %c6_i32, %c8_i32_30 : i32
    %147 = tpu.assume_multiple %146, 8 : i32
    %148 = arith.index_cast %147 : i32 to index
    %c0_31 = arith.constant 0 : index
    %149 = vector.load %arg0[%148, %c0_31] : memref<64x128xf32, #tpu.memory_space<vmem>>, vector<8x128xf32>
    %150 = arith.truncf %143 : vector<8x32xf32> to vector<8x32xbf16>
    %cst_32 = arith.constant dense<0.000000e+00> : vector<8x128xf32>
    %151 = tpu.matmul %150, %0, %cst_32 {dimension_numbers = #tpu.dot_dimension_numbers<[1], [0], [0], [1], [0, 0, 1, 1], [], []>} : vector<8x32xbf16>, vector<32x128xbf16>, vector<8x128xf32> -> vector<8x128xf32>
    %152 = arith.addf %149, %151 : vector<8x128xf32>
    %153 = arith.negf %152 : vector<8x128xf32>
    %154 = math.exp %153 : vector<8x128xf32>
    %cst_33 = arith.constant 1.000000e+00 : f32
    %155 = vector.broadcast %cst_33 : f32 to vector<8x128xf32>
    %156 = arith.addf %155, %154 : vector<8x128xf32>
    %157 = arith.divf %155, %156 : vector<8x128xf32>
    %158 = math.tanh %152 : vector<8x128xf32>
    %159 = vector.extract_strided_slice %157 {offsets = [0, 0], sizes = [8, 32], strides = [1, 1]} : vector<8x128xf32> to vector<8x32xf32>
    %160 = vector.extract_strided_slice %157 {offsets = [0, 32], sizes = [8, 32], strides = [1, 1]} : vector<8x128xf32> to vector<8x32xf32>
    %161 = vector.extract_strided_slice %158 {offsets = [0, 64], sizes = [8, 32], strides = [1, 1]} : vector<8x128xf32> to vector<8x32xf32>
    %162 = vector.extract_strided_slice %157 {offsets = [0, 96], sizes = [8, 32], strides = [1, 1]} : vector<8x128xf32> to vector<8x32xf32>
    %163 = arith.mulf %160, %141 : vector<8x32xf32>
    %164 = arith.mulf %159, %161 : vector<8x32xf32>
    %165 = arith.addf %163, %164 : vector<8x32xf32>
    %166 = math.tanh %165 : vector<8x32xf32>
    %167 = arith.mulf %162, %166 : vector<8x32xf32>
    %168 = arith.index_cast %147 : i32 to index
    %c0_34 = arith.constant 0 : index
    %169 = vector.load %arg11[%168, %c0_34] : memref<64x128xf32, #tpu.memory_space<vmem>>, vector<8x32xf32>
    tpu.vector_store %arg11[%168, %c0_34], %167 {strides = array<i32>} : memref<64x128xf32, #tpu.memory_space<vmem>>, vector<8x32xf32>,
    %c7_i32 = arith.constant 7 : i32
    %c8_i32_35 = arith.constant 8 : i32
    %170 = arith.muli %c7_i32, %c8_i32_35 : i32
    %171 = tpu.assume_multiple %170, 8 : i32
    %172 = arith.index_cast %171 : i32 to index
    %c0_36 = arith.constant 0 : index
    %173 = vector.load %arg0[%172, %c0_36] : memref<64x128xf32, #tpu.memory_space<vmem>>, vector<8x128xf32>
    %174 = arith.truncf %167 : vector<8x32xf32> to vector<8x32xbf16>
    %cst_37 = arith.constant dense<0.000000e+00> : vector<8x128xf32>
    %175 = tpu.matmul %174, %0, %cst_37 {dimension_numbers = #tpu.dot_dimension_numbers<[1], [0], [0], [1], [0, 0, 1, 1], [], []>} : vector<8x32xbf16>, vector<32x128xbf16>, vector<8x128xf32> -> vector<8x128xf32>
    %176 = arith.addf %173, %175 : vector<8x128xf32>
    %177 = arith.negf %176 : vector<8x128xf32>
    %178 = math.exp %177 : vector<8x128xf32>
    %cst_38 = arith.constant 1.000000e+00 : f32
    %179 = vector.broadcast %cst_38 : f32 to vector<8x128xf32>
    %180 = arith.addf %179, %178 : vector<8x128xf32>
    %181 = arith.divf %179, %180 : vector<8x128xf32>
    %182 = math.tanh %176 : vector<8x128xf32>
    %183 = vector.extract_strided_slice %181 {offsets = [0, 0], sizes = [8, 32], strides = [1, 1]} : vector<8x128xf32> to vector<8x32xf32>
    %184 = vector.extract_strided_slice %181 {offsets = [0, 32], sizes = [8, 32], strides = [1, 1]} : vector<8x128xf32> to vector<8x32xf32>
    %185 = vector.extract_strided_slice %182 {offsets = [0, 64], sizes = [8, 32], strides = [1, 1]} : vector<8x128xf32> to vector<8x32xf32>
    %186 = vector.extract_strided_slice %181 {offsets = [0, 96], sizes = [8, 32], strides = [1, 1]} : vector<8x128xf32> to vector<8x32xf32>
    %187 = arith.mulf %184, %165 : vector<8x32xf32>
    %188 = arith.mulf %183, %185 : vector<8x32xf32>
    %189 = arith.addf %187, %188 : vector<8x32xf32>
    %190 = math.tanh %189 : vector<8x32xf32>
    %191 = arith.mulf %186, %190 : vector<8x32xf32>
    %192 = arith.index_cast %171 : i32 to index
    %c0_39 = arith.constant 0 : index
    %193 = vector.load %arg11[%192, %c0_39] : memref<64x128xf32, #tpu.memory_space<vmem>>, vector<8x32xf32>
    tpu.vector_store %arg11[%192, %c0_39], %191 {strides = array<i32>} : memref<64x128xf32, #tpu.memory_space<vmem>>, vector<8x32xf32>,
    %c8_i32_40 = arith.constant 8 : i32
    %c0_41 = arith.constant 0 : index
    %c0_42 = arith.constant 0 : index
    %194 = vector.load %arg11[%c0_41, %c0_42] : memref<64x128xf32, #tpu.memory_space<vmem>>, vector<64x32xf32>
    %195 = arith.truncf %194 : vector<64x32xf32> to vector<64x32xbf16>
    %c0_43 = arith.constant 0 : index
    %c0_44 = arith.constant 0 : index
    %196 = vector.load %arg1[%c0_43, %c0_44] : memref<32x128xbf16, #tpu.memory_space<vmem>>, vector<32x128xbf16>
    %cst_45 = arith.constant dense<0.000000e+00> : vector<64x128xf32>
    %197 = tpu.matmul %195, %196, %cst_45 {dimension_numbers = #tpu.dot_dimension_numbers<[1], [0], [0], [1], [0, 0, 1, 1], [], []>} : vector<64x32xbf16>, vector<32x128xbf16>, vector<64x128xf32> -> vector<64x128xf32>
    %c0_46 = arith.constant 0 : index
    %c0_47 = arith.constant 0 : index
    %198 = vector.load %arg4[%c0_46, %c0_47] : memref<1x128xf32, #tpu.memory_space<vmem>>, vector<1x128xf32>
    %199 = vector.broadcast %198 : vector<1x128xf32> to vector<64x128xf32>
    %200 = arith.addf %197, %199 : vector<64x128xf32>
    %c0_48 = arith.constant 0 : index
    %c0_49 = arith.constant 0 : index
    %201 = vector.load %arg12[%c0_48, %c0_49] : memref<64x128xf32, #tpu.memory_space<vmem>>, vector<64x128xf32>
    tpu.vector_store %arg12[%c0_48, %c0_49], %200 {strides = array<i32>} : memref<64x128xf32, #tpu.memory_space<vmem>>, vector<64x128xf32>,
    %c0_50 = arith.constant 0 : index
    %c0_51 = arith.constant 0 : index
    %202 = vector.load %arg8[%c0_50, %c0_51] : memref<32x128xbf16, #tpu.memory_space<vmem>>, vector<32x128xbf16>
    %cst_52 = arith.constant 0.000000e+00 : f32
    %203 = vector.broadcast %cst_52 : f32 to vector<8x32xf32>
    %c0_i32_53 = arith.constant 0 : i32
    %c8_i32_54 = arith.constant 8 : i32
    %204 = arith.muli %c0_i32_53, %c8_i32_54 : i32
    %205 = tpu.assume_multiple %204, 8 : i32
    %206 = arith.index_cast %205 : i32 to index
    %c0_55 = arith.constant 0 : index
    %207 = vector.load %arg12[%206, %c0_55] : memref<64x128xf32, #tpu.memory_space<vmem>>, vector<8x128xf32>
    %208 = arith.truncf %203 : vector<8x32xf32> to vector<8x32xbf16>
    %cst_56 = arith.constant dense<0.000000e+00> : vector<8x128xf32>
    %209 = tpu.matmul %208, %202, %cst_56 {dimension_numbers = #tpu.dot_dimension_numbers<[1], [0], [0], [1], [0, 0, 1, 1], [], []>} : vector<8x32xbf16>, vector<32x128xbf16>, vector<8x128xf32> -> vector<8x128xf32>
    %210 = arith.addf %207, %209 : vector<8x128xf32>
    %211 = arith.negf %210 : vector<8x128xf32>
    %212 = math.exp %211 : vector<8x128xf32>
    %cst_57 = arith.constant 1.000000e+00 : f32
    %213 = vector.broadcast %cst_57 : f32 to vector<8x128xf32>
    %214 = arith.addf %213, %212 : vector<8x128xf32>
    %215 = arith.divf %213, %214 : vector<8x128xf32>
    %216 = math.tanh %210 : vector<8x128xf32>
    %217 = vector.extract_strided_slice %215 {offsets = [0, 0], sizes = [8, 32], strides = [1, 1]} : vector<8x128xf32> to vector<8x32xf32>
    %218 = vector.extract_strided_slice %215 {offsets = [0, 32], sizes = [8, 32], strides = [1, 1]} : vector<8x128xf32> to vector<8x32xf32>
    %219 = vector.extract_strided_slice %216 {offsets = [0, 64], sizes = [8, 32], strides = [1, 1]} : vector<8x128xf32> to vector<8x32xf32>
    %220 = vector.extract_strided_slice %215 {offsets = [0, 96], sizes = [8, 32], strides = [1, 1]} : vector<8x128xf32> to vector<8x32xf32>
    %221 = arith.mulf %218, %203 : vector<8x32xf32>
    %222 = arith.mulf %217, %219 : vector<8x32xf32>
    %223 = arith.addf %221, %222 : vector<8x32xf32>
    %224 = math.tanh %223 : vector<8x32xf32>
    %225 = arith.mulf %220, %224 : vector<8x32xf32>
    %226 = arith.index_cast %205 : i32 to index
    %c0_58 = arith.constant 0 : index
    %227 = vector.load %arg11[%226, %c0_58] : memref<64x128xf32, #tpu.memory_space<vmem>>, vector<8x32xf32>
    tpu.vector_store %arg11[%226, %c0_58], %225 {strides = array<i32>} : memref<64x128xf32, #tpu.memory_space<vmem>>, vector<8x32xf32>,
    %c1_i32_59 = arith.constant 1 : i32
    %c8_i32_60 = arith.constant 8 : i32
    %228 = arith.muli %c1_i32_59, %c8_i32_60 : i32
    %229 = tpu.assume_multiple %228, 8 : i32
    %230 = arith.index_cast %229 : i32 to index
    %c0_61 = arith.constant 0 : index
    %231 = vector.load %arg12[%230, %c0_61] : memref<64x128xf32, #tpu.memory_space<vmem>>, vector<8x128xf32>
    %232 = arith.truncf %225 : vector<8x32xf32> to vector<8x32xbf16>
    %cst_62 = arith.constant dense<0.000000e+00> : vector<8x128xf32>
    %233 = tpu.matmul %232, %202, %cst_62 {dimension_numbers = #tpu.dot_dimension_numbers<[1], [0], [0], [1], [0, 0, 1, 1], [], []>} : vector<8x32xbf16>, vector<32x128xbf16>, vector<8x128xf32> -> vector<8x128xf32>
    %234 = arith.addf %231, %233 : vector<8x128xf32>
    %235 = arith.negf %234 : vector<8x128xf32>
    %236 = math.exp %235 : vector<8x128xf32>
    %cst_63 = arith.constant 1.000000e+00 : f32
    %237 = vector.broadcast %cst_63 : f32 to vector<8x128xf32>
    %238 = arith.addf %237, %236 : vector<8x128xf32>
    %239 = arith.divf %237, %238 : vector<8x128xf32>
    %240 = math.tanh %234 : vector<8x128xf32>
    %241 = vector.extract_strided_slice %239 {offsets = [0, 0], sizes = [8, 32], strides = [1, 1]} : vector<8x128xf32> to vector<8x32xf32>
    %242 = vector.extract_strided_slice %239 {offsets = [0, 32], sizes = [8, 32], strides = [1, 1]} : vector<8x128xf32> to vector<8x32xf32>
    %243 = vector.extract_strided_slice %240 {offsets = [0, 64], sizes = [8, 32], strides = [1, 1]} : vector<8x128xf32> to vector<8x32xf32>
    %244 = vector.extract_strided_slice %239 {offsets = [0, 96], sizes = [8, 32], strides = [1, 1]} : vector<8x128xf32> to vector<8x32xf32>
    %245 = arith.mulf %242, %223 : vector<8x32xf32>
    %246 = arith.mulf %241, %243 : vector<8x32xf32>
    %247 = arith.addf %245, %246 : vector<8x32xf32>
    %248 = math.tanh %247 : vector<8x32xf32>
    %249 = arith.mulf %244, %248 : vector<8x32xf32>
    %250 = arith.index_cast %229 : i32 to index
    %c0_64 = arith.constant 0 : index
    %251 = vector.load %arg11[%250, %c0_64] : memref<64x128xf32, #tpu.memory_space<vmem>>, vector<8x32xf32>
    tpu.vector_store %arg11[%250, %c0_64], %249 {strides = array<i32>} : memref<64x128xf32, #tpu.memory_space<vmem>>, vector<8x32xf32>,
    %c2_i32_65 = arith.constant 2 : i32
    %c8_i32_66 = arith.constant 8 : i32
    %252 = arith.muli %c2_i32_65, %c8_i32_66 : i32
    %253 = tpu.assume_multiple %252, 8 : i32
    %254 = arith.index_cast %253 : i32 to index
    %c0_67 = arith.constant 0 : index
    %255 = vector.load %arg12[%254, %c0_67] : memref<64x128xf32, #tpu.memory_space<vmem>>, vector<8x128xf32>
    %256 = arith.truncf %249 : vector<8x32xf32> to vector<8x32xbf16>
    %cst_68 = arith.constant dense<0.000000e+00> : vector<8x128xf32>
    %257 = tpu.matmul %256, %202, %cst_68 {dimension_numbers = #tpu.dot_dimension_numbers<[1], [0], [0], [1], [0, 0, 1, 1], [], []>} : vector<8x32xbf16>, vector<32x128xbf16>, vector<8x128xf32> -> vector<8x128xf32>
    %258 = arith.addf %255, %257 : vector<8x128xf32>
    %259 = arith.negf %258 : vector<8x128xf32>
    %260 = math.exp %259 : vector<8x128xf32>
    %cst_69 = arith.constant 1.000000e+00 : f32
    %261 = vector.broadcast %cst_69 : f32 to vector<8x128xf32>
    %262 = arith.addf %261, %260 : vector<8x128xf32>
    %263 = arith.divf %261, %262 : vector<8x128xf32>
    %264 = math.tanh %258 : vector<8x128xf32>
    %265 = vector.extract_strided_slice %263 {offsets = [0, 0], sizes = [8, 32], strides = [1, 1]} : vector<8x128xf32> to vector<8x32xf32>
    %266 = vector.extract_strided_slice %263 {offsets = [0, 32], sizes = [8, 32], strides = [1, 1]} : vector<8x128xf32> to vector<8x32xf32>
    %267 = vector.extract_strided_slice %264 {offsets = [0, 64], sizes = [8, 32], strides = [1, 1]} : vector<8x128xf32> to vector<8x32xf32>
    %268 = vector.extract_strided_slice %263 {offsets = [0, 96], sizes = [8, 32], strides = [1, 1]} : vector<8x128xf32> to vector<8x32xf32>
    %269 = arith.mulf %266, %247 : vector<8x32xf32>
    %270 = arith.mulf %265, %267 : vector<8x32xf32>
    %271 = arith.addf %269, %270 : vector<8x32xf32>
    %272 = math.tanh %271 : vector<8x32xf32>
    %273 = arith.mulf %268, %272 : vector<8x32xf32>
    %274 = arith.index_cast %253 : i32 to index
    %c0_70 = arith.constant 0 : index
    %275 = vector.load %arg11[%274, %c0_70] : memref<64x128xf32, #tpu.memory_space<vmem>>, vector<8x32xf32>
    tpu.vector_store %arg11[%274, %c0_70], %273 {strides = array<i32>} : memref<64x128xf32, #tpu.memory_space<vmem>>, vector<8x32xf32>,
    %c3_i32_71 = arith.constant 3 : i32
    %c8_i32_72 = arith.constant 8 : i32
    %276 = arith.muli %c3_i32_71, %c8_i32_72 : i32
    %277 = tpu.assume_multiple %276, 8 : i32
    %278 = arith.index_cast %277 : i32 to index
    %c0_73 = arith.constant 0 : index
    %279 = vector.load %arg12[%278, %c0_73] : memref<64x128xf32, #tpu.memory_space<vmem>>, vector<8x128xf32>
    %280 = arith.truncf %273 : vector<8x32xf32> to vector<8x32xbf16>
    %cst_74 = arith.constant dense<0.000000e+00> : vector<8x128xf32>
    %281 = tpu.matmul %280, %202, %cst_74 {dimension_numbers = #tpu.dot_dimension_numbers<[1], [0], [0], [1], [0, 0, 1, 1], [], []>} : vector<8x32xbf16>, vector<32x128xbf16>, vector<8x128xf32> -> vector<8x128xf32>
    %282 = arith.addf %279, %281 : vector<8x128xf32>
    %283 = arith.negf %282 : vector<8x128xf32>
    %284 = math.exp %283 : vector<8x128xf32>
    %cst_75 = arith.constant 1.000000e+00 : f32
    %285 = vector.broadcast %cst_75 : f32 to vector<8x128xf32>
    %286 = arith.addf %285, %284 : vector<8x128xf32>
    %287 = arith.divf %285, %286 : vector<8x128xf32>
    %288 = math.tanh %282 : vector<8x128xf32>
    %289 = vector.extract_strided_slice %287 {offsets = [0, 0], sizes = [8, 32], strides = [1, 1]} : vector<8x128xf32> to vector<8x32xf32>
    %290 = vector.extract_strided_slice %287 {offsets = [0, 32], sizes = [8, 32], strides = [1, 1]} : vector<8x128xf32> to vector<8x32xf32>
    %291 = vector.extract_strided_slice %288 {offsets = [0, 64], sizes = [8, 32], strides = [1, 1]} : vector<8x128xf32> to vector<8x32xf32>
    %292 = vector.extract_strided_slice %287 {offsets = [0, 96], sizes = [8, 32], strides = [1, 1]} : vector<8x128xf32> to vector<8x32xf32>
    %293 = arith.mulf %290, %271 : vector<8x32xf32>
    %294 = arith.mulf %289, %291 : vector<8x32xf32>
    %295 = arith.addf %293, %294 : vector<8x32xf32>
    %296 = math.tanh %295 : vector<8x32xf32>
    %297 = arith.mulf %292, %296 : vector<8x32xf32>
    %298 = arith.index_cast %277 : i32 to index
    %c0_76 = arith.constant 0 : index
    %299 = vector.load %arg11[%298, %c0_76] : memref<64x128xf32, #tpu.memory_space<vmem>>, vector<8x32xf32>
    tpu.vector_store %arg11[%298, %c0_76], %297 {strides = array<i32>} : memref<64x128xf32, #tpu.memory_space<vmem>>, vector<8x32xf32>,
    %c4_i32_77 = arith.constant 4 : i32
    %c8_i32_78 = arith.constant 8 : i32
    %300 = arith.muli %c4_i32_77, %c8_i32_78 : i32
    %301 = tpu.assume_multiple %300, 8 : i32
    %302 = arith.index_cast %301 : i32 to index
    %c0_79 = arith.constant 0 : index
    %303 = vector.load %arg12[%302, %c0_79] : memref<64x128xf32, #tpu.memory_space<vmem>>, vector<8x128xf32>
    %304 = arith.truncf %297 : vector<8x32xf32> to vector<8x32xbf16>
    %cst_80 = arith.constant dense<0.000000e+00> : vector<8x128xf32>
    %305 = tpu.matmul %304, %202, %cst_80 {dimension_numbers = #tpu.dot_dimension_numbers<[1], [0], [0], [1], [0, 0, 1, 1], [], []>} : vector<8x32xbf16>, vector<32x128xbf16>, vector<8x128xf32> -> vector<8x128xf32>
    %306 = arith.addf %303, %305 : vector<8x128xf32>
    %307 = arith.negf %306 : vector<8x128xf32>
    %308 = math.exp %307 : vector<8x128xf32>
    %cst_81 = arith.constant 1.000000e+00 : f32
    %309 = vector.broadcast %cst_81 : f32 to vector<8x128xf32>
    %310 = arith.addf %309, %308 : vector<8x128xf32>
    %311 = arith.divf %309, %310 : vector<8x128xf32>
    %312 = math.tanh %306 : vector<8x128xf32>
    %313 = vector.extract_strided_slice %311 {offsets = [0, 0], sizes = [8, 32], strides = [1, 1]} : vector<8x128xf32> to vector<8x32xf32>
    %314 = vector.extract_strided_slice %311 {offsets = [0, 32], sizes = [8, 32], strides = [1, 1]} : vector<8x128xf32> to vector<8x32xf32>
    %315 = vector.extract_strided_slice %312 {offsets = [0, 64], sizes = [8, 32], strides = [1, 1]} : vector<8x128xf32> to vector<8x32xf32>
    %316 = vector.extract_strided_slice %311 {offsets = [0, 96], sizes = [8, 32], strides = [1, 1]} : vector<8x128xf32> to vector<8x32xf32>
    %317 = arith.mulf %314, %295 : vector<8x32xf32>
    %318 = arith.mulf %313, %315 : vector<8x32xf32>
    %319 = arith.addf %317, %318 : vector<8x32xf32>
    %320 = math.tanh %319 : vector<8x32xf32>
    %321 = arith.mulf %316, %320 : vector<8x32xf32>
    %322 = arith.index_cast %301 : i32 to index
    %c0_82 = arith.constant 0 : index
    %323 = vector.load %arg11[%322, %c0_82] : memref<64x128xf32, #tpu.memory_space<vmem>>, vector<8x32xf32>
    tpu.vector_store %arg11[%322, %c0_82], %321 {strides = array<i32>} : memref<64x128xf32, #tpu.memory_space<vmem>>, vector<8x32xf32>,
    %c5_i32_83 = arith.constant 5 : i32
    %c8_i32_84 = arith.constant 8 : i32
    %324 = arith.muli %c5_i32_83, %c8_i32_84 : i32
    %325 = tpu.assume_multiple %324, 8 : i32
    %326 = arith.index_cast %325 : i32 to index
    %c0_85 = arith.constant 0 : index
    %327 = vector.load %arg12[%326, %c0_85] : memref<64x128xf32, #tpu.memory_space<vmem>>, vector<8x128xf32>
    %328 = arith.truncf %321 : vector<8x32xf32> to vector<8x32xbf16>
    %cst_86 = arith.constant dense<0.000000e+00> : vector<8x128xf32>
    %329 = tpu.matmul %328, %202, %cst_86 {dimension_numbers = #tpu.dot_dimension_numbers<[1], [0], [0], [1], [0, 0, 1, 1], [], []>} : vector<8x32xbf16>, vector<32x128xbf16>, vector<8x128xf32> -> vector<8x128xf32>
    %330 = arith.addf %327, %329 : vector<8x128xf32>
    %331 = arith.negf %330 : vector<8x128xf32>
    %332 = math.exp %331 : vector<8x128xf32>
    %cst_87 = arith.constant 1.000000e+00 : f32
    %333 = vector.broadcast %cst_87 : f32 to vector<8x128xf32>
    %334 = arith.addf %333, %332 : vector<8x128xf32>
    %335 = arith.divf %333, %334 : vector<8x128xf32>
    %336 = math.tanh %330 : vector<8x128xf32>
    %337 = vector.extract_strided_slice %335 {offsets = [0, 0], sizes = [8, 32], strides = [1, 1]} : vector<8x128xf32> to vector<8x32xf32>
    %338 = vector.extract_strided_slice %335 {offsets = [0, 32], sizes = [8, 32], strides = [1, 1]} : vector<8x128xf32> to vector<8x32xf32>
    %339 = vector.extract_strided_slice %336 {offsets = [0, 64], sizes = [8, 32], strides = [1, 1]} : vector<8x128xf32> to vector<8x32xf32>
    %340 = vector.extract_strided_slice %335 {offsets = [0, 96], sizes = [8, 32], strides = [1, 1]} : vector<8x128xf32> to vector<8x32xf32>
    %341 = arith.mulf %338, %319 : vector<8x32xf32>
    %342 = arith.mulf %337, %339 : vector<8x32xf32>
    %343 = arith.addf %341, %342 : vector<8x32xf32>
    %344 = math.tanh %343 : vector<8x32xf32>
    %345 = arith.mulf %340, %344 : vector<8x32xf32>
    %346 = arith.index_cast %325 : i32 to index
    %c0_88 = arith.constant 0 : index
    %347 = vector.load %arg11[%346, %c0_88] : memref<64x128xf32, #tpu.memory_space<vmem>>, vector<8x32xf32>
    tpu.vector_store %arg11[%346, %c0_88], %345 {strides = array<i32>} : memref<64x128xf32, #tpu.memory_space<vmem>>, vector<8x32xf32>,
    %c6_i32_89 = arith.constant 6 : i32
    %c8_i32_90 = arith.constant 8 : i32
    %348 = arith.muli %c6_i32_89, %c8_i32_90 : i32
    %349 = tpu.assume_multiple %348, 8 : i32
    %350 = arith.index_cast %349 : i32 to index
    %c0_91 = arith.constant 0 : index
    %351 = vector.load %arg12[%350, %c0_91] : memref<64x128xf32, #tpu.memory_space<vmem>>, vector<8x128xf32>
    %352 = arith.truncf %345 : vector<8x32xf32> to vector<8x32xbf16>
    %cst_92 = arith.constant dense<0.000000e+00> : vector<8x128xf32>
    %353 = tpu.matmul %352, %202, %cst_92 {dimension_numbers = #tpu.dot_dimension_numbers<[1], [0], [0], [1], [0, 0, 1, 1], [], []>} : vector<8x32xbf16>, vector<32x128xbf16>, vector<8x128xf32> -> vector<8x128xf32>
    %354 = arith.addf %351, %353 : vector<8x128xf32>
    %355 = arith.negf %354 : vector<8x128xf32>
    %356 = math.exp %355 : vector<8x128xf32>
    %cst_93 = arith.constant 1.000000e+00 : f32
    %357 = vector.broadcast %cst_93 : f32 to vector<8x128xf32>
    %358 = arith.addf %357, %356 : vector<8x128xf32>
    %359 = arith.divf %357, %358 : vector<8x128xf32>
    %360 = math.tanh %354 : vector<8x128xf32>
    %361 = vector.extract_strided_slice %359 {offsets = [0, 0], sizes = [8, 32], strides = [1, 1]} : vector<8x128xf32> to vector<8x32xf32>
    %362 = vector.extract_strided_slice %359 {offsets = [0, 32], sizes = [8, 32], strides = [1, 1]} : vector<8x128xf32> to vector<8x32xf32>
    %363 = vector.extract_strided_slice %360 {offsets = [0, 64], sizes = [8, 32], strides = [1, 1]} : vector<8x128xf32> to vector<8x32xf32>
    %364 = vector.extract_strided_slice %359 {offsets = [0, 96], sizes = [8, 32], strides = [1, 1]} : vector<8x128xf32> to vector<8x32xf32>
    %365 = arith.mulf %362, %343 : vector<8x32xf32>
    %366 = arith.mulf %361, %363 : vector<8x32xf32>
    %367 = arith.addf %365, %366 : vector<8x32xf32>
    %368 = math.tanh %367 : vector<8x32xf32>
    %369 = arith.mulf %364, %368 : vector<8x32xf32>
    %370 = arith.index_cast %349 : i32 to index
    %c0_94 = arith.constant 0 : index
    %371 = vector.load %arg11[%370, %c0_94] : memref<64x128xf32, #tpu.memory_space<vmem>>, vector<8x32xf32>
    tpu.vector_store %arg11[%370, %c0_94], %369 {strides = array<i32>} : memref<64x128xf32, #tpu.memory_space<vmem>>, vector<8x32xf32>,
    %c7_i32_95 = arith.constant 7 : i32
    %c8_i32_96 = arith.constant 8 : i32
    %372 = arith.muli %c7_i32_95, %c8_i32_96 : i32
    %373 = tpu.assume_multiple %372, 8 : i32
    %374 = arith.index_cast %373 : i32 to index
    %c0_97 = arith.constant 0 : index
    %375 = vector.load %arg12[%374, %c0_97] : memref<64x128xf32, #tpu.memory_space<vmem>>, vector<8x128xf32>
    %376 = arith.truncf %369 : vector<8x32xf32> to vector<8x32xbf16>
    %cst_98 = arith.constant dense<0.000000e+00> : vector<8x128xf32>
    %377 = tpu.matmul %376, %202, %cst_98 {dimension_numbers = #tpu.dot_dimension_numbers<[1], [0], [0], [1], [0, 0, 1, 1], [], []>} : vector<8x32xbf16>, vector<32x128xbf16>, vector<8x128xf32> -> vector<8x128xf32>
    %378 = arith.addf %375, %377 : vector<8x128xf32>
    %379 = arith.negf %378 : vector<8x128xf32>
    %380 = math.exp %379 : vector<8x128xf32>
    %cst_99 = arith.constant 1.000000e+00 : f32
    %381 = vector.broadcast %cst_99 : f32 to vector<8x128xf32>
    %382 = arith.addf %381, %380 : vector<8x128xf32>
    %383 = arith.divf %381, %382 : vector<8x128xf32>
    %384 = math.tanh %378 : vector<8x128xf32>
    %385 = vector.extract_strided_slice %383 {offsets = [0, 0], sizes = [8, 32], strides = [1, 1]} : vector<8x128xf32> to vector<8x32xf32>
    %386 = vector.extract_strided_slice %383 {offsets = [0, 32], sizes = [8, 32], strides = [1, 1]} : vector<8x128xf32> to vector<8x32xf32>
    %387 = vector.extract_strided_slice %384 {offsets = [0, 64], sizes = [8, 32], strides = [1, 1]} : vector<8x128xf32> to vector<8x32xf32>
    %388 = vector.extract_strided_slice %383 {offsets = [0, 96], sizes = [8, 32], strides = [1, 1]} : vector<8x128xf32> to vector<8x32xf32>
    %389 = arith.mulf %386, %367 : vector<8x32xf32>
    %390 = arith.mulf %385, %387 : vector<8x32xf32>
    %391 = arith.addf %389, %390 : vector<8x32xf32>
    %392 = math.tanh %391 : vector<8x32xf32>
    %393 = arith.mulf %388, %392 : vector<8x32xf32>
    %394 = arith.index_cast %373 : i32 to index
    %c0_100 = arith.constant 0 : index
    %395 = vector.load %arg11[%394, %c0_100] : memref<64x128xf32, #tpu.memory_space<vmem>>, vector<8x32xf32>
    tpu.vector_store %arg11[%394, %c0_100], %393 {strides = array<i32>} : memref<64x128xf32, #tpu.memory_space<vmem>>, vector<8x32xf32>,
    %c8_i32_101 = arith.constant 8 : i32
    %c0_102 = arith.constant 0 : index
    %c0_103 = arith.constant 0 : index
    %396 = vector.load %arg11[%c0_102, %c0_103] : memref<64x128xf32, #tpu.memory_space<vmem>>, vector<64x32xf32>
    %397 = arith.truncf %396 : vector<64x32xf32> to vector<64x32xbf16>
    %c0_104 = arith.constant 0 : index
    %c0_105 = arith.constant 0 : index
    %398 = vector.load %arg2[%c0_104, %c0_105] : memref<32x64xbf16, #tpu.memory_space<vmem>>, vector<32x64xbf16>
    %cst_106 = arith.constant dense<0.000000e+00> : vector<64x64xf32>
    %399 = tpu.matmul %397, %398, %cst_106 {dimension_numbers = #tpu.dot_dimension_numbers<[1], [0], [0], [1], [0, 0, 1, 1], [], []>} : vector<64x32xbf16>, vector<32x64xbf16>, vector<64x64xf32> -> vector<64x64xf32>
    %c0_107 = arith.constant 0 : index
    %c0_108 = arith.constant 0 : index
    %400 = vector.load %arg5[%c0_107, %c0_108] : memref<1x64xf32, #tpu.memory_space<vmem>>, vector<1x64xf32>
    %401 = vector.broadcast %400 : vector<1x64xf32> to vector<64x64xf32>
    %402 = arith.addf %399, %401 : vector<64x64xf32>
    %c0_109 = arith.constant 0 : index
    %c0_110 = arith.constant 0 : index
    %403 = vector.load %arg12[%c0_109, %c0_110] : memref<64x128xf32, #tpu.memory_space<vmem>>, vector<64x64xf32>
    tpu.vector_store %arg12[%c0_109, %c0_110], %402 {strides = array<i32>} : memref<64x128xf32, #tpu.memory_space<vmem>>, vector<64x64xf32>,
    %c0_111 = arith.constant 0 : index
    %c0_112 = arith.constant 0 : index
    %404 = vector.load %arg9[%c0_111, %c0_112] : memref<16x64xbf16, #tpu.memory_space<vmem>>, vector<16x64xbf16>
    %cst_113 = arith.constant 0.000000e+00 : f32
    %405 = vector.broadcast %cst_113 : f32 to vector<8x16xf32>
    %c0_i32_114 = arith.constant 0 : i32
    %c8_i32_115 = arith.constant 8 : i32
    %406 = arith.muli %c0_i32_114, %c8_i32_115 : i32
    %407 = tpu.assume_multiple %406, 8 : i32
    %408 = arith.index_cast %407 : i32 to index
    %c0_116 = arith.constant 0 : index
    %409 = vector.load %arg12[%408, %c0_116] : memref<64x128xf32, #tpu.memory_space<vmem>>, vector<8x64xf32>
    %410 = arith.truncf %405 : vector<8x16xf32> to vector<8x16xbf16>
    %cst_117 = arith.constant dense<0.000000e+00> : vector<8x64xf32>
    %411 = tpu.matmul %410, %404, %cst_117 {dimension_numbers = #tpu.dot_dimension_numbers<[1], [0], [0], [1], [0, 0, 1, 1], [], []>} : vector<8x16xbf16>, vector<16x64xbf16>, vector<8x64xf32> -> vector<8x64xf32>
    %412 = arith.addf %409, %411 : vector<8x64xf32>
    %413 = arith.negf %412 : vector<8x64xf32>
    %414 = math.exp %413 : vector<8x64xf32>
    %cst_118 = arith.constant 1.000000e+00 : f32
    %415 = vector.broadcast %cst_118 : f32 to vector<8x64xf32>
    %416 = arith.addf %415, %414 : vector<8x64xf32>
    %417 = arith.divf %415, %416 : vector<8x64xf32>
    %418 = math.tanh %412 : vector<8x64xf32>
    %419 = vector.extract_strided_slice %417 {offsets = [0, 0], sizes = [8, 16], strides = [1, 1]} : vector<8x64xf32> to vector<8x16xf32>
    %420 = vector.extract_strided_slice %417 {offsets = [0, 16], sizes = [8, 16], strides = [1, 1]} : vector<8x64xf32> to vector<8x16xf32>
    %421 = vector.extract_strided_slice %418 {offsets = [0, 32], sizes = [8, 16], strides = [1, 1]} : vector<8x64xf32> to vector<8x16xf32>
    %422 = vector.extract_strided_slice %417 {offsets = [0, 48], sizes = [8, 16], strides = [1, 1]} : vector<8x64xf32> to vector<8x16xf32>
    %423 = arith.mulf %420, %405 : vector<8x16xf32>
    %424 = arith.mulf %419, %421 : vector<8x16xf32>
    %425 = arith.addf %423, %424 : vector<8x16xf32>
    %426 = math.tanh %425 : vector<8x16xf32>
    %427 = arith.mulf %422, %426 : vector<8x16xf32>
    %428 = arith.index_cast %407 : i32 to index
    %c0_119 = arith.constant 0 : index
    %429 = vector.load %arg11[%428, %c0_119] : memref<64x128xf32, #tpu.memory_space<vmem>>, vector<8x16xf32>
    tpu.vector_store %arg11[%428, %c0_119], %427 {strides = array<i32>} : memref<64x128xf32, #tpu.memory_space<vmem>>, vector<8x16xf32>,
    %c1_i32_120 = arith.constant 1 : i32
    %c8_i32_121 = arith.constant 8 : i32
    %430 = arith.muli %c1_i32_120, %c8_i32_121 : i32
    %431 = tpu.assume_multiple %430, 8 : i32
    %432 = arith.index_cast %431 : i32 to index
    %c0_122 = arith.constant 0 : index
    %433 = vector.load %arg12[%432, %c0_122] : memref<64x128xf32, #tpu.memory_space<vmem>>, vector<8x64xf32>
    %434 = arith.truncf %427 : vector<8x16xf32> to vector<8x16xbf16>
    %cst_123 = arith.constant dense<0.000000e+00> : vector<8x64xf32>
    %435 = tpu.matmul %434, %404, %cst_123 {dimension_numbers = #tpu.dot_dimension_numbers<[1], [0], [0], [1], [0, 0, 1, 1], [], []>} : vector<8x16xbf16>, vector<16x64xbf16>, vector<8x64xf32> -> vector<8x64xf32>
    %436 = arith.addf %433, %435 : vector<8x64xf32>
    %437 = arith.negf %436 : vector<8x64xf32>
    %438 = math.exp %437 : vector<8x64xf32>
    %cst_124 = arith.constant 1.000000e+00 : f32
    %439 = vector.broadcast %cst_124 : f32 to vector<8x64xf32>
    %440 = arith.addf %439, %438 : vector<8x64xf32>
    %441 = arith.divf %439, %440 : vector<8x64xf32>
    %442 = math.tanh %436 : vector<8x64xf32>
    %443 = vector.extract_strided_slice %441 {offsets = [0, 0], sizes = [8, 16], strides = [1, 1]} : vector<8x64xf32> to vector<8x16xf32>
    %444 = vector.extract_strided_slice %441 {offsets = [0, 16], sizes = [8, 16], strides = [1, 1]} : vector<8x64xf32> to vector<8x16xf32>
    %445 = vector.extract_strided_slice %442 {offsets = [0, 32], sizes = [8, 16], strides = [1, 1]} : vector<8x64xf32> to vector<8x16xf32>
    %446 = vector.extract_strided_slice %441 {offsets = [0, 48], sizes = [8, 16], strides = [1, 1]} : vector<8x64xf32> to vector<8x16xf32>
    %447 = arith.mulf %444, %425 : vector<8x16xf32>
    %448 = arith.mulf %443, %445 : vector<8x16xf32>
    %449 = arith.addf %447, %448 : vector<8x16xf32>
    %450 = math.tanh %449 : vector<8x16xf32>
    %451 = arith.mulf %446, %450 : vector<8x16xf32>
    %452 = arith.index_cast %431 : i32 to index
    %c0_125 = arith.constant 0 : index
    %453 = vector.load %arg11[%452, %c0_125] : memref<64x128xf32, #tpu.memory_space<vmem>>, vector<8x16xf32>
    tpu.vector_store %arg11[%452, %c0_125], %451 {strides = array<i32>} : memref<64x128xf32, #tpu.memory_space<vmem>>, vector<8x16xf32>,
    %c2_i32_126 = arith.constant 2 : i32
    %c8_i32_127 = arith.constant 8 : i32
    %454 = arith.muli %c2_i32_126, %c8_i32_127 : i32
    %455 = tpu.assume_multiple %454, 8 : i32
    %456 = arith.index_cast %455 : i32 to index
    %c0_128 = arith.constant 0 : index
    %457 = vector.load %arg12[%456, %c0_128] : memref<64x128xf32, #tpu.memory_space<vmem>>, vector<8x64xf32>
    %458 = arith.truncf %451 : vector<8x16xf32> to vector<8x16xbf16>
    %cst_129 = arith.constant dense<0.000000e+00> : vector<8x64xf32>
    %459 = tpu.matmul %458, %404, %cst_129 {dimension_numbers = #tpu.dot_dimension_numbers<[1], [0], [0], [1], [0, 0, 1, 1], [], []>} : vector<8x16xbf16>, vector<16x64xbf16>, vector<8x64xf32> -> vector<8x64xf32>
    %460 = arith.addf %457, %459 : vector<8x64xf32>
    %461 = arith.negf %460 : vector<8x64xf32>
    %462 = math.exp %461 : vector<8x64xf32>
    %cst_130 = arith.constant 1.000000e+00 : f32
    %463 = vector.broadcast %cst_130 : f32 to vector<8x64xf32>
    %464 = arith.addf %463, %462 : vector<8x64xf32>
    %465 = arith.divf %463, %464 : vector<8x64xf32>
    %466 = math.tanh %460 : vector<8x64xf32>
    %467 = vector.extract_strided_slice %465 {offsets = [0, 0], sizes = [8, 16], strides = [1, 1]} : vector<8x64xf32> to vector<8x16xf32>
    %468 = vector.extract_strided_slice %465 {offsets = [0, 16], sizes = [8, 16], strides = [1, 1]} : vector<8x64xf32> to vector<8x16xf32>
    %469 = vector.extract_strided_slice %466 {offsets = [0, 32], sizes = [8, 16], strides = [1, 1]} : vector<8x64xf32> to vector<8x16xf32>
    %470 = vector.extract_strided_slice %465 {offsets = [0, 48], sizes = [8, 16], strides = [1, 1]} : vector<8x64xf32> to vector<8x16xf32>
    %471 = arith.mulf %468, %449 : vector<8x16xf32>
    %472 = arith.mulf %467, %469 : vector<8x16xf32>
    %473 = arith.addf %471, %472 : vector<8x16xf32>
    %474 = math.tanh %473 : vector<8x16xf32>
    %475 = arith.mulf %470, %474 : vector<8x16xf32>
    %476 = arith.index_cast %455 : i32 to index
    %c0_131 = arith.constant 0 : index
    %477 = vector.load %arg11[%476, %c0_131] : memref<64x128xf32, #tpu.memory_space<vmem>>, vector<8x16xf32>
    tpu.vector_store %arg11[%476, %c0_131], %475 {strides = array<i32>} : memref<64x128xf32, #tpu.memory_space<vmem>>, vector<8x16xf32>,
    %c3_i32_132 = arith.constant 3 : i32
    %c8_i32_133 = arith.constant 8 : i32
    %478 = arith.muli %c3_i32_132, %c8_i32_133 : i32
    %479 = tpu.assume_multiple %478, 8 : i32
    %480 = arith.index_cast %479 : i32 to index
    %c0_134 = arith.constant 0 : index
    %481 = vector.load %arg12[%480, %c0_134] : memref<64x128xf32, #tpu.memory_space<vmem>>, vector<8x64xf32>
    %482 = arith.truncf %475 : vector<8x16xf32> to vector<8x16xbf16>
    %cst_135 = arith.constant dense<0.000000e+00> : vector<8x64xf32>
    %483 = tpu.matmul %482, %404, %cst_135 {dimension_numbers = #tpu.dot_dimension_numbers<[1], [0], [0], [1], [0, 0, 1, 1], [], []>} : vector<8x16xbf16>, vector<16x64xbf16>, vector<8x64xf32> -> vector<8x64xf32>
    %484 = arith.addf %481, %483 : vector<8x64xf32>
    %485 = arith.negf %484 : vector<8x64xf32>
    %486 = math.exp %485 : vector<8x64xf32>
    %cst_136 = arith.constant 1.000000e+00 : f32
    %487 = vector.broadcast %cst_136 : f32 to vector<8x64xf32>
    %488 = arith.addf %487, %486 : vector<8x64xf32>
    %489 = arith.divf %487, %488 : vector<8x64xf32>
    %490 = math.tanh %484 : vector<8x64xf32>
    %491 = vector.extract_strided_slice %489 {offsets = [0, 0], sizes = [8, 16], strides = [1, 1]} : vector<8x64xf32> to vector<8x16xf32>
    %492 = vector.extract_strided_slice %489 {offsets = [0, 16], sizes = [8, 16], strides = [1, 1]} : vector<8x64xf32> to vector<8x16xf32>
    %493 = vector.extract_strided_slice %490 {offsets = [0, 32], sizes = [8, 16], strides = [1, 1]} : vector<8x64xf32> to vector<8x16xf32>
    %494 = vector.extract_strided_slice %489 {offsets = [0, 48], sizes = [8, 16], strides = [1, 1]} : vector<8x64xf32> to vector<8x16xf32>
    %495 = arith.mulf %492, %473 : vector<8x16xf32>
    %496 = arith.mulf %491, %493 : vector<8x16xf32>
    %497 = arith.addf %495, %496 : vector<8x16xf32>
    %498 = math.tanh %497 : vector<8x16xf32>
    %499 = arith.mulf %494, %498 : vector<8x16xf32>
    %500 = arith.index_cast %479 : i32 to index
    %c0_137 = arith.constant 0 : index
    %501 = vector.load %arg11[%500, %c0_137] : memref<64x128xf32, #tpu.memory_space<vmem>>, vector<8x16xf32>
    tpu.vector_store %arg11[%500, %c0_137], %499 {strides = array<i32>} : memref<64x128xf32, #tpu.memory_space<vmem>>, vector<8x16xf32>,
    %c4_i32_138 = arith.constant 4 : i32
    %c8_i32_139 = arith.constant 8 : i32
    %502 = arith.muli %c4_i32_138, %c8_i32_139 : i32
    %503 = tpu.assume_multiple %502, 8 : i32
    %504 = arith.index_cast %503 : i32 to index
    %c0_140 = arith.constant 0 : index
    %505 = vector.load %arg12[%504, %c0_140] : memref<64x128xf32, #tpu.memory_space<vmem>>, vector<8x64xf32>
    %506 = arith.truncf %499 : vector<8x16xf32> to vector<8x16xbf16>
    %cst_141 = arith.constant dense<0.000000e+00> : vector<8x64xf32>
    %507 = tpu.matmul %506, %404, %cst_141 {dimension_numbers = #tpu.dot_dimension_numbers<[1], [0], [0], [1], [0, 0, 1, 1], [], []>} : vector<8x16xbf16>, vector<16x64xbf16>, vector<8x64xf32> -> vector<8x64xf32>
    %508 = arith.addf %505, %507 : vector<8x64xf32>
    %509 = arith.negf %508 : vector<8x64xf32>
    %510 = math.exp %509 : vector<8x64xf32>
    %cst_142 = arith.constant 1.000000e+00 : f32
    %511 = vector.broadcast %cst_142 : f32 to vector<8x64xf32>
    %512 = arith.addf %511, %510 : vector<8x64xf32>
    %513 = arith.divf %511, %512 : vector<8x64xf32>
    %514 = math.tanh %508 : vector<8x64xf32>
    %515 = vector.extract_strided_slice %513 {offsets = [0, 0], sizes = [8, 16], strides = [1, 1]} : vector<8x64xf32> to vector<8x16xf32>
    %516 = vector.extract_strided_slice %513 {offsets = [0, 16], sizes = [8, 16], strides = [1, 1]} : vector<8x64xf32> to vector<8x16xf32>
    %517 = vector.extract_strided_slice %514 {offsets = [0, 32], sizes = [8, 16], strides = [1, 1]} : vector<8x64xf32> to vector<8x16xf32>
    %518 = vector.extract_strided_slice %513 {offsets = [0, 48], sizes = [8, 16], strides = [1, 1]} : vector<8x64xf32> to vector<8x16xf32>
    %519 = arith.mulf %516, %497 : vector<8x16xf32>
    %520 = arith.mulf %515, %517 : vector<8x16xf32>
    %521 = arith.addf %519, %520 : vector<8x16xf32>
    %522 = math.tanh %521 : vector<8x16xf32>
    %523 = arith.mulf %518, %522 : vector<8x16xf32>
    %524 = arith.index_cast %503 : i32 to index
    %c0_143 = arith.constant 0 : index
    %525 = vector.load %arg11[%524, %c0_143] : memref<64x128xf32, #tpu.memory_space<vmem>>, vector<8x16xf32>
    tpu.vector_store %arg11[%524, %c0_143], %523 {strides = array<i32>} : memref<64x128xf32, #tpu.memory_space<vmem>>, vector<8x16xf32>,
    %c5_i32_144 = arith.constant 5 : i32
    %c8_i32_145 = arith.constant 8 : i32
    %526 = arith.muli %c5_i32_144, %c8_i32_145 : i32
    %527 = tpu.assume_multiple %526, 8 : i32
    %528 = arith.index_cast %527 : i32 to index
    %c0_146 = arith.constant 0 : index
    %529 = vector.load %arg12[%528, %c0_146] : memref<64x128xf32, #tpu.memory_space<vmem>>, vector<8x64xf32>
    %530 = arith.truncf %523 : vector<8x16xf32> to vector<8x16xbf16>
    %cst_147 = arith.constant dense<0.000000e+00> : vector<8x64xf32>
    %531 = tpu.matmul %530, %404, %cst_147 {dimension_numbers = #tpu.dot_dimension_numbers<[1], [0], [0], [1], [0, 0, 1, 1], [], []>} : vector<8x16xbf16>, vector<16x64xbf16>, vector<8x64xf32> -> vector<8x64xf32>
    %532 = arith.addf %529, %531 : vector<8x64xf32>
    %533 = arith.negf %532 : vector<8x64xf32>
    %534 = math.exp %533 : vector<8x64xf32>
    %cst_148 = arith.constant 1.000000e+00 : f32
    %535 = vector.broadcast %cst_148 : f32 to vector<8x64xf32>
    %536 = arith.addf %535, %534 : vector<8x64xf32>
    %537 = arith.divf %535, %536 : vector<8x64xf32>
    %538 = math.tanh %532 : vector<8x64xf32>
    %539 = vector.extract_strided_slice %537 {offsets = [0, 0], sizes = [8, 16], strides = [1, 1]} : vector<8x64xf32> to vector<8x16xf32>
    %540 = vector.extract_strided_slice %537 {offsets = [0, 16], sizes = [8, 16], strides = [1, 1]} : vector<8x64xf32> to vector<8x16xf32>
    %541 = vector.extract_strided_slice %538 {offsets = [0, 32], sizes = [8, 16], strides = [1, 1]} : vector<8x64xf32> to vector<8x16xf32>
    %542 = vector.extract_strided_slice %537 {offsets = [0, 48], sizes = [8, 16], strides = [1, 1]} : vector<8x64xf32> to vector<8x16xf32>
    %543 = arith.mulf %540, %521 : vector<8x16xf32>
    %544 = arith.mulf %539, %541 : vector<8x16xf32>
    %545 = arith.addf %543, %544 : vector<8x16xf32>
    %546 = math.tanh %545 : vector<8x16xf32>
    %547 = arith.mulf %542, %546 : vector<8x16xf32>
    %548 = arith.index_cast %527 : i32 to index
    %c0_149 = arith.constant 0 : index
    %549 = vector.load %arg11[%548, %c0_149] : memref<64x128xf32, #tpu.memory_space<vmem>>, vector<8x16xf32>
    tpu.vector_store %arg11[%548, %c0_149], %547 {strides = array<i32>} : memref<64x128xf32, #tpu.memory_space<vmem>>, vector<8x16xf32>,
    %c6_i32_150 = arith.constant 6 : i32
    %c8_i32_151 = arith.constant 8 : i32
    %550 = arith.muli %c6_i32_150, %c8_i32_151 : i32
    %551 = tpu.assume_multiple %550, 8 : i32
    %552 = arith.index_cast %551 : i32 to index
    %c0_152 = arith.constant 0 : index
    %553 = vector.load %arg12[%552, %c0_152] : memref<64x128xf32, #tpu.memory_space<vmem>>, vector<8x64xf32>
    %554 = arith.truncf %547 : vector<8x16xf32> to vector<8x16xbf16>
    %cst_153 = arith.constant dense<0.000000e+00> : vector<8x64xf32>
    %555 = tpu.matmul %554, %404, %cst_153 {dimension_numbers = #tpu.dot_dimension_numbers<[1], [0], [0], [1], [0, 0, 1, 1], [], []>} : vector<8x16xbf16>, vector<16x64xbf16>, vector<8x64xf32> -> vector<8x64xf32>
    %556 = arith.addf %553, %555 : vector<8x64xf32>
    %557 = arith.negf %556 : vector<8x64xf32>
    %558 = math.exp %557 : vector<8x64xf32>
    %cst_154 = arith.constant 1.000000e+00 : f32
    %559 = vector.broadcast %cst_154 : f32 to vector<8x64xf32>
    %560 = arith.addf %559, %558 : vector<8x64xf32>
    %561 = arith.divf %559, %560 : vector<8x64xf32>
    %562 = math.tanh %556 : vector<8x64xf32>
    %563 = vector.extract_strided_slice %561 {offsets = [0, 0], sizes = [8, 16], strides = [1, 1]} : vector<8x64xf32> to vector<8x16xf32>
    %564 = vector.extract_strided_slice %561 {offsets = [0, 16], sizes = [8, 16], strides = [1, 1]} : vector<8x64xf32> to vector<8x16xf32>
    %565 = vector.extract_strided_slice %562 {offsets = [0, 32], sizes = [8, 16], strides = [1, 1]} : vector<8x64xf32> to vector<8x16xf32>
    %566 = vector.extract_strided_slice %561 {offsets = [0, 48], sizes = [8, 16], strides = [1, 1]} : vector<8x64xf32> to vector<8x16xf32>
    %567 = arith.mulf %564, %545 : vector<8x16xf32>
    %568 = arith.mulf %563, %565 : vector<8x16xf32>
    %569 = arith.addf %567, %568 : vector<8x16xf32>
    %570 = math.tanh %569 : vector<8x16xf32>
    %571 = arith.mulf %566, %570 : vector<8x16xf32>
    %572 = arith.index_cast %551 : i32 to index
    %c0_155 = arith.constant 0 : index
    %573 = vector.load %arg11[%572, %c0_155] : memref<64x128xf32, #tpu.memory_space<vmem>>, vector<8x16xf32>
    tpu.vector_store %arg11[%572, %c0_155], %571 {strides = array<i32>} : memref<64x128xf32, #tpu.memory_space<vmem>>, vector<8x16xf32>,
    %c7_i32_156 = arith.constant 7 : i32
    %c8_i32_157 = arith.constant 8 : i32
    %574 = arith.muli %c7_i32_156, %c8_i32_157 : i32
    %575 = tpu.assume_multiple %574, 8 : i32
    %576 = arith.index_cast %575 : i32 to index
    %c0_158 = arith.constant 0 : index
    %577 = vector.load %arg12[%576, %c0_158] : memref<64x128xf32, #tpu.memory_space<vmem>>, vector<8x64xf32>
    %578 = arith.truncf %571 : vector<8x16xf32> to vector<8x16xbf16>
    %cst_159 = arith.constant dense<0.000000e+00> : vector<8x64xf32>
    %579 = tpu.matmul %578, %404, %cst_159 {dimension_numbers = #tpu.dot_dimension_numbers<[1], [0], [0], [1], [0, 0, 1, 1], [], []>} : vector<8x16xbf16>, vector<16x64xbf16>, vector<8x64xf32> -> vector<8x64xf32>
    %580 = arith.addf %577, %579 : vector<8x64xf32>
    %581 = arith.negf %580 : vector<8x64xf32>
    %582 = math.exp %581 : vector<8x64xf32>
    %cst_160 = arith.constant 1.000000e+00 : f32
    %583 = vector.broadcast %cst_160 : f32 to vector<8x64xf32>
    %584 = arith.addf %583, %582 : vector<8x64xf32>
    %585 = arith.divf %583, %584 : vector<8x64xf32>
    %586 = math.tanh %580 : vector<8x64xf32>
    %587 = vector.extract_strided_slice %585 {offsets = [0, 0], sizes = [8, 16], strides = [1, 1]} : vector<8x64xf32> to vector<8x16xf32>
    %588 = vector.extract_strided_slice %585 {offsets = [0, 16], sizes = [8, 16], strides = [1, 1]} : vector<8x64xf32> to vector<8x16xf32>
    %589 = vector.extract_strided_slice %586 {offsets = [0, 32], sizes = [8, 16], strides = [1, 1]} : vector<8x64xf32> to vector<8x16xf32>
    %590 = vector.extract_strided_slice %585 {offsets = [0, 48], sizes = [8, 16], strides = [1, 1]} : vector<8x64xf32> to vector<8x16xf32>
    %591 = arith.mulf %588, %569 : vector<8x16xf32>
    %592 = arith.mulf %587, %589 : vector<8x16xf32>
    %593 = arith.addf %591, %592 : vector<8x16xf32>
    %594 = math.tanh %593 : vector<8x16xf32>
    %595 = arith.mulf %590, %594 : vector<8x16xf32>
    %596 = arith.index_cast %575 : i32 to index
    %c0_161 = arith.constant 0 : index
    %597 = vector.load %arg11[%596, %c0_161] : memref<64x128xf32, #tpu.memory_space<vmem>>, vector<8x16xf32>
    tpu.vector_store %arg11[%596, %c0_161], %595 {strides = array<i32>} : memref<64x128xf32, #tpu.memory_space<vmem>>, vector<8x16xf32>,
    %c8_i32_162 = arith.constant 8 : i32
    %c0_163 = arith.constant 0 : index
    %c0_164 = arith.constant 0 : index
    %598 = vector.load %arg11[%c0_163, %c0_164] : memref<64x128xf32, #tpu.memory_space<vmem>>, vector<64x16xf32>
    %599 = arith.truncf %598 : vector<64x16xf32> to vector<64x16xbf16>
    %c0_165 = arith.constant 0 : index
    %c0_166 = arith.constant 0 : index
    %600 = vector.load %arg3[%c0_165, %c0_166] : memref<16x64xbf16, #tpu.memory_space<vmem>>, vector<16x64xbf16>
    %cst_167 = arith.constant dense<0.000000e+00> : vector<64x64xf32>
    %601 = tpu.matmul %599, %600, %cst_167 {dimension_numbers = #tpu.dot_dimension_numbers<[1], [0], [0], [1], [0, 0, 1, 1], [], []>} : vector<64x16xbf16>, vector<16x64xbf16>, vector<64x64xf32> -> vector<64x64xf32>
    %c0_168 = arith.constant 0 : index
    %c0_169 = arith.constant 0 : index
    %602 = vector.load %arg6[%c0_168, %c0_169] : memref<1x64xf32, #tpu.memory_space<vmem>>, vector<1x64xf32>
    %603 = vector.broadcast %602 : vector<1x64xf32> to vector<64x64xf32>
    %604 = arith.addf %601, %603 : vector<64x64xf32>
    %c0_170 = arith.constant 0 : index
    %c0_171 = arith.constant 0 : index
    %605 = vector.load %arg12[%c0_170, %c0_171] : memref<64x128xf32, #tpu.memory_space<vmem>>, vector<64x64xf32>
    tpu.vector_store %arg12[%c0_170, %c0_171], %604 {strides = array<i32>} : memref<64x128xf32, #tpu.memory_space<vmem>>, vector<64x64xf32>,
    %c0_172 = arith.constant 0 : index
    %c0_173 = arith.constant 0 : index
    %606 = vector.load %arg10[%c0_172, %c0_173] : memref<16x64xbf16, #tpu.memory_space<vmem>>, vector<16x64xbf16>
    %cst_174 = arith.constant 0.000000e+00 : f32
    %607 = vector.broadcast %cst_174 : f32 to vector<8x16xf32>
    %c0_i32_175 = arith.constant 0 : i32
    %c8_i32_176 = arith.constant 8 : i32
    %608 = arith.muli %c0_i32_175, %c8_i32_176 : i32
    %609 = tpu.assume_multiple %608, 8 : i32
    %610 = arith.index_cast %609 : i32 to index
    %c0_177 = arith.constant 0 : index
    %611 = vector.load %arg12[%610, %c0_177] : memref<64x128xf32, #tpu.memory_space<vmem>>, vector<8x64xf32>
    %612 = arith.truncf %607 : vector<8x16xf32> to vector<8x16xbf16>
    %cst_178 = arith.constant dense<0.000000e+00> : vector<8x64xf32>
    %613 = tpu.matmul %612, %606, %cst_178 {dimension_numbers = #tpu.dot_dimension_numbers<[1], [0], [0], [1], [0, 0, 1, 1], [], []>} : vector<8x16xbf16>, vector<16x64xbf16>, vector<8x64xf32> -> vector<8x64xf32>
    %614 = arith.addf %611, %613 : vector<8x64xf32>
    %615 = arith.negf %614 : vector<8x64xf32>
    %616 = math.exp %615 : vector<8x64xf32>
    %cst_179 = arith.constant 1.000000e+00 : f32
    %617 = vector.broadcast %cst_179 : f32 to vector<8x64xf32>
    %618 = arith.addf %617, %616 : vector<8x64xf32>
    %619 = arith.divf %617, %618 : vector<8x64xf32>
    %620 = math.tanh %614 : vector<8x64xf32>
    %621 = vector.extract_strided_slice %619 {offsets = [0, 0], sizes = [8, 16], strides = [1, 1]} : vector<8x64xf32> to vector<8x16xf32>
    %622 = vector.extract_strided_slice %619 {offsets = [0, 16], sizes = [8, 16], strides = [1, 1]} : vector<8x64xf32> to vector<8x16xf32>
    %623 = vector.extract_strided_slice %620 {offsets = [0, 32], sizes = [8, 16], strides = [1, 1]} : vector<8x64xf32> to vector<8x16xf32>
    %624 = vector.extract_strided_slice %619 {offsets = [0, 48], sizes = [8, 16], strides = [1, 1]} : vector<8x64xf32> to vector<8x16xf32>
    %625 = arith.mulf %622, %607 : vector<8x16xf32>
    %626 = arith.mulf %621, %623 : vector<8x16xf32>
    %627 = arith.addf %625, %626 : vector<8x16xf32>
    %628 = math.tanh %627 : vector<8x16xf32>
    %629 = arith.mulf %624, %628 : vector<8x16xf32>
    %630 = arith.index_cast %609 : i32 to index
    %c0_180 = arith.constant 0 : index
    %631 = vector.load %arg11[%630, %c0_180] : memref<64x128xf32, #tpu.memory_space<vmem>>, vector<8x16xf32>
    tpu.vector_store %arg11[%630, %c0_180], %629 {strides = array<i32>} : memref<64x128xf32, #tpu.memory_space<vmem>>, vector<8x16xf32>,
    %c1_i32_181 = arith.constant 1 : i32
    %c8_i32_182 = arith.constant 8 : i32
    %632 = arith.muli %c1_i32_181, %c8_i32_182 : i32
    %633 = tpu.assume_multiple %632, 8 : i32
    %634 = arith.index_cast %633 : i32 to index
    %c0_183 = arith.constant 0 : index
    %635 = vector.load %arg12[%634, %c0_183] : memref<64x128xf32, #tpu.memory_space<vmem>>, vector<8x64xf32>
    %636 = arith.truncf %629 : vector<8x16xf32> to vector<8x16xbf16>
    %cst_184 = arith.constant dense<0.000000e+00> : vector<8x64xf32>
    %637 = tpu.matmul %636, %606, %cst_184 {dimension_numbers = #tpu.dot_dimension_numbers<[1], [0], [0], [1], [0, 0, 1, 1], [], []>} : vector<8x16xbf16>, vector<16x64xbf16>, vector<8x64xf32> -> vector<8x64xf32>
    %638 = arith.addf %635, %637 : vector<8x64xf32>
    %639 = arith.negf %638 : vector<8x64xf32>
    %640 = math.exp %639 : vector<8x64xf32>
    %cst_185 = arith.constant 1.000000e+00 : f32
    %641 = vector.broadcast %cst_185 : f32 to vector<8x64xf32>
    %642 = arith.addf %641, %640 : vector<8x64xf32>
    %643 = arith.divf %641, %642 : vector<8x64xf32>
    %644 = math.tanh %638 : vector<8x64xf32>
    %645 = vector.extract_strided_slice %643 {offsets = [0, 0], sizes = [8, 16], strides = [1, 1]} : vector<8x64xf32> to vector<8x16xf32>
    %646 = vector.extract_strided_slice %643 {offsets = [0, 16], sizes = [8, 16], strides = [1, 1]} : vector<8x64xf32> to vector<8x16xf32>
    %647 = vector.extract_strided_slice %644 {offsets = [0, 32], sizes = [8, 16], strides = [1, 1]} : vector<8x64xf32> to vector<8x16xf32>
    %648 = vector.extract_strided_slice %643 {offsets = [0, 48], sizes = [8, 16], strides = [1, 1]} : vector<8x64xf32> to vector<8x16xf32>
    %649 = arith.mulf %646, %627 : vector<8x16xf32>
    %650 = arith.mulf %645, %647 : vector<8x16xf32>
    %651 = arith.addf %649, %650 : vector<8x16xf32>
    %652 = math.tanh %651 : vector<8x16xf32>
    %653 = arith.mulf %648, %652 : vector<8x16xf32>
    %654 = arith.index_cast %633 : i32 to index
    %c0_186 = arith.constant 0 : index
    %655 = vector.load %arg11[%654, %c0_186] : memref<64x128xf32, #tpu.memory_space<vmem>>, vector<8x16xf32>
    tpu.vector_store %arg11[%654, %c0_186], %653 {strides = array<i32>} : memref<64x128xf32, #tpu.memory_space<vmem>>, vector<8x16xf32>,
    %c2_i32_187 = arith.constant 2 : i32
    %c8_i32_188 = arith.constant 8 : i32
    %656 = arith.muli %c2_i32_187, %c8_i32_188 : i32
    %657 = tpu.assume_multiple %656, 8 : i32
    %658 = arith.index_cast %657 : i32 to index
    %c0_189 = arith.constant 0 : index
    %659 = vector.load %arg12[%658, %c0_189] : memref<64x128xf32, #tpu.memory_space<vmem>>, vector<8x64xf32>
    %660 = arith.truncf %653 : vector<8x16xf32> to vector<8x16xbf16>
    %cst_190 = arith.constant dense<0.000000e+00> : vector<8x64xf32>
    %661 = tpu.matmul %660, %606, %cst_190 {dimension_numbers = #tpu.dot_dimension_numbers<[1], [0], [0], [1], [0, 0, 1, 1], [], []>} : vector<8x16xbf16>, vector<16x64xbf16>, vector<8x64xf32> -> vector<8x64xf32>
    %662 = arith.addf %659, %661 : vector<8x64xf32>
    %663 = arith.negf %662 : vector<8x64xf32>
    %664 = math.exp %663 : vector<8x64xf32>
    %cst_191 = arith.constant 1.000000e+00 : f32
    %665 = vector.broadcast %cst_191 : f32 to vector<8x64xf32>
    %666 = arith.addf %665, %664 : vector<8x64xf32>
    %667 = arith.divf %665, %666 : vector<8x64xf32>
    %668 = math.tanh %662 : vector<8x64xf32>
    %669 = vector.extract_strided_slice %667 {offsets = [0, 0], sizes = [8, 16], strides = [1, 1]} : vector<8x64xf32> to vector<8x16xf32>
    %670 = vector.extract_strided_slice %667 {offsets = [0, 16], sizes = [8, 16], strides = [1, 1]} : vector<8x64xf32> to vector<8x16xf32>
    %671 = vector.extract_strided_slice %668 {offsets = [0, 32], sizes = [8, 16], strides = [1, 1]} : vector<8x64xf32> to vector<8x16xf32>
    %672 = vector.extract_strided_slice %667 {offsets = [0, 48], sizes = [8, 16], strides = [1, 1]} : vector<8x64xf32> to vector<8x16xf32>
    %673 = arith.mulf %670, %651 : vector<8x16xf32>
    %674 = arith.mulf %669, %671 : vector<8x16xf32>
    %675 = arith.addf %673, %674 : vector<8x16xf32>
    %676 = math.tanh %675 : vector<8x16xf32>
    %677 = arith.mulf %672, %676 : vector<8x16xf32>
    %678 = arith.index_cast %657 : i32 to index
    %c0_192 = arith.constant 0 : index
    %679 = vector.load %arg11[%678, %c0_192] : memref<64x128xf32, #tpu.memory_space<vmem>>, vector<8x16xf32>
    tpu.vector_store %arg11[%678, %c0_192], %677 {strides = array<i32>} : memref<64x128xf32, #tpu.memory_space<vmem>>, vector<8x16xf32>,
    %c3_i32_193 = arith.constant 3 : i32
    %c8_i32_194 = arith.constant 8 : i32
    %680 = arith.muli %c3_i32_193, %c8_i32_194 : i32
    %681 = tpu.assume_multiple %680, 8 : i32
    %682 = arith.index_cast %681 : i32 to index
    %c0_195 = arith.constant 0 : index
    %683 = vector.load %arg12[%682, %c0_195] : memref<64x128xf32, #tpu.memory_space<vmem>>, vector<8x64xf32>
    %684 = arith.truncf %677 : vector<8x16xf32> to vector<8x16xbf16>
    %cst_196 = arith.constant dense<0.000000e+00> : vector<8x64xf32>
    %685 = tpu.matmul %684, %606, %cst_196 {dimension_numbers = #tpu.dot_dimension_numbers<[1], [0], [0], [1], [0, 0, 1, 1], [], []>} : vector<8x16xbf16>, vector<16x64xbf16>, vector<8x64xf32> -> vector<8x64xf32>
    %686 = arith.addf %683, %685 : vector<8x64xf32>
    %687 = arith.negf %686 : vector<8x64xf32>
    %688 = math.exp %687 : vector<8x64xf32>
    %cst_197 = arith.constant 1.000000e+00 : f32
    %689 = vector.broadcast %cst_197 : f32 to vector<8x64xf32>
    %690 = arith.addf %689, %688 : vector<8x64xf32>
    %691 = arith.divf %689, %690 : vector<8x64xf32>
    %692 = math.tanh %686 : vector<8x64xf32>
    %693 = vector.extract_strided_slice %691 {offsets = [0, 0], sizes = [8, 16], strides = [1, 1]} : vector<8x64xf32> to vector<8x16xf32>
    %694 = vector.extract_strided_slice %691 {offsets = [0, 16], sizes = [8, 16], strides = [1, 1]} : vector<8x64xf32> to vector<8x16xf32>
    %695 = vector.extract_strided_slice %692 {offsets = [0, 32], sizes = [8, 16], strides = [1, 1]} : vector<8x64xf32> to vector<8x16xf32>
    %696 = vector.extract_strided_slice %691 {offsets = [0, 48], sizes = [8, 16], strides = [1, 1]} : vector<8x64xf32> to vector<8x16xf32>
    %697 = arith.mulf %694, %675 : vector<8x16xf32>
    %698 = arith.mulf %693, %695 : vector<8x16xf32>
    %699 = arith.addf %697, %698 : vector<8x16xf32>
    %700 = math.tanh %699 : vector<8x16xf32>
    %701 = arith.mulf %696, %700 : vector<8x16xf32>
    %702 = arith.index_cast %681 : i32 to index
    %c0_198 = arith.constant 0 : index
    %703 = vector.load %arg11[%702, %c0_198] : memref<64x128xf32, #tpu.memory_space<vmem>>, vector<8x16xf32>
    tpu.vector_store %arg11[%702, %c0_198], %701 {strides = array<i32>} : memref<64x128xf32, #tpu.memory_space<vmem>>, vector<8x16xf32>,
    %c4_i32_199 = arith.constant 4 : i32
    %c8_i32_200 = arith.constant 8 : i32
    %704 = arith.muli %c4_i32_199, %c8_i32_200 : i32
    %705 = tpu.assume_multiple %704, 8 : i32
    %706 = arith.index_cast %705 : i32 to index
    %c0_201 = arith.constant 0 : index
    %707 = vector.load %arg12[%706, %c0_201] : memref<64x128xf32, #tpu.memory_space<vmem>>, vector<8x64xf32>
    %708 = arith.truncf %701 : vector<8x16xf32> to vector<8x16xbf16>
    %cst_202 = arith.constant dense<0.000000e+00> : vector<8x64xf32>
    %709 = tpu.matmul %708, %606, %cst_202 {dimension_numbers = #tpu.dot_dimension_numbers<[1], [0], [0], [1], [0, 0, 1, 1], [], []>} : vector<8x16xbf16>, vector<16x64xbf16>, vector<8x64xf32> -> vector<8x64xf32>
    %710 = arith.addf %707, %709 : vector<8x64xf32>
    %711 = arith.negf %710 : vector<8x64xf32>
    %712 = math.exp %711 : vector<8x64xf32>
    %cst_203 = arith.constant 1.000000e+00 : f32
    %713 = vector.broadcast %cst_203 : f32 to vector<8x64xf32>
    %714 = arith.addf %713, %712 : vector<8x64xf32>
    %715 = arith.divf %713, %714 : vector<8x64xf32>
    %716 = math.tanh %710 : vector<8x64xf32>
    %717 = vector.extract_strided_slice %715 {offsets = [0, 0], sizes = [8, 16], strides = [1, 1]} : vector<8x64xf32> to vector<8x16xf32>
    %718 = vector.extract_strided_slice %715 {offsets = [0, 16], sizes = [8, 16], strides = [1, 1]} : vector<8x64xf32> to vector<8x16xf32>
    %719 = vector.extract_strided_slice %716 {offsets = [0, 32], sizes = [8, 16], strides = [1, 1]} : vector<8x64xf32> to vector<8x16xf32>
    %720 = vector.extract_strided_slice %715 {offsets = [0, 48], sizes = [8, 16], strides = [1, 1]} : vector<8x64xf32> to vector<8x16xf32>
    %721 = arith.mulf %718, %699 : vector<8x16xf32>
    %722 = arith.mulf %717, %719 : vector<8x16xf32>
    %723 = arith.addf %721, %722 : vector<8x16xf32>
    %724 = math.tanh %723 : vector<8x16xf32>
    %725 = arith.mulf %720, %724 : vector<8x16xf32>
    %726 = arith.index_cast %705 : i32 to index
    %c0_204 = arith.constant 0 : index
    %727 = vector.load %arg11[%726, %c0_204] : memref<64x128xf32, #tpu.memory_space<vmem>>, vector<8x16xf32>
    tpu.vector_store %arg11[%726, %c0_204], %725 {strides = array<i32>} : memref<64x128xf32, #tpu.memory_space<vmem>>, vector<8x16xf32>,
    %c5_i32_205 = arith.constant 5 : i32
    %c8_i32_206 = arith.constant 8 : i32
    %728 = arith.muli %c5_i32_205, %c8_i32_206 : i32
    %729 = tpu.assume_multiple %728, 8 : i32
    %730 = arith.index_cast %729 : i32 to index
    %c0_207 = arith.constant 0 : index
    %731 = vector.load %arg12[%730, %c0_207] : memref<64x128xf32, #tpu.memory_space<vmem>>, vector<8x64xf32>
    %732 = arith.truncf %725 : vector<8x16xf32> to vector<8x16xbf16>
    %cst_208 = arith.constant dense<0.000000e+00> : vector<8x64xf32>
    %733 = tpu.matmul %732, %606, %cst_208 {dimension_numbers = #tpu.dot_dimension_numbers<[1], [0], [0], [1], [0, 0, 1, 1], [], []>} : vector<8x16xbf16>, vector<16x64xbf16>, vector<8x64xf32> -> vector<8x64xf32>
    %734 = arith.addf %731, %733 : vector<8x64xf32>
    %735 = arith.negf %734 : vector<8x64xf32>
    %736 = math.exp %735 : vector<8x64xf32>
    %cst_209 = arith.constant 1.000000e+00 : f32
    %737 = vector.broadcast %cst_209 : f32 to vector<8x64xf32>
    %738 = arith.addf %737, %736 : vector<8x64xf32>
    %739 = arith.divf %737, %738 : vector<8x64xf32>
    %740 = math.tanh %734 : vector<8x64xf32>
    %741 = vector.extract_strided_slice %739 {offsets = [0, 0], sizes = [8, 16], strides = [1, 1]} : vector<8x64xf32> to vector<8x16xf32>
    %742 = vector.extract_strided_slice %739 {offsets = [0, 16], sizes = [8, 16], strides = [1, 1]} : vector<8x64xf32> to vector<8x16xf32>
    %743 = vector.extract_strided_slice %740 {offsets = [0, 32], sizes = [8, 16], strides = [1, 1]} : vector<8x64xf32> to vector<8x16xf32>
    %744 = vector.extract_strided_slice %739 {offsets = [0, 48], sizes = [8, 16], strides = [1, 1]} : vector<8x64xf32> to vector<8x16xf32>
    %745 = arith.mulf %742, %723 : vector<8x16xf32>
    %746 = arith.mulf %741, %743 : vector<8x16xf32>
    %747 = arith.addf %745, %746 : vector<8x16xf32>
    %748 = math.tanh %747 : vector<8x16xf32>
    %749 = arith.mulf %744, %748 : vector<8x16xf32>
    %750 = arith.index_cast %729 : i32 to index
    %c0_210 = arith.constant 0 : index
    %751 = vector.load %arg11[%750, %c0_210] : memref<64x128xf32, #tpu.memory_space<vmem>>, vector<8x16xf32>
    tpu.vector_store %arg11[%750, %c0_210], %749 {strides = array<i32>} : memref<64x128xf32, #tpu.memory_space<vmem>>, vector<8x16xf32>,
    %c6_i32_211 = arith.constant 6 : i32
    %c8_i32_212 = arith.constant 8 : i32
    %752 = arith.muli %c6_i32_211, %c8_i32_212 : i32
    %753 = tpu.assume_multiple %752, 8 : i32
    %754 = arith.index_cast %753 : i32 to index
    %c0_213 = arith.constant 0 : index
    %755 = vector.load %arg12[%754, %c0_213] : memref<64x128xf32, #tpu.memory_space<vmem>>, vector<8x64xf32>
    %756 = arith.truncf %749 : vector<8x16xf32> to vector<8x16xbf16>
    %cst_214 = arith.constant dense<0.000000e+00> : vector<8x64xf32>
    %757 = tpu.matmul %756, %606, %cst_214 {dimension_numbers = #tpu.dot_dimension_numbers<[1], [0], [0], [1], [0, 0, 1, 1], [], []>} : vector<8x16xbf16>, vector<16x64xbf16>, vector<8x64xf32> -> vector<8x64xf32>
    %758 = arith.addf %755, %757 : vector<8x64xf32>
    %759 = arith.negf %758 : vector<8x64xf32>
    %760 = math.exp %759 : vector<8x64xf32>
    %cst_215 = arith.constant 1.000000e+00 : f32
    %761 = vector.broadcast %cst_215 : f32 to vector<8x64xf32>
    %762 = arith.addf %761, %760 : vector<8x64xf32>
    %763 = arith.divf %761, %762 : vector<8x64xf32>
    %764 = math.tanh %758 : vector<8x64xf32>
    %765 = vector.extract_strided_slice %763 {offsets = [0, 0], sizes = [8, 16], strides = [1, 1]} : vector<8x64xf32> to vector<8x16xf32>
    %766 = vector.extract_strided_slice %763 {offsets = [0, 16], sizes = [8, 16], strides = [1, 1]} : vector<8x64xf32> to vector<8x16xf32>
    %767 = vector.extract_strided_slice %764 {offsets = [0, 32], sizes = [8, 16], strides = [1, 1]} : vector<8x64xf32> to vector<8x16xf32>
    %768 = vector.extract_strided_slice %763 {offsets = [0, 48], sizes = [8, 16], strides = [1, 1]} : vector<8x64xf32> to vector<8x16xf32>
    %769 = arith.mulf %766, %747 : vector<8x16xf32>
    %770 = arith.mulf %765, %767 : vector<8x16xf32>
    %771 = arith.addf %769, %770 : vector<8x16xf32>
    %772 = math.tanh %771 : vector<8x16xf32>
    %773 = arith.mulf %768, %772 : vector<8x16xf32>
    %774 = arith.index_cast %753 : i32 to index
    %c0_216 = arith.constant 0 : index
    %775 = vector.load %arg11[%774, %c0_216] : memref<64x128xf32, #tpu.memory_space<vmem>>, vector<8x16xf32>
    tpu.vector_store %arg11[%774, %c0_216], %773 {strides = array<i32>} : memref<64x128xf32, #tpu.memory_space<vmem>>, vector<8x16xf32>,
    %c7_i32_217 = arith.constant 7 : i32
    %c8_i32_218 = arith.constant 8 : i32
    %776 = arith.muli %c7_i32_217, %c8_i32_218 : i32
    %777 = tpu.assume_multiple %776, 8 : i32
    %778 = arith.index_cast %777 : i32 to index
    %c0_219 = arith.constant 0 : index
    %779 = vector.load %arg12[%778, %c0_219] : memref<64x128xf32, #tpu.memory_space<vmem>>, vector<8x64xf32>
    %780 = arith.truncf %773 : vector<8x16xf32> to vector<8x16xbf16>
    %cst_220 = arith.constant dense<0.000000e+00> : vector<8x64xf32>
    %781 = tpu.matmul %780, %606, %cst_220 {dimension_numbers = #tpu.dot_dimension_numbers<[1], [0], [0], [1], [0, 0, 1, 1], [], []>} : vector<8x16xbf16>, vector<16x64xbf16>, vector<8x64xf32> -> vector<8x64xf32>
    %782 = arith.addf %779, %781 : vector<8x64xf32>
    %783 = arith.negf %782 : vector<8x64xf32>
    %784 = math.exp %783 : vector<8x64xf32>
    %cst_221 = arith.constant 1.000000e+00 : f32
    %785 = vector.broadcast %cst_221 : f32 to vector<8x64xf32>
    %786 = arith.addf %785, %784 : vector<8x64xf32>
    %787 = arith.divf %785, %786 : vector<8x64xf32>
    %788 = math.tanh %782 : vector<8x64xf32>
    %789 = vector.extract_strided_slice %787 {offsets = [0, 0], sizes = [8, 16], strides = [1, 1]} : vector<8x64xf32> to vector<8x16xf32>
    %790 = vector.extract_strided_slice %787 {offsets = [0, 16], sizes = [8, 16], strides = [1, 1]} : vector<8x64xf32> to vector<8x16xf32>
    %791 = vector.extract_strided_slice %788 {offsets = [0, 32], sizes = [8, 16], strides = [1, 1]} : vector<8x64xf32> to vector<8x16xf32>
    %792 = vector.extract_strided_slice %787 {offsets = [0, 48], sizes = [8, 16], strides = [1, 1]} : vector<8x64xf32> to vector<8x16xf32>
    %793 = arith.mulf %790, %771 : vector<8x16xf32>
    %794 = arith.mulf %789, %791 : vector<8x16xf32>
    %795 = arith.addf %793, %794 : vector<8x16xf32>
    %796 = math.tanh %795 : vector<8x16xf32>
    %797 = arith.mulf %792, %796 : vector<8x16xf32>
    %798 = arith.index_cast %777 : i32 to index
    %c0_222 = arith.constant 0 : index
    %799 = vector.load %arg11[%798, %c0_222] : memref<64x128xf32, #tpu.memory_space<vmem>>, vector<8x16xf32>
    tpu.vector_store %arg11[%798, %c0_222], %797 {strides = array<i32>} : memref<64x128xf32, #tpu.memory_space<vmem>>, vector<8x16xf32>,
    %c8_i32_223 = arith.constant 8 : i32
    return
  }
}

</mosaic_0001>

<llo_original>
// kernel: mul.8
$region0: #{mul.8}
  %s0 = inlined_call_operand.vmem [shape: f32[8,8], index: 0, kind: input, shape index: {}]
  %s1 = inlined_call_operand.vmem [shape: f32[64], index: 1, kind: output, shape index: {}]
  $region1: #{mul.8} parent=0
    #allocation0 [shape = 'u8[4096]{0}', space=vmem, size = 0x1000, scoped, tag = 'scoped mem for output reshape']
    %v2 = vld [vmem:[%s0] sm:$0x1]
    %vm3 = vcmask 64512
    %4 = vst.msk [vmem:[#allocation0] sm:$0x1] %vm3, %v2
    %s5 = scalar_lea.vmem %s0, 7
    %v6 = vld [vmem:[%s5] sm:$0x1]
    %7 = vrot.lane.b32.xlu0 %v6, 56
    %v8 = vpop.permute.xlu0 %7
    %vm9 = vcmask 523712
    %10 = vst.msk [vmem:[#allocation0] sm:$0x1] %vm9, %v8
    %s11 = scalar_lea.vmem %s0, 6
    %v12 = vld [vmem:[%s11] sm:$0x1]
    %13 = vrot.lane.b32.xlu0 %v12, 48
    %v14 = vpop.permute.xlu0 %13
    %vm15 = vcmask 458112
    %16 = vst.msk [vmem:[#allocation0] sm:$0x1] %vm15, %v14
    %s17 = scalar_lea.vmem %s0, 5
    %v18 = vld [vmem:[%s17] sm:$0x1]
    %19 = vrot.lane.b32.xlu0 %v18, 40
    %v20 = vpop.permute.xlu0 %19
    %vm21 = vcmask 392512
    %22 = vst.msk [vmem:[#allocation0] sm:$0x1] %vm21, %v20
    %s23 = scalar_lea.vmem %s0, 4
    %v24 = vld [vmem:[%s23] sm:$0x1]
    %25 = vrot.lane.b32.xlu0 %v24, 32
    %v26 = vpop.permute.xlu0 %25
    %vm27 = vcmask 326912
    %28 = vst.msk [vmem:[#allocation0] sm:$0x1] %vm27, %v26
    %s29 = scalar_lea.vmem %s0, 3
    %v30 = vld [vmem:[%s29] sm:$0x1]
    %31 = vrot.lane.b32.xlu0 %v30, 24
    %v32 = vpop.permute.xlu0 %31
    %vm33 = vcmask 261312
    %34 = vst.msk [vmem:[#allocation0] sm:$0x1] %vm33, %v32
    %s35 = scalar_lea.vmem %s0, 2
    %v36 = vld [vmem:[%s35] sm:$0x1]
    %37 = vrot.lane.b32.xlu0 %v36, 16
    %v38 = vpop.permute.xlu0 %37
    %vm39 = vcmask 195712
    %40 = vst.msk [vmem:[#allocation0] sm:$0x1] %vm39, %v38
    %s41 = scalar_lea.vmem %s0, 1
    %v42 = vld [vmem:[%s41] sm:$0x1]
    %43 = vrot.lane.b32.xlu0 %v42, 8
    %v44 = vpop.permute.xlu0 %43
    %vm45 = vcmask 130112
    %46 = vst.msk [vmem:[#allocation0] sm:$0x1] %vm45, %v44
    %s48 = sshllo.u32 0, 1
    %v50 = vld [vmem:[#allocation0] sm:%s48]
    %s51 = sshllo.u32 0, 1
    %52 = vst [vmem:[%s1] sm:%s51] %v50

// kernel: encoder_lstm_forward.1
$region0: #{encoder_lstm_forward.1}
  #allocation0 [shape = 'u32[]', space=smem, size = 0x4, offset = 0x4, fixed_abs, tag = 'smem constant byte address 0x4 - core index']
  #allocation1 [shape = 'u32[144,128]{1,0:T(1,128)}', space=vmem, size = 0x12000, scoped, tag = 'internal scratch']
  #allocation2 [shape = 'f32[64,128]{1,0:T(8,128)}', space=vmem, size = 0x8000, scoped, tag = 'scratch operand']
  %s0 = inlined_call_operand.vmem [shape: f32[64,128], index: 0, kind: input, shape index: {}]
  %s1 = inlined_call_operand.vmem [shape: bf16[32,128], index: 1, kind: input, shape index: {}]
  %s2 = inlined_call_operand.vmem [shape: bf16[32,64], index: 2, kind: input, shape index: {}]
  %s3 = inlined_call_operand.vmem [shape: bf16[16,64], index: 3, kind: input, shape index: {}]
  %s4 = inlined_call_operand.vmem [shape: f32[1,128], index: 4, kind: input, shape index: {}]
  %s5 = inlined_call_operand.vmem [shape: f32[1,64], index: 5, kind: input, shape index: {}]
  %s6 = inlined_call_operand.vmem [shape: f32[1,64], index: 6, kind: input, shape index: {}]
  %s7 = inlined_call_operand.vmem [shape: bf16[32,128], index: 7, kind: input, shape index: {}]
  %s8 = inlined_call_operand.vmem [shape: bf16[32,128], index: 8, kind: input, shape index: {}]
  %s9 = inlined_call_operand.vmem [shape: bf16[16,64], index: 9, kind: input, shape index: {}]
  %s10 = inlined_call_operand.vmem [shape: bf16[16,64], index: 10, kind: input, shape index: {}]
  %s11 = inlined_call_operand.vmem [shape: f32[64,128], index: 11, kind: output, shape index: {}]
  %s12 = sld [smem:[#allocation0]]
  $region54: #{encoder_lstm_forward.1} parent=0
    _
  %s14 = ssub.s32 1, %s12
  %s15 = scalar_select 0, %s14, %s12
  // Predicated region
  $region2: #{encoder_lstm_forward.1} parent=0 // pred_check
    _
  $region3: #{encoder_lstm_forward.1} parent=0 // pred_check_branch
    %17 = sbr.rel (0) target = $region5
  $region4: #{encoder_lstm_forward.1} parent=0 // pred_region
    _
  $region5: #{encoder_lstm_forward.1} parent=0 // pred_fallthru
    _
  // Predicated region
  $region6: #{encoder_lstm_forward.1} parent=0 // pred_check
    _
  $region7: #{encoder_lstm_forward.1} parent=0 // pred_check_branch
    %19 = sbr.rel (0) target = $region9
  $region8: #{encoder_lstm_forward.1} parent=0 // pred_region
    _
  $region9: #{encoder_lstm_forward.1} parent=0 // pred_fallthru
    _
  // Predicated region
  $region10: #{encoder_lstm_forward.1} parent=0 // pred_check
    _
  $region11: #{encoder_lstm_forward.1} parent=0 // pred_check_branch
    %21 = sbr.rel (0) target = $region13
  $region12: #{encoder_lstm_forward.1} parent=0 // pred_region
    _
  $region13: #{encoder_lstm_forward.1} parent=0 // pred_fallthru
    _
  // Predicated region
  $region14: #{encoder_lstm_forward.1} parent=0 // pred_check
    _
  $region15: #{encoder_lstm_forward.1} parent=0 // pred_check_branch
    %23 = sbr.rel (0) target = $region17
  $region16: #{encoder_lstm_forward.1} parent=0 // pred_region
    _
  $region17: #{encoder_lstm_forward.1} parent=0 // pred_fallthru
    _
  // Predicated region
  $region18: #{encoder_lstm_forward.1} parent=0 // pred_check
    _
  $region19: #{encoder_lstm_forward.1} parent=0 // pred_check_branch
    %25 = sbr.rel (0) target = $region21
  $region20: #{encoder_lstm_forward.1} parent=0 // pred_region
    _
  $region21: #{encoder_lstm_forward.1} parent=0 // pred_fallthru
    _
  // Predicated region
  $region22: #{encoder_lstm_forward.1} parent=0 // pred_check
    _
  $region23: #{encoder_lstm_forward.1} parent=0 // pred_check_branch
    %27 = sbr.rel (0) target = $region25
  $region24: #{encoder_lstm_forward.1} parent=0 // pred_region
    _
  $region25: #{encoder_lstm_forward.1} parent=0 // pred_fallthru
    _
  // Predicated region
  $region26: #{encoder_lstm_forward.1} parent=0 // pred_check
    _
  $region27: #{encoder_lstm_forward.1} parent=0 // pred_check_branch
    %29 = sbr.rel (0) target = $region29
  $region28: #{encoder_lstm_forward.1} parent=0 // pred_region
    _
  $region29: #{encoder_lstm_forward.1} parent=0 // pred_fallthru
    _
  // Predicated region
  $region30: #{encoder_lstm_forward.1} parent=0 // pred_check
    _
  $region31: #{encoder_lstm_forward.1} parent=0 // pred_check_branch
    %31 = sbr.rel (0) target = $region33
  $region32: #{encoder_lstm_forward.1} parent=0 // pred_region
    _
  $region33: #{encoder_lstm_forward.1} parent=0 // pred_fallthru
    _
  // Predicated region
  $region34: #{encoder_lstm_forward.1} parent=0 // pred_check
    _
  $region35: #{encoder_lstm_forward.1} parent=0 // pred_check_branch
    %33 = sbr.rel (0) target = $region37
  $region36: #{encoder_lstm_forward.1} parent=0 // pred_region
    _
  $region37: #{encoder_lstm_forward.1} parent=0 // pred_fallthru
    _
  // Predicated region
  $region38: #{encoder_lstm_forward.1} parent=0 // pred_check
    _
  $region39: #{encoder_lstm_forward.1} parent=0 // pred_check_branch
    %35 = sbr.rel (0) target = $region41
  $region40: #{encoder_lstm_forward.1} parent=0 // pred_region
    _
  $region41: #{encoder_lstm_forward.1} parent=0 // pred_fallthru
    _
  // Predicated region
  $region42: #{encoder_lstm_forward.1} parent=0 // pred_check
    _
  $region43: #{encoder_lstm_forward.1} parent=0 // pred_check_branch
    %37 = sbr.rel (0) target = $region45
  $region44: #{encoder_lstm_forward.1} parent=0 // pred_region
    _
  $region45: #{encoder_lstm_forward.1} parent=0 // pred_fallthru
    _
  %v39 = vld [vmem:[%s7] sm:$0xf]
  %v40 = vld [vmem:[%s7 + $0x4] sm:$0xf]
  %v41 = vld [vmem:[%s7 + $0x8] sm:$0xf]
  %v42 = vld [vmem:[%s7 + $0xc] sm:$0xf]
  %v43 = vld [vmem:[%s0] sm:$0xff]
  %v48 = vunpack.c.l.b16 %v39
  %v49 = vunpack.c.l.b16 %v40
  %v50 = vunpack.c.l.b16 %v41
  %v51 = vunpack.c.l.b16 %v42
  %v52 = vpack.c.b16 %v49, %v48
  %v53 = vpack.c.b16 %v51, %v50
  %vm56 = vcmask 261120
  %v58 = vsel %vm56, 0, 0
  %60 = vmatprep.subr.bf16.mxu0 0
  %61 = vmatpush1.bf16.msra.mxu0 %v52
  %62 = vmatprep.subr.bf16.mxu0 0
  %63 = vmatpush1.bf16.msra.mxu0 %v53
  %64 = vmatprep.subr.bf16.mxu0 0
  %65 = vmatpush1.bf16.msra.mxu0 0
  %66 = vmatprep.subr.bf16.mxu0 0
  %67 = vmatpush1.bf16.msra.mxu0 0
  %68 = vmatprep.subr.bf16.mxu0 0
  %69 = vmatpush1.bf16.msra.mxu0 0
  %70 = vmatprep.subr.bf16.mxu0 0
  %71 = vmatpush1.bf16.msra.mxu0 0
  %72 = vmatprep.subr.bf16.mxu0 0
  %73 = vmatpush1.bf16.msra.mxu0 0
  %74 = vmatprep.subr.bf16.mxu0 0
  %75 = vmatpush1.bf16.msra.mxu0 0
  %76 = vmatprep.subr.bf16.mxu0 0
  %77 = vmatpush1.bf16.msra.mxu0 0
  %78 = vmatprep.subr.bf16.mxu0 0
  %79 = vmatpush1.bf16.msra.mxu0 0
  %80 = vmatprep.subr.bf16.mxu0 0
  %81 = vmatpush1.bf16.msra.mxu0 0
  %82 = vmatprep.subr.bf16.mxu0 0
  %83 = vmatpush1.bf16.msra.mxu0 0
  %84 = vmatprep.subr.bf16.mxu0 0
  %85 = vmatpush1.bf16.msra.mxu0 0
  %86 = vmatprep.subr.bf16.mxu0 0
  %87 = vmatpush1.bf16.msra.mxu0 0
  %88 = vmatprep.subr.bf16.mxu0 0
  %89 = vmatpush1.bf16.msra.mxu0 0
  %90 = vmatprep.subr.bf16.mxu0 0
  %91 = vmatpush1.bf16.msra.mxu0 0
  %92 = vmatprep.mubr.bf16.mxu0 0
  %93 = vmatmul.mubr.bf16.gmra.mrb[0].mxu0 %v58
  %v94 = vpop.f32.mrb[0].mxu0
  %v95 = vadd.f32 0.0, %v94
  %v96 = vpop.f32.mrb[0].mxu0
  %v97 = vpop.f32.mrb[0].mxu0
  %v98 = vpop.f32.mrb[0].mxu0
  %99 = vdwg.mxu0
  %v100 = vadd.f32 %v43, %v95
  %v101 = vxor.u32 %v100, 2147483648
  %v102 = vmul.f32 %v101, 1.442695
  %v103 = vpow.pop %v102
  %v104 = vadd.f32 %v103, 1.0
  %v105 = vrcp.pop %v104
  %v106 = vmul.f32 1.0, %v105
  %v107 = vtanh.pop %v100
  %v108 = vmul.f32 %v106, 0.0
  %110 = vrot.lane.b32.xlu0 %v107, 64
  %v111 = vpop.permute.xlu0 %110
  %v113 = vmul.f32 %v106, %v111
  %115 = vrot.lane.b32.xlu0 %v113, 32
  %v116 = vpop.permute.xlu0 %115
  %v118 = vadd.f32 %v108, %v116
  %v119 = vtanh.pop %v118
  %121 = vrot.lane.b32.xlu0 %v119, 64
  %v122 = vpop.permute.xlu0 %121
  %v124 = vmul.f32 %v106, %v122
  %126 = vrot.lane.b32.xlu0 %v124, 32
  %v127 = vpop.permute.xlu0 %126
  %129 = vst.msk [vmem:[%s11] sm:$0xff] %vm56, %v127
  %s130 = scalar_lea.vmem %s0, 8
  %v131 = vld [vmem:[%s130] sm:$0xff]
  %v132 = vpack.c.bf16 %v124, %v124
  %134 = vrot.lane.b32.xlu0 %v132, 32
  %v135 = vpop.permute.xlu0 %134
  %v137 = vsel %vm56, %v135, 0
  %139 = vmatprep.subr.bf16.mxu0 0
  %140 = vmatpush1.bf16.msra.mxu0 %v52
  %141 = vmatprep.subr.bf16.mxu0 0
  %142 = vmatpush1.bf16.msra.mxu0 %v53
  %143 = vmatprep.subr.bf16.mxu0 0
  %144 = vmatpush1.bf16.msra.mxu0 0
  %145 = vmatprep.subr.bf16.mxu0 0
  %146 = vmatpush1.bf16.msra.mxu0 0
  %147 = vmatprep.subr.bf16.mxu0 0
  %148 = vmatpush1.bf16.msra.mxu0 0
  %149 = vmatprep.subr.bf16.mxu0 0
  %150 = vmatpush1.bf16.msra.mxu0 0
  %151 = vmatprep.subr.bf16.mxu0 0
  %152 = vmatpush1.bf16.msra.mxu0 0
  %153 = vmatprep.subr.bf16.mxu0 0
  %154 = vmatpush1.bf16.msra.mxu0 0
  %155 = vmatprep.subr.bf16.mxu0 0
  %156 = vmatpush1.bf16.msra.mxu0 0
  %157 = vmatprep.subr.bf16.mxu0 0
  %158 = vmatpush1.bf16.msra.mxu0 0
  %159 = vmatprep.subr.bf16.mxu0 0
  %160 = vmatpush1.bf16.msra.mxu0 0
  %161 = vmatprep.subr.bf16.mxu0 0
  %162 = vmatpush1.bf16.msra.mxu0 0
  %163 = vmatprep.subr.bf16.mxu0 0
  %164 = vmatpush1.bf16.msra.mxu0 0
  %165 = vmatprep.subr.bf16.mxu0 0
  %166 = vmatpush1.bf16.msra.mxu0 0
  %167 = vmatprep.subr.bf16.mxu0 0
  %168 = vmatpush1.bf16.msra.mxu0 0
  %169 = vmatprep.subr.bf16.mxu0 0
  %170 = vmatpush1.bf16.msra.mxu0 0
  %171 = vmatprep.mubr.bf16.mxu0 0
  %172 = vmatmul.mubr.bf16.gmra.mrb[0].mxu0 %v137
  %v173 = vpop.f32.mrb[0].mxu0
  %v174 = vadd.f32 0.0, %v173
  %v175 = vpop.f32.mrb[0].mxu0
  %v176 = vpop.f32.mrb[0].mxu0
  %v177 = vpop.f32.mrb[0].mxu0
  %178 = vdwg.mxu0
  %v179 = vadd.f32 %v131, %v174
  %v180 = vxor.u32 %v179, 2147483648
  %v181 = vmul.f32 %v180, 1.442695
  %v182 = vpow.pop %v181
  %v183 = vadd.f32 %v182, 1.0
  %v184 = vrcp.pop %v183
  %v185 = vmul.f32 1.0, %v184
  %v186 = vtanh.pop %v179
  %v187 = vmul.f32 %v185, %v118
  %189 = vrot.lane.b32.xlu0 %v186, 64
  %v190 = vpop.permute.xlu0 %189
  %v192 = vmul.f32 %v185, %v190
  %194 = vrot.lane.b32.xlu0 %v192, 32
  %v195 = vpop.permute.xlu0 %194
  %v197 = vadd.f32 %v187, %v195
  %v198 = vtanh.pop %v197
  %200 = vrot.lane.b32.xlu0 %v198, 64
  %v201 = vpop.permute.xlu0 %200
  %v203 = vmul.f32 %v185, %v201
  %205 = vrot.lane.b32.xlu0 %v203, 32
  %v206 = vpop.permute.xlu0 %205
  %s208 = scalar_lea.vmem %s11, 8
  %209 = vst.msk [vmem:[%s208] sm:$0xff] %vm56, %v206
  %s210 = scalar_lea.vmem %s0, 16
  %v211 = vld [vmem:[%s210] sm:$0xff]
  %v212 = vpack.c.bf16 %v203, %v203
  %214 = vrot.lane.b32.xlu0 %v212, 32
  %v215 = vpop.permute.xlu0 %214
  %v217 = vsel %vm56, %v215, 0
  %219 = vmatprep.subr.bf16.mxu0 0
  %220 = vmatpush1.bf16.msra.mxu0 %v52
  %221 = vmatprep.subr.bf16.mxu0 0
  %222 = vmatpush1.bf16.msra.mxu0 %v53
  %223 = vmatprep.subr.bf16.mxu0 0
  %224 = vmatpush1.bf16.msra.mxu0 0
  %225 = vmatprep.subr.bf16.mxu0 0
  %226 = vmatpush1.bf16.msra.mxu0 0
  %227 = vmatprep.subr.bf16.mxu0 0
  %228 = vmatpush1.bf16.msra.mxu0 0
  %229 = vmatprep.subr.bf16.mxu0 0
  %230 = vmatpush1.bf16.msra.mxu0 0
  %231 = vmatprep.subr.bf16.mxu0 0
  %232 = vmatpush1.bf16.msra.mxu0 0
  %233 = vmatprep.subr.bf16.mxu0 0
  %234 = vmatpush1.bf16.msra.mxu0 0
  %235 = vmatprep.subr.bf16.mxu0 0
  %236 = vmatpush1.bf16.msra.mxu0 0
  %237 = vmatprep.subr.bf16.mxu0 0
  %238 = vmatpush1.bf16.msra.mxu0 0
  %239 = vmatprep.subr.bf16.mxu0 0
  %240 = vmatpush1.bf16.msra.mxu0 0
  %241 = vmatprep.subr.bf16.mxu0 0
  %242 = vmatpush1.bf16.msra.mxu0 0
  %243 = vmatprep.subr.bf16.mxu0 0
  %244 = vmatpush1.bf16.msra.mxu0 0
  %245 = vmatprep.subr.bf16.mxu0 0
  %246 = vmatpush1.bf16.msra.mxu0 0
  %247 = vmatprep.subr.bf16.mxu0 0
  %248 = vmatpush1.bf16.msra.mxu0 0
  %249 = vmatprep.subr.bf16.mxu0 0
  %250 = vmatpush1.bf16.msra.mxu0 0
  %251 = vmatprep.mubr.bf16.mxu0 0
  %252 = vmatmul.mubr.bf16.gmra.mrb[0].mxu0 %v217
  %v253 = vpop.f32.mrb[0].mxu0
  %v254 = vadd.f32 0.0, %v253
  %v255 = vpop.f32.mrb[0].mxu0
  %v256 = vpop.f32.mrb[0].mxu0
  %v257 = vpop.f32.mrb[0].mxu0
  %258 = vdwg.mxu0
  %v259 = vadd.f32 %v211, %v254
  %v260 = vxor.u32 %v259, 2147483648
  %v261 = vmul.f32 %v260, 1.442695
  %v262 = vpow.pop %v261
  %v263 = vadd.f32 %v262, 1.0
  %v264 = vrcp.pop %v263
  %v265 = vmul.f32 1.0, %v264
  %v266 = vtanh.pop %v259
  %v267 = vmul.f32 %v265, %v197
  %269 = vrot.lane.b32.xlu0 %v266, 64
  %v270 = vpop.permute.xlu0 %269
  %v272 = vmul.f32 %v265, %v270
  %274 = vrot.lane.b32.xlu0 %v272, 32
  %v275 = vpop.permute.xlu0 %274
  %v277 = vadd.f32 %v267, %v275
  %v278 = vtanh.pop %v277
  %280 = vrot.lane.b32.xlu0 %v278, 64
  %v281 = vpop.permute.xlu0 %280
  %v283 = vmul.f32 %v265, %v281
  %285 = vrot.lane.b32.xlu0 %v283, 32
  %v286 = vpop.permute.xlu0 %285
  %s288 = scalar_lea.vmem %s11, 16
  %289 = vst.msk [vmem:[%s288] sm:$0xff] %vm56, %v286
  %s290 = scalar_lea.vmem %s0, 24
  %v291 = vld [vmem:[%s290] sm:$0xff]
  %v292 = vpack.c.bf16 %v283, %v283
  %294 = vrot.lane.b32.xlu0 %v292, 32
  %v295 = vpop.permute.xlu0 %294
  %v297 = vsel %vm56, %v295, 0
  %299 = vmatprep.subr.bf16.mxu0 0
  %300 = vmatpush1.bf16.msra.mxu0 %v52
  %301 = vmatprep.subr.bf16.mxu0 0
  %302 = vmatpush1.bf16.msra.mxu0 %v53
  %303 = vmatprep.subr.bf16.mxu0 0
  %304 = vmatpush1.bf16.msra.mxu0 0
  %305 = vmatprep.subr.bf16.mxu0 0
  %306 = vmatpush1.bf16.msra.mxu0 0
  %307 = vmatprep.subr.bf16.mxu0 0
  %308 = vmatpush1.bf16.msra.mxu0 0
  %309 = vmatprep.subr.bf16.mxu0 0
  %310 = vmatpush1.bf16.msra.mxu0 0
  %311 = vmatprep.subr.bf16.mxu0 0
  %312 = vmatpush1.bf16.msra.mxu0 0
  %313 = vmatprep.subr.bf16.mxu0 0
  %314 = vmatpush1.bf16.msra.mxu0 0
  %315 = vmatprep.subr.bf16.mxu0 0
  %316 = vmatpush1.bf16.msra.mxu0 0
  %317 = vmatprep.subr.bf16.mxu0 0
  %318 = vmatpush1.bf16.msra.mxu0 0
  %319 = vmatprep.subr.bf16.mxu0 0
  %320 = vmatpush1.bf16.msra.mxu0 0
  %321 = vmatprep.subr.bf16.mxu0 0
  %322 = vmatpush1.bf16.msra.mxu0 0
  %323 = vmatprep.subr.bf16.mxu0 0
  %324 = vmatpush1.bf16.msra.mxu0 0
  %325 = vmatprep.subr.bf16.mxu0 0
  %326 = vmatpush1.bf16.msra.mxu0 0
  %327 = vmatprep.subr.bf16.mxu0 0
  %328 = vmatpush1.bf16.msra.mxu0 0
  %329 = vmatprep.subr.bf16.mxu0 0
  %330 = vmatpush1.bf16.msra.mxu0 0
  %331 = vmatprep.mubr.bf16.mxu0 0
  %332 = vmatmul.mubr.bf16.gmra.mrb[0].mxu0 %v297
  %v333 = vpop.f32.mrb[0].mxu0
  %v334 = vadd.f32 0.0, %v333
  %v335 = vpop.f32.mrb[0].mxu0
  %v336 = vpop.f32.mrb[0].mxu0
  %v337 = vpop.f32.mrb[0].mxu0
  %338 = vdwg.mxu0
  %v339 = vadd.f32 %v291, %v334
  %v340 = vxor.u32 %v339, 2147483648
  %v341 = vmul.f32 %v340, 1.442695
  %v342 = vpow.pop %v341
  %v343 = vadd.f32 %v342, 1.0
  %v344 = vrcp.pop %v343
  %v345 = vmul.f32 1.0, %v344
  %v346 = vtanh.pop %v339
  %v347 = vmul.f32 %v345, %v277
  %349 = vrot.lane.b32.xlu0 %v346, 64
  %v350 = vpop.permute.xlu0 %349
  %v352 = vmul.f32 %v345, %v350
  %354 = vrot.lane.b32.xlu0 %v352, 32
  %v355 = vpop.permute.xlu0 %354
  %v357 = vadd.f32 %v347, %v355
  %v358 = vtanh.pop %v357
  %360 = vrot.lane.b32.xlu0 %v358, 64
  %v361 = vpop.permute.xlu0 %360
  %v363 = vmul.f32 %v345, %v361
  %365 = vrot.lane.b32.xlu0 %v363, 32
  %v366 = vpop.permute.xlu0 %365
  %s368 = scalar_lea.vmem %s11, 24
  %369 = vst.msk [vmem:[%s368] sm:$0xff] %vm56, %v366
  %s370 = scalar_lea.vmem %s0, 32
  %v371 = vld [vmem:[%s370] sm:$0xff]
  %v372 = vpack.c.bf16 %v363, %v363
  %374 = vrot.lane.b32.xlu0 %v372, 32
  %v375 = vpop.permute.xlu0 %374
  %v377 = vsel %vm56, %v375, 0
  %379 = vmatprep.subr.bf16.mxu0 0
  %380 = vmatpush1.bf16.msra.mxu0 %v52
  %381 = vmatprep.subr.bf16.mxu0 0
  %382 = vmatpush1.bf16.msra.mxu0 %v53
  %383 = vmatprep.subr.bf16.mxu0 0
  %384 = vmatpush1.bf16.msra.mxu0 0
  %385 = vmatprep.subr.bf16.mxu0 0
  %386 = vmatpush1.bf16.msra.mxu0 0
  %387 = vmatprep.subr.bf16.mxu0 0
  %388 = vmatpush1.bf16.msra.mxu0 0
  %389 = vmatprep.subr.bf16.mxu0 0
  %390 = vmatpush1.bf16.msra.mxu0 0
  %391 = vmatprep.subr.bf16.mxu0 0
  %392 = vmatpush1.bf16.msra.mxu0 0
  %393 = vmatprep.subr.bf16.mxu0 0
  %394 = vmatpush1.bf16.msra.mxu0 0
  %395 = vmatprep.subr.bf16.mxu0 0
  %396 = vmatpush1.bf16.msra.mxu0 0
  %397 = vmatprep.subr.bf16.mxu0 0
  %398 = vmatpush1.bf16.msra.mxu0 0
  %399 = vmatprep.subr.bf16.mxu0 0
  %400 = vmatpush1.bf16.msra.mxu0 0
  %401 = vmatprep.subr.bf16.mxu0 0
  %402 = vmatpush1.bf16.msra.mxu0 0
  %403 = vmatprep.subr.bf16.mxu0 0
  %404 = vmatpush1.bf16.msra.mxu0 0
  %405 = vmatprep.subr.bf16.mxu0 0
  %406 = vmatpush1.bf16.msra.mxu0 0
  %407 = vmatprep.subr.bf16.mxu0 0
  %408 = vmatpush1.bf16.msra.mxu0 0
  %409 = vmatprep.subr.bf16.mxu0 0
  %410 = vmatpush1.bf16.msra.mxu0 0
  %411 = vmatprep.mubr.bf16.mxu0 0
  %412 = vmatmul.mubr.bf16.gmra.mrb[0].mxu0 %v377
  %v413 = vpop.f32.mrb[0].mxu0
  %v414 = vadd.f32 0.0, %v413
  %v415 = vpop.f32.mrb[0].mxu0
  %v416 = vpop.f32.mrb[0].mxu0
  %v417 = vpop.f32.mrb[0].mxu0
  %418 = vdwg.mxu0
  %v419 = vadd.f32 %v371, %v414
  %v420 = vxor.u32 %v419, 2147483648
  %v421 = vmul.f32 %v420, 1.442695
  %v422 = vpow.pop %v421
  %v423 = vadd.f32 %v422, 1.0
  %v424 = vrcp.pop %v423
  %v425 = vmul.f32 1.0, %v424
  %v426 = vtanh.pop %v419
  %v427 = vmul.f32 %v425, %v357
  %429 = vrot.lane.b32.xlu0 %v426, 64
  %v430 = vpop.permute.xlu0 %429
  %v432 = vmul.f32 %v425, %v430
  %434 = vrot.lane.b32.xlu0 %v432, 32
  %v435 = vpop.permute.xlu0 %434
  %v437 = vadd.f32 %v427, %v435
  %v438 = vtanh.pop %v437
  %440 = vrot.lane.b32.xlu0 %v438, 64
  %v441 = vpop.permute.xlu0 %440
  %v443 = vmul.f32 %v425, %v441
  %445 = vrot.lane.b32.xlu0 %v443, 32
  %v446 = vpop.permute.xlu0 %445
  %s448 = scalar_lea.vmem %s11, 32
  %449 = vst.msk [vmem:[%s448] sm:$0xff] %vm56, %v446
  %s450 = scalar_lea.vmem %s0, 40
  %v451 = vld [vmem:[%s450] sm:$0xff]
  %v452 = vpack.c.bf16 %v443, %v443
  %454 = vrot.lane.b32.xlu0 %v452, 32
  %v455 = vpop.permute.xlu0 %454
  %v457 = vsel %vm56, %v455, 0
  %459 = vmatprep.subr.bf16.mxu0 0
  %460 = vmatpush1.bf16.msra.mxu0 %v52
  %461 = vmatprep.subr.bf16.mxu0 0
  %462 = vmatpush1.bf16.msra.mxu0 %v53
  %463 = vmatprep.subr.bf16.mxu0 0
  %464 = vmatpush1.bf16.msra.mxu0 0
  %465 = vmatprep.subr.bf16.mxu0 0
  %466 = vmatpush1.bf16.msra.mxu0 0
  %467 = vmatprep.subr.bf16.mxu0 0
  %468 = vmatpush1.bf16.msra.mxu0 0
  %469 = vmatprep.subr.bf16.mxu0 0
  %470 = vmatpush1.bf16.msra.mxu0 0
  %471 = vmatprep.subr.bf16.mxu0 0
  %472 = vmatpush1.bf16.msra.mxu0 0
  %473 = vmatprep.subr.bf16.mxu0 0
  %474 = vmatpush1.bf16.msra.mxu0 0
  %475 = vmatprep.subr.bf16.mxu0 0
  %476 = vmatpush1.bf16.msra.mxu0 0
  %477 = vmatprep.subr.bf16.mxu0 0
  %478 = vmatpush1.bf16.msra.mxu0 0
  %479 = vmatprep.subr.bf16.mxu0 0
  %480 = vmatpush1.bf16.msra.mxu0 0
  %481 = vmatprep.subr.bf16.mxu0 0
  %482 = vmatpush1.bf16.msra.mxu0 0
  %483 = vmatprep.subr.bf16.mxu0 0
  %484 = vmatpush1.bf16.msra.mxu0 0
  %485 = vmatprep.subr.bf16.mxu0 0
  %486 = vmatpush1.bf16.msra.mxu0 0
  %487 = vmatprep.subr.bf16.mxu0 0
  %488 = vmatpush1.bf16.msra.mxu0 0
  %489 = vmatprep.subr.bf16.mxu0 0
  %490 = vmatpush1.bf16.msra.mxu0 0
  %491 = vmatprep.mubr.bf16.mxu0 0
  %492 = vmatmul.mubr.bf16.gmra.mrb[0].mxu0 %v457
  %v493 = vpop.f32.mrb[0].mxu0
  %v494 = vadd.f32 0.0, %v493
  %v495 = vpop.f32.mrb[0].mxu0
  %v496 = vpop.f32.mrb[0].mxu0
  %v497 = vpop.f32.mrb[0].mxu0
  %498 = vdwg.mxu0
  %v499 = vadd.f32 %v451, %v494
  %v500 = vxor.u32 %v499, 2147483648
  %v501 = vmul.f32 %v500, 1.442695
  %v502 = vpow.pop %v501
  %v503 = vadd.f32 %v502, 1.0
  %v504 = vrcp.pop %v503
  %v505 = vmul.f32 1.0, %v504
  %v506 = vtanh.pop %v499
  %v507 = vmul.f32 %v505, %v437
  %509 = vrot.lane.b32.xlu0 %v506, 64
  %v510 = vpop.permute.xlu0 %509
  %v512 = vmul.f32 %v505, %v510
  %514 = vrot.lane.b32.xlu0 %v512, 32
  %v515 = vpop.permute.xlu0 %514
  %v517 = vadd.f32 %v507, %v515
  %v518 = vtanh.pop %v517
  %520 = vrot.lane.b32.xlu0 %v518, 64
  %v521 = vpop.permute.xlu0 %520
  %v523 = vmul.f32 %v505, %v521
  %525 = vrot.lane.b32.xlu0 %v523, 32
  %v526 = vpop.permute.xlu0 %525
  %s528 = scalar_lea.vmem %s11, 40
  %529 = vst.msk [vmem:[%s528] sm:$0xff] %vm56, %v526
  %s530 = scalar_lea.vmem %s0, 48
  %v531 = vld [vmem:[%s530] sm:$0xff]
  %v532 = vpack.c.bf16 %v523, %v523
  %534 = vrot.lane.b32.xlu0 %v532, 32
  %v535 = vpop.permute.xlu0 %534
  %v537 = vsel %vm56, %v535, 0
  %539 = vmatprep.subr.bf16.mxu0 0
  %540 = vmatpush1.bf16.msra.mxu0 %v52
  %541 = vmatprep.subr.bf16.mxu0 0
  %542 = vmatpush1.bf16.msra.mxu0 %v53
  %543 = vmatprep.subr.bf16.mxu0 0
  %544 = vmatpush1.bf16.msra.mxu0 0
  %545 = vmatprep.subr.bf16.mxu0 0
  %546 = vmatpush1.bf16.msra.mxu0 0
  %547 = vmatprep.subr.bf16.mxu0 0
  %548 = vmatpush1.bf16.msra.mxu0 0
  %549 = vmatprep.subr.bf16.mxu0 0
  %550 = vmatpush1.bf16.msra.mxu0 0
  %551 = vmatprep.subr.bf16.mxu0 0
  %552 = vmatpush1.bf16.msra.mxu0 0
  %553 = vmatprep.subr.bf16.mxu0 0
  %554 = vmatpush1.bf16.msra.mxu0 0
  %555 = vmatprep.subr.bf16.mxu0 0
  %556 = vmatpush1.bf16.msra.mxu0 0
  %557 = vmatprep.subr.bf16.mxu0 0
  %558 = vmatpush1.bf16.msra.mxu0 0
  %559 = vmatprep.subr.bf16.mxu0 0
  %560 = vmatpush1.bf16.msra.mxu0 0
  %561 = vmatprep.subr.bf16.mxu0 0
  %562 = vmatpush1.bf16.msra.mxu0 0
  %563 = vmatprep.subr.bf16.mxu0 0
  %564 = vmatpush1.bf16.msra.mxu0 0
  %565 = vmatprep.subr.bf16.mxu0 0
  %566 = vmatpush1.bf16.msra.mxu0 0
  %567 = vmatprep.subr.bf16.mxu0 0
  %568 = vmatpush1.bf16.msra.mxu0 0
  %569 = vmatprep.subr.bf16.mxu0 0
  %570 = vmatpush1.bf16.msra.mxu0 0
  %571 = vmatprep.mubr.bf16.mxu0 0
  %572 = vmatmul.mubr.bf16.gmra.mrb[0].mxu0 %v537
  %v573 = vpop.f32.mrb[0].mxu0
  %v574 = vadd.f32 0.0, %v573
  %v575 = vpop.f32.mrb[0].mxu0
  %v576 = vpop.f32.mrb[0].mxu0
  %v577 = vpop.f32.mrb[0].mxu0
  %578 = vdwg.mxu0
  %v579 = vadd.f32 %v531, %v574
  %v580 = vxor.u32 %v579, 2147483648
  %v581 = vmul.f32 %v580, 1.442695
  %v582 = vpow.pop %v581
  %v583 = vadd.f32 %v582, 1.0
  %v584 = vrcp.pop %v583
  %v585 = vmul.f32 1.0, %v584
  %v586 = vtanh.pop %v579
  %v587 = vmul.f32 %v585, %v517
  %589 = vrot.lane.b32.xlu0 %v586, 64
  %v590 = vpop.permute.xlu0 %589
  %v592 = vmul.f32 %v585, %v590
  %594 = vrot.lane.b32.xlu0 %v592, 32
  %v595 = vpop.permute.xlu0 %594
  %v597 = vadd.f32 %v587, %v595
  %v598 = vtanh.pop %v597
  %600 = vrot.lane.b32.xlu0 %v598, 64
  %v601 = vpop.permute.xlu0 %600
  %v603 = vmul.f32 %v585, %v601
  %605 = vrot.lane.b32.xlu0 %v603, 32
  %v606 = vpop.permute.xlu0 %605
  %s608 = scalar_lea.vmem %s11, 48
  %609 = vst.msk [vmem:[%s608] sm:$0xff] %vm56, %v606
  %s610 = scalar_lea.vmem %s0, 56
  %v611 = vld [vmem:[%s610] sm:$0xff]
  %v612 = vpack.c.bf16 %v603, %v603
  %614 = vrot.lane.b32.xlu0 %v612, 32
  %v615 = vpop.permute.xlu0 %614
  %v617 = vsel %vm56, %v615, 0
  %619 = vmatprep.subr.bf16.mxu0 0
  %620 = vmatpush1.bf16.msra.mxu0 %v52
  %621 = vmatprep.subr.bf16.mxu0 0
  %622 = vmatpush1.bf16.msra.mxu0 %v53
  %623 = vmatprep.subr.bf16.mxu0 0
  %624 = vmatpush1.bf16.msra.mxu0 0
  %625 = vmatprep.subr.bf16.mxu0 0
  %626 = vmatpush1.bf16.msra.mxu0 0
  %627 = vmatprep.subr.bf16.mxu0 0
  %628 = vmatpush1.bf16.msra.mxu0 0
  %629 = vmatprep.subr.bf16.mxu0 0
  %630 = vmatpush1.bf16.msra.mxu0 0
  %631 = vmatprep.subr.bf16.mxu0 0
  %632 = vmatpush1.bf16.msra.mxu0 0
  %633 = vmatprep.subr.bf16.mxu0 0
  %634 = vmatpush1.bf16.msra.mxu0 0
  %635 = vmatprep.subr.bf16.mxu0 0
  %636 = vmatpush1.bf16.msra.mxu0 0
  %637 = vmatprep.subr.bf16.mxu0 0
  %638 = vmatpush1.bf16.msra.mxu0 0
  %639 = vmatprep.subr.bf16.mxu0 0
  %640 = vmatpush1.bf16.msra.mxu0 0
  %641 = vmatprep.subr.bf16.mxu0 0
  %642 = vmatpush1.bf16.msra.mxu0 0
  %643 = vmatprep.subr.bf16.mxu0 0
  %644 = vmatpush1.bf16.msra.mxu0 0
  %645 = vmatprep.subr.bf16.mxu0 0
  %646 = vmatpush1.bf16.msra.mxu0 0
  %647 = vmatprep.subr.bf16.mxu0 0
  %648 = vmatpush1.bf16.msra.mxu0 0
  %649 = vmatprep.subr.bf16.mxu0 0
  %650 = vmatpush1.bf16.msra.mxu0 0
  %651 = vmatprep.mubr.bf16.mxu0 0
  %652 = vmatmul.mubr.bf16.gmra.mrb[0].mxu0 %v617
  %v653 = vpop.f32.mrb[0].mxu0
  %v654 = vadd.f32 0.0, %v653
  %v655 = vpop.f32.mrb[0].mxu0
  %v656 = vpop.f32.mrb[0].mxu0
  %v657 = vpop.f32.mrb[0].mxu0
  %658 = vdwg.mxu0
  %v659 = vadd.f32 %v611, %v654
  %v660 = vxor.u32 %v659, 2147483648
  %v661 = vmul.f32 %v660, 1.442695
  %v662 = vpow.pop %v661
  %v663 = vadd.f32 %v662, 1.0
  %v664 = vrcp.pop %v663
  %v665 = vmul.f32 1.0, %v664
  %v666 = vtanh.pop %v659
  %v667 = vmul.f32 %v665, %v597
  %669 = vrot.lane.b32.xlu0 %v666, 64
  %v670 = vpop.permute.xlu0 %669
  %v672 = vmul.f32 %v665, %v670
  %674 = vrot.lane.b32.xlu0 %v672, 32
  %v675 = vpop.permute.xlu0 %674
  %v677 = vadd.f32 %v667, %v675
  %v678 = vtanh.pop %v677
  %680 = vrot.lane.b32.xlu0 %v678, 64
  %v681 = vpop.permute.xlu0 %680
  %v683 = vmul.f32 %v665, %v681
  %685 = vrot.lane.b32.xlu0 %v683, 32
  %v686 = vpop.permute.xlu0 %685
  %s688 = scalar_lea.vmem %s11, 56
  %689 = vst.msk [vmem:[%s688] sm:$0xff] %vm56, %v686
  %v690 = vld [vmem:[%s11] sm:$0xff]
  %v691 = vld [vmem:[%s11 + $0x8] sm:$0xff]
  %v692 = vld [vmem:[%s11 + $0x10] sm:$0xff]
  %v693 = vld [vmem:[%s11 + $0x18] sm:$0xff]
  %v694 = vld [vmem:[%s11 + $0x20] sm:$0xff]
  %v695 = vld [vmem:[%s11 + $0x28] sm:$0xff]
  %v696 = vld [vmem:[%s11 + $0x30] sm:$0xff]
  %v697 = vld [vmem:[%s11 + $0x38] sm:$0xff]
  %v698 = vpack.c.bf16 %v691, %v690
  %v699 = vpack.c.bf16 %v693, %v692
  %v700 = vpack.c.bf16 %v695, %v694
  %v701 = vpack.c.bf16 %v697, %v696
  %v702 = vld [vmem:[%s1] sm:$0xf]
  %v703 = vld [vmem:[%s1 + $0x4] sm:$0xf]
  %v704 = vld [vmem:[%s1 + $0x8] sm:$0xf]
  %v705 = vld [vmem:[%s1 + $0xc] sm:$0xf]
  %v706 = vld [vmem:[%s4] sm:$0x1]
  %v708 = vlaneseq
  %v709 = vshrl.u32 %v708, 7
  %v710 = vsub.s32 0, %v709
  %v711 = vrot.slane %v706, %v710
  %v717 = vunpack.c.l.b16 %v702
  %v718 = vunpack.c.l.b16 %v703
  %v719 = vunpack.c.l.b16 %v704
  %v720 = vunpack.c.l.b16 %v705
  %v721 = vpack.c.b16 %v718, %v717
  %v722 = vpack.c.b16 %v720, %v719
  %v726 = vsel %vm56, %v698, 0
  %v729 = vsel %vm56, %v699, 0
  %v732 = vsel %vm56, %v700, 0
  %v735 = vsel %vm56, %v701, 0
  %737 = vmatprep.subr.bf16.mxu0 0
  %738 = vmatpush1.bf16.msra.mxu0 %v721
  %739 = vmatprep.subr.bf16.mxu0 0
  %740 = vmatpush1.bf16.msra.mxu0 %v722
  %741 = vmatprep.subr.bf16.mxu0 0
  %742 = vmatpush1.bf16.msra.mxu0 0
  %743 = vmatprep.subr.bf16.mxu0 0
  %744 = vmatpush1.bf16.msra.mxu0 0
  %745 = vmatprep.subr.bf16.mxu0 0
  %746 = vmatpush1.bf16.msra.mxu0 0
  %747 = vmatprep.subr.bf16.mxu0 0
  %748 = vmatpush1.bf16.msra.mxu0 0
  %749 = vmatprep.subr.bf16.mxu0 0
  %750 = vmatpush1.bf16.msra.mxu0 0
  %751 = vmatprep.subr.bf16.mxu0 0
  %752 = vmatpush1.bf16.msra.mxu0 0
  %753 = vmatprep.subr.bf16.mxu0 0
  %754 = vmatpush1.bf16.msra.mxu0 0
  %755 = vmatprep.subr.bf16.mxu0 0
  %756 = vmatpush1.bf16.msra.mxu0 0
  %757 = vmatprep.subr.bf16.mxu0 0
  %758 = vmatpush1.bf16.msra.mxu0 0
  %759 = vmatprep.subr.bf16.mxu0 0
  %760 = vmatpush1.bf16.msra.mxu0 0
  %761 = vmatprep.subr.bf16.mxu0 0
  %762 = vmatpush1.bf16.msra.mxu0 0
  %763 = vmatprep.subr.bf16.mxu0 0
  %764 = vmatpush1.bf16.msra.mxu0 0
  %765 = vmatprep.subr.bf16.mxu0 0
  %766 = vmatpush1.bf16.msra.mxu0 0
  %767 = vmatprep.subr.bf16.mxu0 0
  %768 = vmatpush1.bf16.msra.mxu0 0
  %769 = vmatprep.mubr.bf16.mxu0 0
  %770 = vmatmul.mubr.bf16.gmra.mrb[0].mxu0 %v726
  %v771 = vpop.f32.mrb[0].mxu0
  %v772 = vadd.f32 %v711, %v771
  %v773 = vpop.f32.mrb[0].mxu0
  %v774 = vpop.f32.mrb[0].mxu0
  %v775 = vadd.f32 %v711, %v774
  %v776 = vpop.f32.mrb[0].mxu0
  %777 = vmatprep.mubr.bf16.mxu0 0
  %778 = vmatmul.mubr.bf16.gmra.mrb[0].mxu0 %v729
  %v779 = vpop.f32.mrb[0].mxu0
  %v780 = vadd.f32 %v711, %v779
  %v781 = vpop.f32.mrb[0].mxu0
  %v782 = vpop.f32.mrb[0].mxu0
  %v783 = vadd.f32 %v711, %v782
  %v784 = vpop.f32.mrb[0].mxu0
  %785 = vmatprep.mubr.bf16.mxu0 0
  %786 = vmatmul.mubr.bf16.gmra.mrb[0].mxu0 %v732
  %v787 = vpop.f32.mrb[0].mxu0
  %v788 = vadd.f32 %v711, %v787
  %v789 = vpop.f32.mrb[0].mxu0
  %v790 = vpop.f32.mrb[0].mxu0
  %v791 = vadd.f32 %v711, %v790
  %v792 = vpop.f32.mrb[0].mxu0
  %793 = vmatprep.mubr.bf16.mxu0 0
  %794 = vmatmul.mubr.bf16.gmra.mrb[0].mxu0 %v735
  %v795 = vpop.f32.mrb[0].mxu0
  %v796 = vadd.f32 %v711, %v795
  %v797 = vpop.f32.mrb[0].mxu0
  %v798 = vpop.f32.mrb[0].mxu0
  %v799 = vadd.f32 %v711, %v798
  %v800 = vpop.f32.mrb[0].mxu0
  %801 = vdwg.mxu0
  %802 = vst [vmem:[#allocation2] sm:$0xff] %v772
  %803 = vst [vmem:[#allocation2 + $0x8] sm:$0xff] %v775
  %804 = vst [vmem:[#allocation2 + $0x10] sm:$0xff] %v780
  %805 = vst [vmem:[#allocation2 + $0x18] sm:$0xff] %v783
  %806 = vst [vmem:[#allocation2 + $0x20] sm:$0xff] %v788
  %807 = vst [vmem:[#allocation2 + $0x28] sm:$0xff] %v791
  %808 = vst [vmem:[#allocation2 + $0x30] sm:$0xff] %v796
  %809 = vst [vmem:[#allocation2 + $0x38] sm:$0xff] %v799
  %v810 = vld [vmem:[%s8] sm:$0xf]
  %v811 = vld [vmem:[%s8 + $0x4] sm:$0xf]
  %v812 = vld [vmem:[%s8 + $0x8] sm:$0xf]
  %v813 = vld [vmem:[%s8 + $0xc] sm:$0xf]
  %v814 = vld [vmem:[#allocation2] sm:$0xff]
  %v819 = vunpack.c.l.b16 %v810
  %v820 = vunpack.c.l.b16 %v811
  %v821 = vunpack.c.l.b16 %v812
  %v822 = vunpack.c.l.b16 %v813
  %v823 = vpack.c.b16 %v820, %v819
  %v824 = vpack.c.b16 %v822, %v821
  %827 = vmatprep.subr.bf16.mxu0 0
  %828 = vmatpush1.bf16.msra.mxu0 %v823
  %829 = vmatprep.subr.bf16.mxu0 0
  %830 = vmatpush1.bf16.msra.mxu0 %v824
  %831 = vmatprep.subr.bf16.mxu0 0
  %832 = vmatpush1.bf16.msra.mxu0 0
  %833 = vmatprep.subr.bf16.mxu0 0
  %834 = vmatpush1.bf16.msra.mxu0 0
  %835 = vmatprep.subr.bf16.mxu0 0
  %836 = vmatpush1.bf16.msra.mxu0 0
  %837 = vmatprep.subr.bf16.mxu0 0
  %838 = vmatpush1.bf16.msra.mxu0 0
  %839 = vmatprep.subr.bf16.mxu0 0
  %840 = vmatpush1.bf16.msra.mxu0 0
  %841 = vmatprep.subr.bf16.mxu0 0
  %842 = vmatpush1.bf16.msra.mxu0 0
  %843 = vmatprep.subr.bf16.mxu0 0
  %844 = vmatpush1.bf16.msra.mxu0 0
  %845 = vmatprep.subr.bf16.mxu0 0
  %846 = vmatpush1.bf16.msra.mxu0 0
  %847 = vmatprep.subr.bf16.mxu0 0
  %848 = vmatpush1.bf16.msra.mxu0 0
  %849 = vmatprep.subr.bf16.mxu0 0
  %850 = vmatpush1.bf16.msra.mxu0 0
  %851 = vmatprep.subr.bf16.mxu0 0
  %852 = vmatpush1.bf16.msra.mxu0 0
  %853 = vmatprep.subr.bf16.mxu0 0
  %854 = vmatpush1.bf16.msra.mxu0 0
  %855 = vmatprep.subr.bf16.mxu0 0
  %856 = vmatpush1.bf16.msra.mxu0 0
  %857 = vmatprep.subr.bf16.mxu0 0
  %858 = vmatpush1.bf16.msra.mxu0 0
  %859 = vmatprep.mubr.bf16.mxu0 0
  %860 = vmatmul.mubr.bf16.gmra.mrb[0].mxu0 %v58
  %v861 = vpop.f32.mrb[0].mxu0
  %v862 = vadd.f32 0.0, %v861
  %v863 = vpop.f32.mrb[0].mxu0
  %v864 = vpop.f32.mrb[0].mxu0
  %v865 = vpop.f32.mrb[0].mxu0
  %866 = vdwg.mxu0
  %v867 = vadd.f32 %v814, %v862
  %v868 = vxor.u32 %v867, 2147483648
  %v869 = vmul.f32 %v868, 1.442695
  %v870 = vpow.pop %v869
  %v871 = vadd.f32 %v870, 1.0
  %v872 = vrcp.pop %v871
  %v873 = vmul.f32 1.0, %v872
  %v874 = vtanh.pop %v867
  %v875 = vmul.f32 %v873, 0.0
  %877 = vrot.lane.b32.xlu0 %v874, 64
  %v878 = vpop.permute.xlu0 %877
  %v880 = vmul.f32 %v873, %v878
  %882 = vrot.lane.b32.xlu0 %v880, 32
  %v883 = vpop.permute.xlu0 %882
  %v885 = vadd.f32 %v875, %v883
  %v886 = vtanh.pop %v885
  %888 = vrot.lane.b32.xlu0 %v886, 64
  %v889 = vpop.permute.xlu0 %888
  %v891 = vmul.f32 %v873, %v889
  %893 = vrot.lane.b32.xlu0 %v891, 32
  %v894 = vpop.permute.xlu0 %893
  %896 = vst.msk [vmem:[%s11] sm:$0xff] %vm56, %v894
  %s897 = scalar_lea.vmem [#allocation2], 8
  %v898 = vld [vmem:[%s897] sm:$0xff]
  %v899 = vpack.c.bf16 %v891, %v891
  %901 = vrot.lane.b32.xlu0 %v899, 32
  %v902 = vpop.permute.xlu0 %901
  %v904 = vsel %vm56, %v902, 0
  %906 = vmatprep.subr.bf16.mxu0 0
  %907 = vmatpush1.bf16.msra.mxu0 %v823
  %908 = vmatprep.subr.bf16.mxu0 0
  %909 = vmatpush1.bf16.msra.mxu0 %v824
  %910 = vmatprep.subr.bf16.mxu0 0
  %911 = vmatpush1.bf16.msra.mxu0 0
  %912 = vmatprep.subr.bf16.mxu0 0
  %913 = vmatpush1.bf16.msra.mxu0 0
  %914 = vmatprep.subr.bf16.mxu0 0
  %915 = vmatpush1.bf16.msra.mxu0 0
  %916 = vmatprep.subr.bf16.mxu0 0
  %917 = vmatpush1.bf16.msra.mxu0 0
  %918 = vmatprep.subr.bf16.mxu0 0
  %919 = vmatpush1.bf16.msra.mxu0 0
  %920 = vmatprep.subr.bf16.mxu0 0
  %921 = vmatpush1.bf16.msra.mxu0 0
  %922 = vmatprep.subr.bf16.mxu0 0
  %923 = vmatpush1.bf16.msra.mxu0 0
  %924 = vmatprep.subr.bf16.mxu0 0
  %925 = vmatpush1.bf16.msra.mxu0 0
  %926 = vmatprep.subr.bf16.mxu0 0
  %927 = vmatpush1.bf16.msra.mxu0 0
  %928 = vmatprep.subr.bf16.mxu0 0
  %929 = vmatpush1.bf16.msra.mxu0 0
  %930 = vmatprep.subr.bf16.mxu0 0
  %931 = vmatpush1.bf16.msra.mxu0 0
  %932 = vmatprep.subr.bf16.mxu0 0
  %933 = vmatpush1.bf16.msra.mxu0 0
  %934 = vmatprep.subr.bf16.mxu0 0
  %935 = vmatpush1.bf16.msra.mxu0 0
  %936 = vmatprep.subr.bf16.mxu0 0
  %937 = vmatpush1.bf16.msra.mxu0 0
  %938 = vmatprep.mubr.bf16.mxu0 0
  %939 = vmatmul.mubr.bf16.gmra.mrb[0].mxu0 %v904
  %v940 = vpop.f32.mrb[0].mxu0
  %v941 = vadd.f32 0.0, %v940
  %v942 = vpop.f32.mrb[0].mxu0
  %v943 = vpop.f32.mrb[0].mxu0
  %v944 = vpop.f32.mrb[0].mxu0
  %945 = vdwg.mxu0
  %v946 = vadd.f32 %v898, %v941
  %v947 = vxor.u32 %v946, 2147483648
  %v948 = vmul.f32 %v947, 1.442695
  %v949 = vpow.pop %v948
  %v950 = vadd.f32 %v949, 1.0
  %v951 = vrcp.pop %v950
  %v952 = vmul.f32 1.0, %v951
  %v953 = vtanh.pop %v946
  %v954 = vmul.f32 %v952, %v885
  %956 = vrot.lane.b32.xlu0 %v953, 64
  %v957 = vpop.permute.xlu0 %956
  %v959 = vmul.f32 %v952, %v957
  %961 = vrot.lane.b32.xlu0 %v959, 32
  %v962 = vpop.permute.xlu0 %961
  %v964 = vadd.f32 %v954, %v962
  %v965 = vtanh.pop %v964
  %967 = vrot.lane.b32.xlu0 %v965, 64
  %v968 = vpop.permute.xlu0 %967
  %v970 = vmul.f32 %v952, %v968
  %972 = vrot.lane.b32.xlu0 %v970, 32
  %v973 = vpop.permute.xlu0 %972
  %975 = vst.msk [vmem:[%s208] sm:$0xff] %vm56, %v973
  %s976 = scalar_lea.vmem [#allocation2], 16
  %v977 = vld [vmem:[%s976] sm:$0xff]
  %v978 = vpack.c.bf16 %v970, %v970
  %980 = vrot.lane.b32.xlu0 %v978, 32
  %v981 = vpop.permute.xlu0 %980
  %v983 = vsel %vm56, %v981, 0
  %985 = vmatprep.subr.bf16.mxu0 0
  %986 = vmatpush1.bf16.msra.mxu0 %v823
  %987 = vmatprep.subr.bf16.mxu0 0
  %988 = vmatpush1.bf16.msra.mxu0 %v824
  %989 = vmatprep.subr.bf16.mxu0 0
  %990 = vmatpush1.bf16.msra.mxu0 0
  %991 = vmatprep.subr.bf16.mxu0 0
  %992 = vmatpush1.bf16.msra.mxu0 0
  %993 = vmatprep.subr.bf16.mxu0 0
  %994 = vmatpush1.bf16.msra.mxu0 0
  %995 = vmatprep.subr.bf16.mxu0 0
  %996 = vmatpush1.bf16.msra.mxu0 0
  %997 = vmatprep.subr.bf16.mxu0 0
  %998 = vmatpush1.bf16.msra.mxu0 0
  %999 = vmatprep.subr.bf16.mxu0 0
  %1000 = vmatpush1.bf16.msra.mxu0 0
  %1001 = vmatprep.subr.bf16.mxu0 0
  %1002 = vmatpush1.bf16.msra.mxu0 0
  %1003 = vmatprep.subr.bf16.mxu0 0
  %1004 = vmatpush1.bf16.msra.mxu0 0
  %1005 = vmatprep.subr.bf16.mxu0 0
  %1006 = vmatpush1.bf16.msra.mxu0 0
  %1007 = vmatprep.subr.bf16.mxu0 0
  %1008 = vmatpush1.bf16.msra.mxu0 0
  %1009 = vmatprep.subr.bf16.mxu0 0
  %1010 = vmatpush1.bf16.msra.mxu0 0
  %1011 = vmatprep.subr.bf16.mxu0 0
  %1012 = vmatpush1.bf16.msra.mxu0 0
  %1013 = vmatprep.subr.bf16.mxu0 0
  %1014 = vmatpush1.bf16.msra.mxu0 0
  %1015 = vmatprep.subr.bf16.mxu0 0
  %1016 = vmatpush1.bf16.msra.mxu0 0
  %1017 = vmatprep.mubr.bf16.mxu0 0
  %1018 = vmatmul.mubr.bf16.gmra.mrb[0].mxu0 %v983
  %v1019 = vpop.f32.mrb[0].mxu0
  %v1020 = vadd.f32 0.0, %v1019
  %v1021 = vpop.f32.mrb[0].mxu0
  %v1022 = vpop.f32.mrb[0].mxu0
  %v1023 = vpop.f32.mrb[0].mxu0
  %1024 = vdwg.mxu0
  %v1025 = vadd.f32 %v977, %v1020
  %v1026 = vxor.u32 %v1025, 2147483648
  %v1027 = vmul.f32 %v1026, 1.442695
  %v1028 = vpow.pop %v1027
  %v1029 = vadd.f32 %v1028, 1.0
  %v1030 = vrcp.pop %v1029
  %v1031 = vmul.f32 1.0, %v1030
  %v1032 = vtanh.pop %v1025
  %v1033 = vmul.f32 %v1031, %v964
  %1035 = vrot.lane.b32.xlu0 %v1032, 64
  %v1036 = vpop.permute.xlu0 %1035
  %v1038 = vmul.f32 %v1031, %v1036
  %1040 = vrot.lane.b32.xlu0 %v1038, 32
  %v1041 = vpop.permute.xlu0 %1040
  %v1043 = vadd.f32 %v1033, %v1041
  %v1044 = vtanh.pop %v1043
  %1046 = vrot.lane.b32.xlu0 %v1044, 64
  %v1047 = vpop.permute.xlu0 %1046
  %v1049 = vmul.f32 %v1031, %v1047
  %1051 = vrot.lane.b32.xlu0 %v1049, 32
  %v1052 = vpop.permute.xlu0 %1051
  %1054 = vst.msk [vmem:[%s288] sm:$0xff] %vm56, %v1052
  %s1055 = scalar_lea.vmem [#allocation2], 24
  %v1056 = vld [vmem:[%s1055] sm:$0xff]
  %v1057 = vpack.c.bf16 %v1049, %v1049
  %1059 = vrot.lane.b32.xlu0 %v1057, 32
  %v1060 = vpop.permute.xlu0 %1059
  %v1062 = vsel %vm56, %v1060, 0
  %1064 = vmatprep.subr.bf16.mxu0 0
  %1065 = vmatpush1.bf16.msra.mxu0 %v823
  %1066 = vmatprep.subr.bf16.mxu0 0
  %1067 = vmatpush1.bf16.msra.mxu0 %v824
  %1068 = vmatprep.subr.bf16.mxu0 0
  %1069 = vmatpush1.bf16.msra.mxu0 0
  %1070 = vmatprep.subr.bf16.mxu0 0
  %1071 = vmatpush1.bf16.msra.mxu0 0
  %1072 = vmatprep.subr.bf16.mxu0 0
  %1073 = vmatpush1.bf16.msra.mxu0 0
  %1074 = vmatprep.subr.bf16.mxu0 0
  %1075 = vmatpush1.bf16.msra.mxu0 0
  %1076 = vmatprep.subr.bf16.mxu0 0
  %1077 = vmatpush1.bf16.msra.mxu0 0
  %1078 = vmatprep.subr.bf16.mxu0 0
  %1079 = vmatpush1.bf16.msra.mxu0 0
  %1080 = vmatprep.subr.bf16.mxu0 0
  %1081 = vmatpush1.bf16.msra.mxu0 0
  %1082 = vmatprep.subr.bf16.mxu0 0
  %1083 = vmatpush1.bf16.msra.mxu0 0
  %1084 = vmatprep.subr.bf16.mxu0 0
  %1085 = vmatpush1.bf16.msra.mxu0 0
  %1086 = vmatprep.subr.bf16.mxu0 0
  %1087 = vmatpush1.bf16.msra.mxu0 0
  %1088 = vmatprep.subr.bf16.mxu0 0
  %1089 = vmatpush1.bf16.msra.mxu0 0
  %1090 = vmatprep.subr.bf16.mxu0 0
  %1091 = vmatpush1.bf16.msra.mxu0 0
  %1092 = vmatprep.subr.bf16.mxu0 0
  %1093 = vmatpush1.bf16.msra.mxu0 0
  %1094 = vmatprep.subr.bf16.mxu0 0
  %1095 = vmatpush1.bf16.msra.mxu0 0
  %1096 = vmatprep.mubr.bf16.mxu0 0
  %1097 = vmatmul.mubr.bf16.gmra.mrb[0].mxu0 %v1062
  %v1098 = vpop.f32.mrb[0].mxu0
  %v1099 = vadd.f32 0.0, %v1098
  %v1100 = vpop.f32.mrb[0].mxu0
  %v1101 = vpop.f32.mrb[0].mxu0
  %v1102 = vpop.f32.mrb[0].mxu0
  %1103 = vdwg.mxu0
  %v1104 = vadd.f32 %v1056, %v1099
  %v1105 = vxor.u32 %v1104, 2147483648
  %v1106 = vmul.f32 %v1105, 1.442695
  %v1107 = vpow.pop %v1106
  %v1108 = vadd.f32 %v1107, 1.0
  %v1109 = vrcp.pop %v1108
  %v1110 = vmul.f32 1.0, %v1109
  %v1111 = vtanh.pop %v1104
  %v1112 = vmul.f32 %v1110, %v1043
  %1114 = vrot.lane.b32.xlu0 %v1111, 64
  %v1115 = vpop.permute.xlu0 %1114
  %v1117 = vmul.f32 %v1110, %v1115
  %1119 = vrot.lane.b32.xlu0 %v1117, 32
  %v1120 = vpop.permute.xlu0 %1119
  %v1122 = vadd.f32 %v1112, %v1120
  %v1123 = vtanh.pop %v1122
  %1125 = vrot.lane.b32.xlu0 %v1123, 64
  %v1126 = vpop.permute.xlu0 %1125
  %v1128 = vmul.f32 %v1110, %v1126
  %1130 = vrot.lane.b32.xlu0 %v1128, 32
  %v1131 = vpop.permute.xlu0 %1130
  %1133 = vst.msk [vmem:[%s368] sm:$0xff] %vm56, %v1131
  %s1134 = scalar_lea.vmem [#allocation2], 32
  %v1135 = vld [vmem:[%s1134] sm:$0xff]
  %v1136 = vpack.c.bf16 %v1128, %v1128
  %1138 = vrot.lane.b32.xlu0 %v1136, 32
  %v1139 = vpop.permute.xlu0 %1138
  %v1141 = vsel %vm56, %v1139, 0
  %1143 = vmatprep.subr.bf16.mxu0 0
  %1144 = vmatpush1.bf16.msra.mxu0 %v823
  %1145 = vmatprep.subr.bf16.mxu0 0
  %1146 = vmatpush1.bf16.msra.mxu0 %v824
  %1147 = vmatprep.subr.bf16.mxu0 0
  %1148 = vmatpush1.bf16.msra.mxu0 0
  %1149 = vmatprep.subr.bf16.mxu0 0
  %1150 = vmatpush1.bf16.msra.mxu0 0
  %1151 = vmatprep.subr.bf16.mxu0 0
  %1152 = vmatpush1.bf16.msra.mxu0 0
  %1153 = vmatprep.subr.bf16.mxu0 0
  %1154 = vmatpush1.bf16.msra.mxu0 0
  %1155 = vmatprep.subr.bf16.mxu0 0
  %1156 = vmatpush1.bf16.msra.mxu0 0
  %1157 = vmatprep.subr.bf16.mxu0 0
  %1158 = vmatpush1.bf16.msra.mxu0 0
  %1159 = vmatprep.subr.bf16.mxu0 0
  %1160 = vmatpush1.bf16.msra.mxu0 0
  %1161 = vmatprep.subr.bf16.mxu0 0
  %1162 = vmatpush1.bf16.msra.mxu0 0
  %1163 = vmatprep.subr.bf16.mxu0 0
  %1164 = vmatpush1.bf16.msra.mxu0 0
  %1165 = vmatprep.subr.bf16.mxu0 0
  %1166 = vmatpush1.bf16.msra.mxu0 0
  %1167 = vmatprep.subr.bf16.mxu0 0
  %1168 = vmatpush1.bf16.msra.mxu0 0
  %1169 = vmatprep.subr.bf16.mxu0 0
  %1170 = vmatpush1.bf16.msra.mxu0 0
  %1171 = vmatprep.subr.bf16.mxu0 0
  %1172 = vmatpush1.bf16.msra.mxu0 0
  %1173 = vmatprep.subr.bf16.mxu0 0
  %1174 = vmatpush1.bf16.msra.mxu0 0
  %1175 = vmatprep.mubr.bf16.mxu0 0
  %1176 = vmatmul.mubr.bf16.gmra.mrb[0].mxu0 %v1141
  %v1177 = vpop.f32.mrb[0].mxu0
  %v1178 = vadd.f32 0.0, %v1177
  %v1179 = vpop.f32.mrb[0].mxu0
  %v1180 = vpop.f32.mrb[0].mxu0
  %v1181 = vpop.f32.mrb[0].mxu0
  %1182 = vdwg.mxu0
  %v1183 = vadd.f32 %v1135, %v1178
  %v1184 = vxor.u32 %v1183, 2147483648
  %v1185 = vmul.f32 %v1184, 1.442695
  %v1186 = vpow.pop %v1185
  %v1187 = vadd.f32 %v1186, 1.0
  %v1188 = vrcp.pop %v1187
  %v1189 = vmul.f32 1.0, %v1188
  %v1190 = vtanh.pop %v1183
  %v1191 = vmul.f32 %v1189, %v1122
  %1193 = vrot.lane.b32.xlu0 %v1190, 64
  %v1194 = vpop.permute.xlu0 %1193
  %v1196 = vmul.f32 %v1189, %v1194
  %1198 = vrot.lane.b32.xlu0 %v1196, 32
  %v1199 = vpop.permute.xlu0 %1198
  %v1201 = vadd.f32 %v1191, %v1199
  %v1202 = vtanh.pop %v1201
  %1204 = vrot.lane.b32.xlu0 %v1202, 64
  %v1205 = vpop.permute.xlu0 %1204
  %v1207 = vmul.f32 %v1189, %v1205
  %1209 = vrot.lane.b32.xlu0 %v1207, 32
  %v1210 = vpop.permute.xlu0 %1209
  %1212 = vst.msk [vmem:[%s448] sm:$0xff] %vm56, %v1210
  %s1213 = scalar_lea.vmem [#allocation2], 40
  %v1214 = vld [vmem:[%s1213] sm:$0xff]
  %v1215 = vpack.c.bf16 %v1207, %v1207
  %1217 = vrot.lane.b32.xlu0 %v1215, 32
  %v1218 = vpop.permute.xlu0 %1217
  %v1220 = vsel %vm56, %v1218, 0
  %1222 = vmatprep.subr.bf16.mxu0 0
  %1223 = vmatpush1.bf16.msra.mxu0 %v823
  %1224 = vmatprep.subr.bf16.mxu0 0
  %1225 = vmatpush1.bf16.msra.mxu0 %v824
  %1226 = vmatprep.subr.bf16.mxu0 0
  %1227 = vmatpush1.bf16.msra.mxu0 0
  %1228 = vmatprep.subr.bf16.mxu0 0
  %1229 = vmatpush1.bf16.msra.mxu0 0
  %1230 = vmatprep.subr.bf16.mxu0 0
  %1231 = vmatpush1.bf16.msra.mxu0 0
  %1232 = vmatprep.subr.bf16.mxu0 0
  %1233 = vmatpush1.bf16.msra.mxu0 0
  %1234 = vmatprep.subr.bf16.mxu0 0
  %1235 = vmatpush1.bf16.msra.mxu0 0
  %1236 = vmatprep.subr.bf16.mxu0 0
  %1237 = vmatpush1.bf16.msra.mxu0 0
  %1238 = vmatprep.subr.bf16.mxu0 0
  %1239 = vmatpush1.bf16.msra.mxu0 0
  %1240 = vmatprep.subr.bf16.mxu0 0
  %1241 = vmatpush1.bf16.msra.mxu0 0
  %1242 = vmatprep.subr.bf16.mxu0 0
  %1243 = vmatpush1.bf16.msra.mxu0 0
  %1244 = vmatprep.subr.bf16.mxu0 0
  %1245 = vmatpush1.bf16.msra.mxu0 0
  %1246 = vmatprep.subr.bf16.mxu0 0
  %1247 = vmatpush1.bf16.msra.mxu0 0
  %1248 = vmatprep.subr.bf16.mxu0 0
  %1249 = vmatpush1.bf16.msra.mxu0 0
  %1250 = vmatprep.subr.bf16.mxu0 0
  %1251 = vmatpush1.bf16.msra.mxu0 0
  %1252 = vmatprep.subr.bf16.mxu0 0
  %1253 = vmatpush1.bf16.msra.mxu0 0
  %1254 = vmatprep.mubr.bf16.mxu0 0
  %1255 = vmatmul.mubr.bf16.gmra.mrb[0].mxu0 %v1220
  %v1256 = vpop.f32.mrb[0].mxu0
  %v1257 = vadd.f32 0.0, %v1256
  %v1258 = vpop.f32.mrb[0].mxu0
  %v1259 = vpop.f32.mrb[0].mxu0
  %v1260 = vpop.f32.mrb[0].mxu0
  %1261 = vdwg.mxu0
  %v1262 = vadd.f32 %v1214, %v1257
  %v1263 = vxor.u32 %v1262, 2147483648
  %v1264 = vmul.f32 %v1263, 1.442695
  %v1265 = vpow.pop %v1264
  %v1266 = vadd.f32 %v1265, 1.0
  %v1267 = vrcp.pop %v1266
  %v1268 = vmul.f32 1.0, %v1267
  %v1269 = vtanh.pop %v1262
  %v1270 = vmul.f32 %v1268, %v1201
  %1272 = vrot.lane.b32.xlu0 %v1269, 64
  %v1273 = vpop.permute.xlu0 %1272
  %v1275 = vmul.f32 %v1268, %v1273
  %1277 = vrot.lane.b32.xlu0 %v1275, 32
  %v1278 = vpop.permute.xlu0 %1277
  %v1280 = vadd.f32 %v1270, %v1278
  %v1281 = vtanh.pop %v1280
  %1283 = vrot.lane.b32.xlu0 %v1281, 64
  %v1284 = vpop.permute.xlu0 %1283
  %v1286 = vmul.f32 %v1268, %v1284
  %1288 = vrot.lane.b32.xlu0 %v1286, 32
  %v1289 = vpop.permute.xlu0 %1288
  %1291 = vst.msk [vmem:[%s528] sm:$0xff] %vm56, %v1289
  %s1292 = scalar_lea.vmem [#allocation2], 48
  %v1293 = vld [vmem:[%s1292] sm:$0xff]
  %v1294 = vpack.c.bf16 %v1286, %v1286
  %1296 = vrot.lane.b32.xlu0 %v1294, 32
  %v1297 = vpop.permute.xlu0 %1296
  %v1299 = vsel %vm56, %v1297, 0
  %1301 = vmatprep.subr.bf16.mxu0 0
  %1302 = vmatpush1.bf16.msra.mxu0 %v823
  %1303 = vmatprep.subr.bf16.mxu0 0
  %1304 = vmatpush1.bf16.msra.mxu0 %v824
  %1305 = vmatprep.subr.bf16.mxu0 0
  %1306 = vmatpush1.bf16.msra.mxu0 0
  %1307 = vmatprep.subr.bf16.mxu0 0
  %1308 = vmatpush1.bf16.msra.mxu0 0
  %1309 = vmatprep.subr.bf16.mxu0 0
  %1310 = vmatpush1.bf16.msra.mxu0 0
  %1311 = vmatprep.subr.bf16.mxu0 0
  %1312 = vmatpush1.bf16.msra.mxu0 0
  %1313 = vmatprep.subr.bf16.mxu0 0
  %1314 = vmatpush1.bf16.msra.mxu0 0
  %1315 = vmatprep.subr.bf16.mxu0 0
  %1316 = vmatpush1.bf16.msra.mxu0 0
  %1317 = vmatprep.subr.bf16.mxu0 0
  %1318 = vmatpush1.bf16.msra.mxu0 0
  %1319 = vmatprep.subr.bf16.mxu0 0
  %1320 = vmatpush1.bf16.msra.mxu0 0
  %1321 = vmatprep.subr.bf16.mxu0 0
  %1322 = vmatpush1.bf16.msra.mxu0 0
  %1323 = vmatprep.subr.bf16.mxu0 0
  %1324 = vmatpush1.bf16.msra.mxu0 0
  %1325 = vmatprep.subr.bf16.mxu0 0
  %1326 = vmatpush1.bf16.msra.mxu0 0
  %1327 = vmatprep.subr.bf16.mxu0 0
  %1328 = vmatpush1.bf16.msra.mxu0 0
  %1329 = vmatprep.subr.bf16.mxu0 0
  %1330 = vmatpush1.bf16.msra.mxu0 0
  %1331 = vmatprep.subr.bf16.mxu0 0
  %1332 = vmatpush1.bf16.msra.mxu0 0
  %1333 = vmatprep.mubr.bf16.mxu0 0
  %1334 = vmatmul.mubr.bf16.gmra.mrb[0].mxu0 %v1299
  %v1335 = vpop.f32.mrb[0].mxu0
  %v1336 = vadd.f32 0.0, %v1335
  %v1337 = vpop.f32.mrb[0].mxu0
  %v1338 = vpop.f32.mrb[0].mxu0
  %v1339 = vpop.f32.mrb[0].mxu0
  %1340 = vdwg.mxu0
  %v1341 = vadd.f32 %v1293, %v1336
  %v1342 = vxor.u32 %v1341, 2147483648
  %v1343 = vmul.f32 %v1342, 1.442695
  %v1344 = vpow.pop %v1343
  %v1345 = vadd.f32 %v1344, 1.0
  %v1346 = vrcp.pop %v1345
  %v1347 = vmul.f32 1.0, %v1346
  %v1348 = vtanh.pop %v1341
  %v1349 = vmul.f32 %v1347, %v1280
  %1351 = vrot.lane.b32.xlu0 %v1348, 64
  %v1352 = vpop.permute.xlu0 %1351
  %v1354 = vmul.f32 %v1347, %v1352
  %1356 = vrot.lane.b32.xlu0 %v1354, 32
  %v1357 = vpop.permute.xlu0 %1356
  %v1359 = vadd.f32 %v1349, %v1357
  %v1360 = vtanh.pop %v1359
  %1362 = vrot.lane.b32.xlu0 %v1360, 64
  %v1363 = vpop.permute.xlu0 %1362
  %v1365 = vmul.f32 %v1347, %v1363
  %1367 = vrot.lane.b32.xlu0 %v1365, 32
  %v1368 = vpop.permute.xlu0 %1367
  %1370 = vst.msk [vmem:[%s608] sm:$0xff] %vm56, %v1368
  %s1371 = scalar_lea.vmem [#allocation2], 56
  %v1372 = vld [vmem:[%s1371] sm:$0xff]
  %v1373 = vpack.c.bf16 %v1365, %v1365
  %1375 = vrot.lane.b32.xlu0 %v1373, 32
  %v1376 = vpop.permute.xlu0 %1375
  %v1378 = vsel %vm56, %v1376, 0
  %1380 = vmatprep.subr.bf16.mxu0 0
  %1381 = vmatpush1.bf16.msra.mxu0 %v823
  %1382 = vmatprep.subr.bf16.mxu0 0
  %1383 = vmatpush1.bf16.msra.mxu0 %v824
  %1384 = vmatprep.subr.bf16.mxu0 0
  %1385 = vmatpush1.bf16.msra.mxu0 0
  %1386 = vmatprep.subr.bf16.mxu0 0
  %1387 = vmatpush1.bf16.msra.mxu0 0
  %1388 = vmatprep.subr.bf16.mxu0 0
  %1389 = vmatpush1.bf16.msra.mxu0 0
  %1390 = vmatprep.subr.bf16.mxu0 0
  %1391 = vmatpush1.bf16.msra.mxu0 0
  %1392 = vmatprep.subr.bf16.mxu0 0
  %1393 = vmatpush1.bf16.msra.mxu0 0
  %1394 = vmatprep.subr.bf16.mxu0 0
  %1395 = vmatpush1.bf16.msra.mxu0 0
  %1396 = vmatprep.subr.bf16.mxu0 0
  %1397 = vmatpush1.bf16.msra.mxu0 0
  %1398 = vmatprep.subr.bf16.mxu0 0
  %1399 = vmatpush1.bf16.msra.mxu0 0
  %1400 = vmatprep.subr.bf16.mxu0 0
  %1401 = vmatpush1.bf16.msra.mxu0 0
  %1402 = vmatprep.subr.bf16.mxu0 0
  %1403 = vmatpush1.bf16.msra.mxu0 0
  %1404 = vmatprep.subr.bf16.mxu0 0
  %1405 = vmatpush1.bf16.msra.mxu0 0
  %1406 = vmatprep.subr.bf16.mxu0 0
  %1407 = vmatpush1.bf16.msra.mxu0 0
  %1408 = vmatprep.subr.bf16.mxu0 0
  %1409 = vmatpush1.bf16.msra.mxu0 0
  %1410 = vmatprep.subr.bf16.mxu0 0
  %1411 = vmatpush1.bf16.msra.mxu0 0
  %1412 = vmatprep.mubr.bf16.mxu0 0
  %1413 = vmatmul.mubr.bf16.gmra.mrb[0].mxu0 %v1378
  %v1414 = vpop.f32.mrb[0].mxu0
  %v1415 = vadd.f32 0.0, %v1414
  %v1416 = vpop.f32.mrb[0].mxu0
  %v1417 = vpop.f32.mrb[0].mxu0
  %v1418 = vpop.f32.mrb[0].mxu0
  %1419 = vdwg.mxu0
  %v1420 = vadd.f32 %v1372, %v1415
  %v1421 = vxor.u32 %v1420, 2147483648
  %v1422 = vmul.f32 %v1421, 1.442695
  %v1423 = vpow.pop %v1422
  %v1424 = vadd.f32 %v1423, 1.0
  %v1425 = vrcp.pop %v1424
  %v1426 = vmul.f32 1.0, %v1425
  %v1427 = vtanh.pop %v1420
  %v1428 = vmul.f32 %v1426, %v1359
  %1430 = vrot.lane.b32.xlu0 %v1427, 64
  %v1431 = vpop.permute.xlu0 %1430
  %v1433 = vmul.f32 %v1426, %v1431
  %1435 = vrot.lane.b32.xlu0 %v1433, 32
  %v1436 = vpop.permute.xlu0 %1435
  %v1438 = vadd.f32 %v1428, %v1436
  %v1439 = vtanh.pop %v1438
  %1441 = vrot.lane.b32.xlu0 %v1439, 64
  %v1442 = vpop.permute.xlu0 %1441
  %v1444 = vmul.f32 %v1426, %v1442
  %1446 = vrot.lane.b32.xlu0 %v1444, 32
  %v1447 = vpop.permute.xlu0 %1446
  %1449 = vst.msk [vmem:[%s688] sm:$0xff] %vm56, %v1447
  %v1450 = vld [vmem:[%s11] sm:$0xff]
  %v1451 = vld [vmem:[%s11 + $0x8] sm:$0xff]
  %v1452 = vld [vmem:[%s11 + $0x10] sm:$0xff]
  %v1453 = vld [vmem:[%s11 + $0x18] sm:$0xff]
  %v1454 = vld [vmem:[%s11 + $0x20] sm:$0xff]
  %v1455 = vld [vmem:[%s11 + $0x28] sm:$0xff]
  %v1456 = vld [vmem:[%s11 + $0x30] sm:$0xff]
  %v1457 = vld [vmem:[%s11 + $0x38] sm:$0xff]
  %v1458 = vpack.c.bf16 %v1451, %v1450
  %v1459 = vpack.c.bf16 %v1453, %v1452
  %v1460 = vpack.c.bf16 %v1455, %v1454
  %v1461 = vpack.c.bf16 %v1457, %v1456
  %v1462 = vld [vmem:[%s2] sm:$0xf]
  %v1463 = vld [vmem:[%s2 + $0x4] sm:$0xf]
  %v1464 = vld [vmem:[%s2 + $0x8] sm:$0xf]
  %v1465 = vld [vmem:[%s2 + $0xc] sm:$0xf]
  %v1466 = vld [vmem:[%s5] sm:$0x1]
  %v1468 = vlaneseq
  %v1469 = vshrl.u32 %v1468, 7
  %v1470 = vsub.s32 0, %v1469
  %v1471 = vrot.slane %v1466, %v1470
  %v1477 = vunpack.c.l.b16 %v1462
  %v1478 = vunpack.c.l.b16 %v1463
  %v1479 = vunpack.c.l.b16 %v1464
  %v1480 = vunpack.c.l.b16 %v1465
  %v1481 = vpack.c.b16 %v1478, %v1477
  %v1482 = vpack.c.b16 %v1480, %v1479
  %v1486 = vsel %vm56, %v1458, 0
  %v1489 = vsel %vm56, %v1459, 0
  %v1492 = vsel %vm56, %v1460, 0
  %v1495 = vsel %vm56, %v1461, 0
  %1497 = vmatprep.subr.bf16.mxu0 0
  %1498 = vmatpush1.bf16.msra.mxu0 %v1481
  %1499 = vmatprep.subr.bf16.mxu0 0
  %1500 = vmatpush1.bf16.msra.mxu0 %v1482
  %1501 = vmatprep.subr.bf16.mxu0 0
  %1502 = vmatpush1.bf16.msra.mxu0 0
  %1503 = vmatprep.subr.bf16.mxu0 0
  %1504 = vmatpush1.bf16.msra.mxu0 0
  %1505 = vmatprep.subr.bf16.mxu0 0
  %1506 = vmatpush1.bf16.msra.mxu0 0
  %1507 = vmatprep.subr.bf16.mxu0 0
  %1508 = vmatpush1.bf16.msra.mxu0 0
  %1509 = vmatprep.subr.bf16.mxu0 0
  %1510 = vmatpush1.bf16.msra.mxu0 0
  %1511 = vmatprep.subr.bf16.mxu0 0
  %1512 = vmatpush1.bf16.msra.mxu0 0
  %1513 = vmatprep.subr.bf16.mxu0 0
  %1514 = vmatpush1.bf16.msra.mxu0 0
  %1515 = vmatprep.subr.bf16.mxu0 0
  %1516 = vmatpush1.bf16.msra.mxu0 0
  %1517 = vmatprep.subr.bf16.mxu0 0
  %1518 = vmatpush1.bf16.msra.mxu0 0
  %1519 = vmatprep.subr.bf16.mxu0 0
  %1520 = vmatpush1.bf16.msra.mxu0 0
  %1521 = vmatprep.subr.bf16.mxu0 0
  %1522 = vmatpush1.bf16.msra.mxu0 0
  %1523 = vmatprep.subr.bf16.mxu0 0
  %1524 = vmatpush1.bf16.msra.mxu0 0
  %1525 = vmatprep.subr.bf16.mxu0 0
  %1526 = vmatpush1.bf16.msra.mxu0 0
  %1527 = vmatprep.subr.bf16.mxu0 0
  %1528 = vmatpush1.bf16.msra.mxu0 0
  %1529 = vmatprep.mubr.bf16.mxu0 0
  %1530 = vmatmul.mubr.bf16.gmra.mrb[0].mxu0 %v1486
  %v1531 = vpop.f32.mrb[0].mxu0
  %v1532 = vadd.f32 %v1471, %v1531
  %v1533 = vpop.f32.mrb[0].mxu0
  %v1534 = vpop.f32.mrb[0].mxu0
  %v1535 = vadd.f32 %v1471, %v1534
  %v1536 = vpop.f32.mrb[0].mxu0
  %1537 = vmatprep.mubr.bf16.mxu0 0
  %1538 = vmatmul.mubr.bf16.gmra.mrb[0].mxu0 %v1489
  %v1539 = vpop.f32.mrb[0].mxu0
  %v1540 = vadd.f32 %v1471, %v1539
  %v1541 = vpop.f32.mrb[0].mxu0
  %v1542 = vpop.f32.mrb[0].mxu0
  %v1543 = vadd.f32 %v1471, %v1542
  %v1544 = vpop.f32.mrb[0].mxu0
  %1545 = vmatprep.mubr.bf16.mxu0 0
  %1546 = vmatmul.mubr.bf16.gmra.mrb[0].mxu0 %v1492
  %v1547 = vpop.f32.mrb[0].mxu0
  %v1548 = vadd.f32 %v1471, %v1547
  %v1549 = vpop.f32.mrb[0].mxu0
  %v1550 = vpop.f32.mrb[0].mxu0
  %v1551 = vadd.f32 %v1471, %v1550
  %v1552 = vpop.f32.mrb[0].mxu0
  %1553 = vmatprep.mubr.bf16.mxu0 0
  %1554 = vmatmul.mubr.bf16.gmra.mrb[0].mxu0 %v1495
  %v1555 = vpop.f32.mrb[0].mxu0
  %v1556 = vadd.f32 %v1471, %v1555
  %v1557 = vpop.f32.mrb[0].mxu0
  %v1558 = vpop.f32.mrb[0].mxu0
  %v1559 = vadd.f32 %v1471, %v1558
  %v1560 = vpop.f32.mrb[0].mxu0
  %1561 = vdwg.mxu0
  %vm1562 = vcmask 523264
  %1563 = vst.msk [vmem:[#allocation2] sm:$0xff] %vm1562, %v1532
  %1564 = vst.msk [vmem:[#allocation2 + $0x8] sm:$0xff] %vm1562, %v1535
  %1565 = vst.msk [vmem:[#allocation2 + $0x10] sm:$0xff] %vm1562, %v1540
  %1566 = vst.msk [vmem:[#allocation2 + $0x18] sm:$0xff] %vm1562, %v1543
  %1567 = vst.msk [vmem:[#allocation2 + $0x20] sm:$0xff] %vm1562, %v1548
  %1568 = vst.msk [vmem:[#allocation2 + $0x28] sm:$0xff] %vm1562, %v1551
  %1569 = vst.msk [vmem:[#allocation2 + $0x30] sm:$0xff] %vm1562, %v1556
  %1570 = vst.msk [vmem:[#allocation2 + $0x38] sm:$0xff] %vm1562, %v1559
  %v1571 = vld [vmem:[%s9] sm:$0xf]
  %v1572 = vld [vmem:[%s9 + $0x4] sm:$0xf]
  %v1573 = vld [vmem:[#allocation2] sm:$0xff]
  %v1576 = vunpack.c.l.b16 %v1571
  %v1577 = vunpack.c.l.b16 %v1572
  %v1578 = vpack.c.b16 %v1577, %v1576
  %vm1580 = vcmask 130048
  %v1581 = vsel %vm1580, 0, 0
  %1583 = vmatprep.subr.bf16.mxu0 0
  %1584 = vmatpush1.bf16.msra.mxu0 %v1578
  %1585 = vmatprep.subr.bf16.mxu0 0
  %1586 = vmatpush1.bf16.msra.mxu0 0
  %1587 = vmatprep.subr.bf16.mxu0 0
  %1588 = vmatpush1.bf16.msra.mxu0 0
  %1589 = vmatprep.subr.bf16.mxu0 0
  %1590 = vmatpush1.bf16.msra.mxu0 0
  %1591 = vmatprep.subr.bf16.mxu0 0
  %1592 = vmatpush1.bf16.msra.mxu0 0
  %1593 = vmatprep.subr.bf16.mxu0 0
  %1594 = vmatpush1.bf16.msra.mxu0 0
  %1595 = vmatprep.subr.bf16.mxu0 0
  %1596 = vmatpush1.bf16.msra.mxu0 0
  %1597 = vmatprep.subr.bf16.mxu0 0
  %1598 = vmatpush1.bf16.msra.mxu0 0
  %1599 = vmatprep.subr.bf16.mxu0 0
  %1600 = vmatpush1.bf16.msra.mxu0 0
  %1601 = vmatprep.subr.bf16.mxu0 0
  %1602 = vmatpush1.bf16.msra.mxu0 0
  %1603 = vmatprep.subr.bf16.mxu0 0
  %1604 = vmatpush1.bf16.msra.mxu0 0
  %1605 = vmatprep.subr.bf16.mxu0 0
  %1606 = vmatpush1.bf16.msra.mxu0 0
  %1607 = vmatprep.subr.bf16.mxu0 0
  %1608 = vmatpush1.bf16.msra.mxu0 0
  %1609 = vmatprep.subr.bf16.mxu0 0
  %1610 = vmatpush1.bf16.msra.mxu0 0
  %1611 = vmatprep.subr.bf16.mxu0 0
  %1612 = vmatpush1.bf16.msra.mxu0 0
  %1613 = vmatprep.subr.bf16.mxu0 0
  %1614 = vmatpush1.bf16.msra.mxu0 0
  %1615 = vmatprep.mubr.bf16.mxu0 0
  %1616 = vmatmul.mubr.bf16.gmra.mrb[0].mxu0 %v1581
  %v1617 = vpop.f32.mrb[0].mxu0
  %v1618 = vadd.f32 0.0, %v1617
  %v1619 = vpop.f32.mrb[0].mxu0
  %v1620 = vpop.f32.mrb[0].mxu0
  %v1621 = vpop.f32.mrb[0].mxu0
  %1622 = vdwg.mxu0
  %v1623 = vadd.f32 %v1573, %v1618
  %v1624 = vxor.u32 %v1623, 2147483648
  %v1625 = vmul.f32 %v1624, 1.442695
  %v1626 = vpow.pop %v1625
  %v1627 = vadd.f32 %v1626, 1.0
  %v1628 = vrcp.pop %v1627
  %v1629 = vmul.f32 1.0, %v1628
  %v1630 = vtanh.pop %v1623
  %v1631 = vmul.f32 %v1629, 0.0
  %1633 = vrot.lane.b32.xlu0 %v1630, 96
  %v1634 = vpop.permute.xlu0 %1633
  %v1636 = vmul.f32 %v1629, %v1634
  %1638 = vrot.lane.b32.xlu0 %v1636, 16
  %v1639 = vpop.permute.xlu0 %1638
  %v1641 = vadd.f32 %v1631, %v1639
  %v1642 = vtanh.pop %v1641
  %1644 = vrot.lane.b32.xlu0 %v1642, 32
  %v1645 = vpop.permute.xlu0 %1644
  %v1647 = vmul.f32 %v1629, %v1645
  %1649 = vrot.lane.b32.xlu0 %v1647, 80
  %v1650 = vpop.permute.xlu0 %1649
  %1652 = vst.msk [vmem:[%s11] sm:$0xff] %vm1580, %v1650
  %v1653 = vld [vmem:[%s897] sm:$0xff]
  %v1654 = vpack.c.bf16 %v1647, %v1647
  %1656 = vrot.lane.b32.xlu0 %v1654, 80
  %v1657 = vpop.permute.xlu0 %1656
  %v1659 = vsel %vm1580, %v1657, 0
  %1661 = vmatprep.subr.bf16.mxu0 0
  %1662 = vmatpush1.bf16.msra.mxu0 %v1578
  %1663 = vmatprep.subr.bf16.mxu0 0
  %1664 = vmatpush1.bf16.msra.mxu0 0
  %1665 = vmatprep.subr.bf16.mxu0 0
  %1666 = vmatpush1.bf16.msra.mxu0 0
  %1667 = vmatprep.subr.bf16.mxu0 0
  %1668 = vmatpush1.bf16.msra.mxu0 0
  %1669 = vmatprep.subr.bf16.mxu0 0
  %1670 = vmatpush1.bf16.msra.mxu0 0
  %1671 = vmatprep.subr.bf16.mxu0 0
  %1672 = vmatpush1.bf16.msra.mxu0 0
  %1673 = vmatprep.subr.bf16.mxu0 0
  %1674 = vmatpush1.bf16.msra.mxu0 0
  %1675 = vmatprep.subr.bf16.mxu0 0
  %1676 = vmatpush1.bf16.msra.mxu0 0
  %1677 = vmatprep.subr.bf16.mxu0 0
  %1678 = vmatpush1.bf16.msra.mxu0 0
  %1679 = vmatprep.subr.bf16.mxu0 0
  %1680 = vmatpush1.bf16.msra.mxu0 0
  %1681 = vmatprep.subr.bf16.mxu0 0
  %1682 = vmatpush1.bf16.msra.mxu0 0
  %1683 = vmatprep.subr.bf16.mxu0 0
  %1684 = vmatpush1.bf16.msra.mxu0 0
  %1685 = vmatprep.subr.bf16.mxu0 0
  %1686 = vmatpush1.bf16.msra.mxu0 0
  %1687 = vmatprep.subr.bf16.mxu0 0
  %1688 = vmatpush1.bf16.msra.mxu0 0
  %1689 = vmatprep.subr.bf16.mxu0 0
  %1690 = vmatpush1.bf16.msra.mxu0 0
  %1691 = vmatprep.subr.bf16.mxu0 0
  %1692 = vmatpush1.bf16.msra.mxu0 0
  %1693 = vmatprep.mubr.bf16.mxu0 0
  %1694 = vmatmul.mubr.bf16.gmra.mrb[0].mxu0 %v1659
  %v1695 = vpop.f32.mrb[0].mxu0
  %v1696 = vadd.f32 0.0, %v1695
  %v1697 = vpop.f32.mrb[0].mxu0
  %v1698 = vpop.f32.mrb[0].mxu0
  %v1699 = vpop.f32.mrb[0].mxu0
  %1700 = vdwg.mxu0
  %v1701 = vadd.f32 %v1653, %v1696
  %v1702 = vxor.u32 %v1701, 2147483648
  %v1703 = vmul.f32 %v1702, 1.442695
  %v1704 = vpow.pop %v1703
  %v1705 = vadd.f32 %v1704, 1.0
  %v1706 = vrcp.pop %v1705
  %v1707 = vmul.f32 1.0, %v1706
  %v1708 = vtanh.pop %v1701
  %v1709 = vmul.f32 %v1707, %v1641
  %1711 = vrot.lane.b32.xlu0 %v1708, 96
  %v1712 = vpop.permute.xlu0 %1711
  %v1714 = vmul.f32 %v1707, %v1712
  %1716 = vrot.lane.b32.xlu0 %v1714, 16
  %v1717 = vpop.permute.xlu0 %1716
  %v1719 = vadd.f32 %v1709, %v1717
  %v1720 = vtanh.pop %v1719
  %1722 = vrot.lane.b32.xlu0 %v1720, 32
  %v1723 = vpop.permute.xlu0 %1722
  %v1725 = vmul.f32 %v1707, %v1723
  %1727 = vrot.lane.b32.xlu0 %v1725, 80
  %v1728 = vpop.permute.xlu0 %1727
  %1730 = vst.msk [vmem:[%s208] sm:$0xff] %vm1580, %v1728
  %v1731 = vld [vmem:[%s976] sm:$0xff]
  %v1732 = vpack.c.bf16 %v1725, %v1725
  %1734 = vrot.lane.b32.xlu0 %v1732, 80
  %v1735 = vpop.permute.xlu0 %1734
  %v1737 = vsel %vm1580, %v1735, 0
  %1739 = vmatprep.subr.bf16.mxu0 0
  %1740 = vmatpush1.bf16.msra.mxu0 %v1578
  %1741 = vmatprep.subr.bf16.mxu0 0
  %1742 = vmatpush1.bf16.msra.mxu0 0
  %1743 = vmatprep.subr.bf16.mxu0 0
  %1744 = vmatpush1.bf16.msra.mxu0 0
  %1745 = vmatprep.subr.bf16.mxu0 0
  %1746 = vmatpush1.bf16.msra.mxu0 0
  %1747 = vmatprep.subr.bf16.mxu0 0
  %1748 = vmatpush1.bf16.msra.mxu0 0
  %1749 = vmatprep.subr.bf16.mxu0 0
  %1750 = vmatpush1.bf16.msra.mxu0 0
  %1751 = vmatprep.subr.bf16.mxu0 0
  %1752 = vmatpush1.bf16.msra.mxu0 0
  %1753 = vmatprep.subr.bf16.mxu0 0
  %1754 = vmatpush1.bf16.msra.mxu0 0
  %1755 = vmatprep.subr.bf16.mxu0 0
  %1756 = vmatpush1.bf16.msra.mxu0 0
  %1757 = vmatprep.subr.bf16.mxu0 0
  %1758 = vmatpush1.bf16.msra.mxu0 0
  %1759 = vmatprep.subr.bf16.mxu0 0
  %1760 = vmatpush1.bf16.msra.mxu0 0
  %1761 = vmatprep.subr.bf16.mxu0 0
  %1762 = vmatpush1.bf16.msra.mxu0 0
  %1763 = vmatprep.subr.bf16.mxu0 0
  %1764 = vmatpush1.bf16.msra.mxu0 0
  %1765 = vmatprep.subr.bf16.mxu0 0
  %1766 = vmatpush1.bf16.msra.mxu0 0
  %1767 = vmatprep.subr.bf16.mxu0 0
  %1768 = vmatpush1.bf16.msra.mxu0 0
  %1769 = vmatprep.subr.bf16.mxu0 0
  %1770 = vmatpush1.bf16.msra.mxu0 0
  %1771 = vmatprep.mubr.bf16.mxu0 0
  %1772 = vmatmul.mubr.bf16.gmra.mrb[0].mxu0 %v1737
  %v1773 = vpop.f32.mrb[0].mxu0
  %v1774 = vadd.f32 0.0, %v1773
  %v1775 = vpop.f32.mrb[0].mxu0
  %v1776 = vpop.f32.mrb[0].mxu0
  %v1777 = vpop.f32.mrb[0].mxu0
  %1778 = vdwg.mxu0
  %v1779 = vadd.f32 %v1731, %v1774
  %v1780 = vxor.u32 %v1779, 2147483648
  %v1781 = vmul.f32 %v1780, 1.442695
  %v1782 = vpow.pop %v1781
  %v1783 = vadd.f32 %v1782, 1.0
  %v1784 = vrcp.pop %v1783
  %v1785 = vmul.f32 1.0, %v1784
  %v1786 = vtanh.pop %v1779
  %v1787 = vmul.f32 %v1785, %v1719
  %1789 = vrot.lane.b32.xlu0 %v1786, 96
  %v1790 = vpop.permute.xlu0 %1789
  %v1792 = vmul.f32 %v1785, %v1790
  %1794 = vrot.lane.b32.xlu0 %v1792, 16
  %v1795 = vpop.permute.xlu0 %1794
  %v1797 = vadd.f32 %v1787, %v1795
  %v1798 = vtanh.pop %v1797
  %1800 = vrot.lane.b32.xlu0 %v1798, 32
  %v1801 = vpop.permute.xlu0 %1800
  %v1803 = vmul.f32 %v1785, %v1801
  %1805 = vrot.lane.b32.xlu0 %v1803, 80
  %v1806 = vpop.permute.xlu0 %1805
  %1808 = vst.msk [vmem:[%s288] sm:$0xff] %vm1580, %v1806
  %v1809 = vld [vmem:[%s1055] sm:$0xff]
  %v1810 = vpack.c.bf16 %v1803, %v1803
  %1812 = vrot.lane.b32.xlu0 %v1810, 80
  %v1813 = vpop.permute.xlu0 %1812
  %v1815 = vsel %vm1580, %v1813, 0
  %1817 = vmatprep.subr.bf16.mxu0 0
  %1818 = vmatpush1.bf16.msra.mxu0 %v1578
  %1819 = vmatprep.subr.bf16.mxu0 0
  %1820 = vmatpush1.bf16.msra.mxu0 0
  %1821 = vmatprep.subr.bf16.mxu0 0
  %1822 = vmatpush1.bf16.msra.mxu0 0
  %1823 = vmatprep.subr.bf16.mxu0 0
  %1824 = vmatpush1.bf16.msra.mxu0 0
  %1825 = vmatprep.subr.bf16.mxu0 0
  %1826 = vmatpush1.bf16.msra.mxu0 0
  %1827 = vmatprep.subr.bf16.mxu0 0
  %1828 = vmatpush1.bf16.msra.mxu0 0
  %1829 = vmatprep.subr.bf16.mxu0 0
  %1830 = vmatpush1.bf16.msra.mxu0 0
  %1831 = vmatprep.subr.bf16.mxu0 0
  %1832 = vmatpush1.bf16.msra.mxu0 0
  %1833 = vmatprep.subr.bf16.mxu0 0
  %1834 = vmatpush1.bf16.msra.mxu0 0
  %1835 = vmatprep.subr.bf16.mxu0 0
  %1836 = vmatpush1.bf16.msra.mxu0 0
  %1837 = vmatprep.subr.bf16.mxu0 0
  %1838 = vmatpush1.bf16.msra.mxu0 0
  %1839 = vmatprep.subr.bf16.mxu0 0
  %1840 = vmatpush1.bf16.msra.mxu0 0
  %1841 = vmatprep.subr.bf16.mxu0 0
  %1842 = vmatpush1.bf16.msra.mxu0 0
  %1843 = vmatprep.subr.bf16.mxu0 0
  %1844 = vmatpush1.bf16.msra.mxu0 0
  %1845 = vmatprep.subr.bf16.mxu0 0
  %1846 = vmatpush1.bf16.msra.mxu0 0
  %1847 = vmatprep.subr.bf16.mxu0 0
  %1848 = vmatpush1.bf16.msra.mxu0 0
  %1849 = vmatprep.mubr.bf16.mxu0 0
  %1850 = vmatmul.mubr.bf16.gmra.mrb[0].mxu0 %v1815
  %v1851 = vpop.f32.mrb[0].mxu0
  %v1852 = vadd.f32 0.0, %v1851
  %v1853 = vpop.f32.mrb[0].mxu0
  %v1854 = vpop.f32.mrb[0].mxu0
  %v1855 = vpop.f32.mrb[0].mxu0
  %1856 = vdwg.mxu0
  %v1857 = vadd.f32 %v1809, %v1852
  %v1858 = vxor.u32 %v1857, 2147483648
  %v1859 = vmul.f32 %v1858, 1.442695
  %v1860 = vpow.pop %v1859
  %v1861 = vadd.f32 %v1860, 1.0
  %v1862 = vrcp.pop %v1861
  %v1863 = vmul.f32 1.0, %v1862
  %v1864 = vtanh.pop %v1857
  %v1865 = vmul.f32 %v1863, %v1797
  %1867 = vrot.lane.b32.xlu0 %v1864, 96
  %v1868 = vpop.permute.xlu0 %1867
  %v1870 = vmul.f32 %v1863, %v1868
  %1872 = vrot.lane.b32.xlu0 %v1870, 16
  %v1873 = vpop.permute.xlu0 %1872
  %v1875 = vadd.f32 %v1865, %v1873
  %v1876 = vtanh.pop %v1875
  %1878 = vrot.lane.b32.xlu0 %v1876, 32
  %v1879 = vpop.permute.xlu0 %1878
  %v1881 = vmul.f32 %v1863, %v1879
  %1883 = vrot.lane.b32.xlu0 %v1881, 80
  %v1884 = vpop.permute.xlu0 %1883
  %1886 = vst.msk [vmem:[%s368] sm:$0xff] %vm1580, %v1884
  %v1887 = vld [vmem:[%s1134] sm:$0xff]
  %v1888 = vpack.c.bf16 %v1881, %v1881
  %1890 = vrot.lane.b32.xlu0 %v1888, 80
  %v1891 = vpop.permute.xlu0 %1890
  %v1893 = vsel %vm1580, %v1891, 0
  %1895 = vmatprep.subr.bf16.mxu0 0
  %1896 = vmatpush1.bf16.msra.mxu0 %v1578
  %1897 = vmatprep.subr.bf16.mxu0 0
  %1898 = vmatpush1.bf16.msra.mxu0 0
  %1899 = vmatprep.subr.bf16.mxu0 0
  %1900 = vmatpush1.bf16.msra.mxu0 0
  %1901 = vmatprep.subr.bf16.mxu0 0
  %1902 = vmatpush1.bf16.msra.mxu0 0
  %1903 = vmatprep.subr.bf16.mxu0 0
  %1904 = vmatpush1.bf16.msra.mxu0 0
  %1905 = vmatprep.subr.bf16.mxu0 0
  %1906 = vmatpush1.bf16.msra.mxu0 0
  %1907 = vmatprep.subr.bf16.mxu0 0
  %1908 = vmatpush1.bf16.msra.mxu0 0
  %1909 = vmatprep.subr.bf16.mxu0 0
  %1910 = vmatpush1.bf16.msra.mxu0 0
  %1911 = vmatprep.subr.bf16.mxu0 0
  %1912 = vmatpush1.bf16.msra.mxu0 0
  %1913 = vmatprep.subr.bf16.mxu0 0
  %1914 = vmatpush1.bf16.msra.mxu0 0
  %1915 = vmatprep.subr.bf16.mxu0 0
  %1916 = vmatpush1.bf16.msra.mxu0 0
  %1917 = vmatprep.subr.bf16.mxu0 0
  %1918 = vmatpush1.bf16.msra.mxu0 0
  %1919 = vmatprep.subr.bf16.mxu0 0
  %1920 = vmatpush1.bf16.msra.mxu0 0
  %1921 = vmatprep.subr.bf16.mxu0 0
  %1922 = vmatpush1.bf16.msra.mxu0 0
  %1923 = vmatprep.subr.bf16.mxu0 0
  %1924 = vmatpush1.bf16.msra.mxu0 0
  %1925 = vmatprep.subr.bf16.mxu0 0
  %1926 = vmatpush1.bf16.msra.mxu0 0
  %1927 = vmatprep.mubr.bf16.mxu0 0
  %1928 = vmatmul.mubr.bf16.gmra.mrb[0].mxu0 %v1893
  %v1929 = vpop.f32.mrb[0].mxu0
  %v1930 = vadd.f32 0.0, %v1929
  %v1931 = vpop.f32.mrb[0].mxu0
  %v1932 = vpop.f32.mrb[0].mxu0
  %v1933 = vpop.f32.mrb[0].mxu0
  %1934 = vdwg.mxu0
  %v1935 = vadd.f32 %v1887, %v1930
  %v1936 = vxor.u32 %v1935, 2147483648
  %v1937 = vmul.f32 %v1936, 1.442695
  %v1938 = vpow.pop %v1937
  %v1939 = vadd.f32 %v1938, 1.0
  %v1940 = vrcp.pop %v1939
  %v1941 = vmul.f32 1.0, %v1940
  %v1942 = vtanh.pop %v1935
  %v1943 = vmul.f32 %v1941, %v1875
  %1945 = vrot.lane.b32.xlu0 %v1942, 96
  %v1946 = vpop.permute.xlu0 %1945
  %v1948 = vmul.f32 %v1941, %v1946
  %1950 = vrot.lane.b32.xlu0 %v1948, 16
  %v1951 = vpop.permute.xlu0 %1950
  %v1953 = vadd.f32 %v1943, %v1951
  %v1954 = vtanh.pop %v1953
  %1956 = vrot.lane.b32.xlu0 %v1954, 32
  %v1957 = vpop.permute.xlu0 %1956
  %v1959 = vmul.f32 %v1941, %v1957
  %1961 = vrot.lane.b32.xlu0 %v1959, 80
  %v1962 = vpop.permute.xlu0 %1961
  %1964 = vst.msk [vmem:[%s448] sm:$0xff] %vm1580, %v1962
  %v1965 = vld [vmem:[%s1213] sm:$0xff]
  %v1966 = vpack.c.bf16 %v1959, %v1959
  %1968 = vrot.lane.b32.xlu0 %v1966, 80
  %v1969 = vpop.permute.xlu0 %1968
  %v1971 = vsel %vm1580, %v1969, 0
  %1973 = vmatprep.subr.bf16.mxu0 0
  %1974 = vmatpush1.bf16.msra.mxu0 %v1578
  %1975 = vmatprep.subr.bf16.mxu0 0
  %1976 = vmatpush1.bf16.msra.mxu0 0
  %1977 = vmatprep.subr.bf16.mxu0 0
  %1978 = vmatpush1.bf16.msra.mxu0 0
  %1979 = vmatprep.subr.bf16.mxu0 0
  %1980 = vmatpush1.bf16.msra.mxu0 0
  %1981 = vmatprep.subr.bf16.mxu0 0
  %1982 = vmatpush1.bf16.msra.mxu0 0
  %1983 = vmatprep.subr.bf16.mxu0 0
  %1984 = vmatpush1.bf16.msra.mxu0 0
  %1985 = vmatprep.subr.bf16.mxu0 0
  %1986 = vmatpush1.bf16.msra.mxu0 0
  %1987 = vmatprep.subr.bf16.mxu0 0
  %1988 = vmatpush1.bf16.msra.mxu0 0
  %1989 = vmatprep.subr.bf16.mxu0 0
  %1990 = vmatpush1.bf16.msra.mxu0 0
  %1991 = vmatprep.subr.bf16.mxu0 0
  %1992 = vmatpush1.bf16.msra.mxu0 0
  %1993 = vmatprep.subr.bf16.mxu0 0
  %1994 = vmatpush1.bf16.msra.mxu0 0
  %1995 = vmatprep.subr.bf16.mxu0 0
  %1996 = vmatpush1.bf16.msra.mxu0 0
  %1997 = vmatprep.subr.bf16.mxu0 0
  %1998 = vmatpush1.bf16.msra.mxu0 0
  %1999 = vmatprep.subr.bf16.mxu0 0
  %2000 = vmatpush1.bf16.msra.mxu0 0
  %2001 = vmatprep.subr.bf16.mxu0 0
  %2002 = vmatpush1.bf16.msra.mxu0 0
  %2003 = vmatprep.subr.bf16.mxu0 0
  %2004 = vmatpush1.bf16.msra.mxu0 0
  %2005 = vmatprep.mubr.bf16.mxu0 0
  %2006 = vmatmul.mubr.bf16.gmra.mrb[0].mxu0 %v1971
  %v2007 = vpop.f32.mrb[0].mxu0
  %v2008 = vadd.f32 0.0, %v2007
  %v2009 = vpop.f32.mrb[0].mxu0
  %v2010 = vpop.f32.mrb[0].mxu0
  %v2011 = vpop.f32.mrb[0].mxu0
  %2012 = vdwg.mxu0
  %v2013 = vadd.f32 %v1965, %v2008
  %v2014 = vxor.u32 %v2013, 2147483648
  %v2015 = vmul.f32 %v2014, 1.442695
  %v2016 = vpow.pop %v2015
  %v2017 = vadd.f32 %v2016, 1.0
  %v2018 = vrcp.pop %v2017
  %v2019 = vmul.f32 1.0, %v2018
  %v2020 = vtanh.pop %v2013
  %v2021 = vmul.f32 %v2019, %v1953
  %2023 = vrot.lane.b32.xlu0 %v2020, 96
  %v2024 = vpop.permute.xlu0 %2023
  %v2026 = vmul.f32 %v2019, %v2024
  %2028 = vrot.lane.b32.xlu0 %v2026, 16
  %v2029 = vpop.permute.xlu0 %2028
  %v2031 = vadd.f32 %v2021, %v2029
  %v2032 = vtanh.pop %v2031
  %2034 = vrot.lane.b32.xlu0 %v2032, 32
  %v2035 = vpop.permute.xlu0 %2034
  %v2037 = vmul.f32 %v2019, %v2035
  %2039 = vrot.lane.b32.xlu0 %v2037, 80
  %v2040 = vpop.permute.xlu0 %2039
  %2042 = vst.msk [vmem:[%s528] sm:$0xff] %vm1580, %v2040
  %v2043 = vld [vmem:[%s1292] sm:$0xff]
  %v2044 = vpack.c.bf16 %v2037, %v2037
  %2046 = vrot.lane.b32.xlu0 %v2044, 80
  %v2047 = vpop.permute.xlu0 %2046
  %v2049 = vsel %vm1580, %v2047, 0
  %2051 = vmatprep.subr.bf16.mxu0 0
  %2052 = vmatpush1.bf16.msra.mxu0 %v1578
  %2053 = vmatprep.subr.bf16.mxu0 0
  %2054 = vmatpush1.bf16.msra.mxu0 0
  %2055 = vmatprep.subr.bf16.mxu0 0
  %2056 = vmatpush1.bf16.msra.mxu0 0
  %2057 = vmatprep.subr.bf16.mxu0 0
  %2058 = vmatpush1.bf16.msra.mxu0 0
  %2059 = vmatprep.subr.bf16.mxu0 0
  %2060 = vmatpush1.bf16.msra.mxu0 0
  %2061 = vmatprep.subr.bf16.mxu0 0
  %2062 = vmatpush1.bf16.msra.mxu0 0
  %2063 = vmatprep.subr.bf16.mxu0 0
  %2064 = vmatpush1.bf16.msra.mxu0 0
  %2065 = vmatprep.subr.bf16.mxu0 0
  %2066 = vmatpush1.bf16.msra.mxu0 0
  %2067 = vmatprep.subr.bf16.mxu0 0
  %2068 = vmatpush1.bf16.msra.mxu0 0
  %2069 = vmatprep.subr.bf16.mxu0 0
  %2070 = vmatpush1.bf16.msra.mxu0 0
  %2071 = vmatprep.subr.bf16.mxu0 0
  %2072 = vmatpush1.bf16.msra.mxu0 0
  %2073 = vmatprep.subr.bf16.mxu0 0
  %2074 = vmatpush1.bf16.msra.mxu0 0
  %2075 = vmatprep.subr.bf16.mxu0 0
  %2076 = vmatpush1.bf16.msra.mxu0 0
  %2077 = vmatprep.subr.bf16.mxu0 0
  %2078 = vmatpush1.bf16.msra.mxu0 0
  %2079 = vmatprep.subr.bf16.mxu0 0
  %2080 = vmatpush1.bf16.msra.mxu0 0
  %2081 = vmatprep.subr.bf16.mxu0 0
  %2082 = vmatpush1.bf16.msra.mxu0 0
  %2083 = vmatprep.mubr.bf16.mxu0 0
  %2084 = vmatmul.mubr.bf16.gmra.mrb[0].mxu0 %v2049
  %v2085 = vpop.f32.mrb[0].mxu0
  %v2086 = vadd.f32 0.0, %v2085
  %v2087 = vpop.f32.mrb[0].mxu0
  %v2088 = vpop.f32.mrb[0].mxu0
  %v2089 = vpop.f32.mrb[0].mxu0
  %2090 = vdwg.mxu0
  %v2091 = vadd.f32 %v2043, %v2086
  %v2092 = vxor.u32 %v2091, 2147483648
  %v2093 = vmul.f32 %v2092, 1.442695
  %v2094 = vpow.pop %v2093
  %v2095 = vadd.f32 %v2094, 1.0
  %v2096 = vrcp.pop %v2095
  %v2097 = vmul.f32 1.0, %v2096
  %v2098 = vtanh.pop %v2091
  %v2099 = vmul.f32 %v2097, %v2031
  %2101 = vrot.lane.b32.xlu0 %v2098, 96
  %v2102 = vpop.permute.xlu0 %2101
  %v2104 = vmul.f32 %v2097, %v2102
  %2106 = vrot.lane.b32.xlu0 %v2104, 16
  %v2107 = vpop.permute.xlu0 %2106
  %v2109 = vadd.f32 %v2099, %v2107
  %v2110 = vtanh.pop %v2109
  %2112 = vrot.lane.b32.xlu0 %v2110, 32
  %v2113 = vpop.permute.xlu0 %2112
  %v2115 = vmul.f32 %v2097, %v2113
  %2117 = vrot.lane.b32.xlu0 %v2115, 80
  %v2118 = vpop.permute.xlu0 %2117
  %2120 = vst.msk [vmem:[%s608] sm:$0xff] %vm1580, %v2118
  %v2121 = vld [vmem:[%s1371] sm:$0xff]
  %v2122 = vpack.c.bf16 %v2115, %v2115
  %2124 = vrot.lane.b32.xlu0 %v2122, 80
  %v2125 = vpop.permute.xlu0 %2124
  %v2127 = vsel %vm1580, %v2125, 0
  %2129 = vmatprep.subr.bf16.mxu0 0
  %2130 = vmatpush1.bf16.msra.mxu0 %v1578
  %2131 = vmatprep.subr.bf16.mxu0 0
  %2132 = vmatpush1.bf16.msra.mxu0 0
  %2133 = vmatprep.subr.bf16.mxu0 0
  %2134 = vmatpush1.bf16.msra.mxu0 0
  %2135 = vmatprep.subr.bf16.mxu0 0
  %2136 = vmatpush1.bf16.msra.mxu0 0
  %2137 = vmatprep.subr.bf16.mxu0 0
  %2138 = vmatpush1.bf16.msra.mxu0 0
  %2139 = vmatprep.subr.bf16.mxu0 0
  %2140 = vmatpush1.bf16.msra.mxu0 0
  %2141 = vmatprep.subr.bf16.mxu0 0
  %2142 = vmatpush1.bf16.msra.mxu0 0
  %2143 = vmatprep.subr.bf16.mxu0 0
  %2144 = vmatpush1.bf16.msra.mxu0 0
  %2145 = vmatprep.subr.bf16.mxu0 0
  %2146 = vmatpush1.bf16.msra.mxu0 0
  %2147 = vmatprep.subr.bf16.mxu0 0
  %2148 = vmatpush1.bf16.msra.mxu0 0
  %2149 = vmatprep.subr.bf16.mxu0 0
  %2150 = vmatpush1.bf16.msra.mxu0 0
  %2151 = vmatprep.subr.bf16.mxu0 0
  %2152 = vmatpush1.bf16.msra.mxu0 0
  %2153 = vmatprep.subr.bf16.mxu0 0
  %2154 = vmatpush1.bf16.msra.mxu0 0
  %2155 = vmatprep.subr.bf16.mxu0 0
  %2156 = vmatpush1.bf16.msra.mxu0 0
  %2157 = vmatprep.subr.bf16.mxu0 0
  %2158 = vmatpush1.bf16.msra.mxu0 0
  %2159 = vmatprep.subr.bf16.mxu0 0
  %2160 = vmatpush1.bf16.msra.mxu0 0
  %2161 = vmatprep.mubr.bf16.mxu0 0
  %2162 = vmatmul.mubr.bf16.gmra.mrb[0].mxu0 %v2127
  %v2163 = vpop.f32.mrb[0].mxu0
  %v2164 = vadd.f32 0.0, %v2163
  %v2165 = vpop.f32.mrb[0].mxu0
  %v2166 = vpop.f32.mrb[0].mxu0
  %v2167 = vpop.f32.mrb[0].mxu0
  %2168 = vdwg.mxu0
  %v2169 = vadd.f32 %v2121, %v2164
  %v2170 = vxor.u32 %v2169, 2147483648
  %v2171 = vmul.f32 %v2170, 1.442695
  %v2172 = vpow.pop %v2171
  %v2173 = vadd.f32 %v2172, 1.0
  %v2174 = vrcp.pop %v2173
  %v2175 = vmul.f32 1.0, %v2174
  %v2176 = vtanh.pop %v2169
  %v2177 = vmul.f32 %v2175, %v2109
  %2179 = vrot.lane.b32.xlu0 %v2176, 96
  %v2180 = vpop.permute.xlu0 %2179
  %v2182 = vmul.f32 %v2175, %v2180
  %2184 = vrot.lane.b32.xlu0 %v2182, 16
  %v2185 = vpop.permute.xlu0 %2184
  %v2187 = vadd.f32 %v2177, %v2185
  %v2188 = vtanh.pop %v2187
  %2190 = vrot.lane.b32.xlu0 %v2188, 32
  %v2191 = vpop.permute.xlu0 %2190
  %v2193 = vmul.f32 %v2175, %v2191
  %2195 = vrot.lane.b32.xlu0 %v2193, 80
  %v2196 = vpop.permute.xlu0 %2195
  %2198 = vst.msk [vmem:[%s688] sm:$0xff] %vm1580, %v2196
  %v2199 = vld [vmem:[%s11] sm:$0xff]
  %v2200 = vld [vmem:[%s11 + $0x8] sm:$0xff]
  %v2201 = vld [vmem:[%s11 + $0x10] sm:$0xff]
  %v2202 = vld [vmem:[%s11 + $0x18] sm:$0xff]
  %v2203 = vld [vmem:[%s11 + $0x20] sm:$0xff]
  %v2204 = vld [vmem:[%s11 + $0x28] sm:$0xff]
  %v2205 = vld [vmem:[%s11 + $0x30] sm:$0xff]
  %v2206 = vld [vmem:[%s11 + $0x38] sm:$0xff]
  %v2207 = vpack.c.bf16 %v2200, %v2199
  %v2208 = vpack.c.bf16 %v2202, %v2201
  %v2209 = vpack.c.bf16 %v2204, %v2203
  %v2210 = vpack.c.bf16 %v2206, %v2205
  %v2211 = vld [vmem:[%s3] sm:$0xf]
  %v2212 = vld [vmem:[%s3 + $0x4] sm:$0xf]
  %v2213 = vld [vmem:[%s6] sm:$0x1]
  %v2215 = vlaneseq
  %v2216 = vshrl.u32 %v2215, 7
  %v2217 = vsub.s32 0, %v2216
  %v2218 = vrot.slane %v2213, %v2217
  %v2222 = vunpack.c.l.b16 %v2211
  %v2223 = vunpack.c.l.b16 %v2212
  %v2224 = vpack.c.b16 %v2223, %v2222
  %v2227 = vsel %vm1580, %v2207, 0
  %v2230 = vsel %vm1580, %v2208, 0
  %v2233 = vsel %vm1580, %v2209, 0
  %v2236 = vsel %vm1580, %v2210, 0
  %2238 = vmatprep.subr.bf16.mxu0 0
  %2239 = vmatpush1.bf16.msra.mxu0 %v2224
  %2240 = vmatprep.subr.bf16.mxu0 0
  %2241 = vmatpush1.bf16.msra.mxu0 0
  %2242 = vmatprep.subr.bf16.mxu0 0
  %2243 = vmatpush1.bf16.msra.mxu0 0
  %2244 = vmatprep.subr.bf16.mxu0 0
  %2245 = vmatpush1.bf16.msra.mxu0 0
  %2246 = vmatprep.subr.bf16.mxu0 0
  %2247 = vmatpush1.bf16.msra.mxu0 0
  %2248 = vmatprep.subr.bf16.mxu0 0
  %2249 = vmatpush1.bf16.msra.mxu0 0
  %2250 = vmatprep.subr.bf16.mxu0 0
  %2251 = vmatpush1.bf16.msra.mxu0 0
  %2252 = vmatprep.subr.bf16.mxu0 0
  %2253 = vmatpush1.bf16.msra.mxu0 0
  %2254 = vmatprep.subr.bf16.mxu0 0
  %2255 = vmatpush1.bf16.msra.mxu0 0
  %2256 = vmatprep.subr.bf16.mxu0 0
  %2257 = vmatpush1.bf16.msra.mxu0 0
  %2258 = vmatprep.subr.bf16.mxu0 0
  %2259 = vmatpush1.bf16.msra.mxu0 0
  %2260 = vmatprep.subr.bf16.mxu0 0
  %2261 = vmatpush1.bf16.msra.mxu0 0
  %2262 = vmatprep.subr.bf16.mxu0 0
  %2263 = vmatpush1.bf16.msra.mxu0 0
  %2264 = vmatprep.subr.bf16.mxu0 0
  %2265 = vmatpush1.bf16.msra.mxu0 0
  %2266 = vmatprep.subr.bf16.mxu0 0
  %2267 = vmatpush1.bf16.msra.mxu0 0
  %2268 = vmatprep.subr.bf16.mxu0 0
  %2269 = vmatpush1.bf16.msra.mxu0 0
  %2270 = vmatprep.mubr.bf16.mxu0 0
  %2271 = vmatmul.mubr.bf16.gmra.mrb[0].mxu0 %v2227
  %v2272 = vpop.f32.mrb[0].mxu0
  %v2273 = vadd.f32 %v2218, %v2272
  %v2274 = vpop.f32.mrb[0].mxu0
  %v2275 = vpop.f32.mrb[0].mxu0
  %v2276 = vadd.f32 %v2218, %v2275
  %v2277 = vpop.f32.mrb[0].mxu0
  %2278 = vmatprep.mubr.bf16.mxu0 0
  %2279 = vmatmul.mubr.bf16.gmra.mrb[0].mxu0 %v2230
  %v2280 = vpop.f32.mrb[0].mxu0
  %v2281 = vadd.f32 %v2218, %v2280
  %v2282 = vpop.f32.mrb[0].mxu0
  %v2283 = vpop.f32.mrb[0].mxu0
  %v2284 = vadd.f32 %v2218, %v2283
  %v2285 = vpop.f32.mrb[0].mxu0
  %2286 = vmatprep.mubr.bf16.mxu0 0
  %2287 = vmatmul.mubr.bf16.gmra.mrb[0].mxu0 %v2233
  %v2288 = vpop.f32.mrb[0].mxu0
  %v2289 = vadd.f32 %v2218, %v2288
  %v2290 = vpop.f32.mrb[0].mxu0
  %v2291 = vpop.f32.mrb[0].mxu0
  %v2292 = vadd.f32 %v2218, %v2291
  %v2293 = vpop.f32.mrb[0].mxu0
  %2294 = vmatprep.mubr.bf16.mxu0 0
  %2295 = vmatmul.mubr.bf16.gmra.mrb[0].mxu0 %v2236
  %v2296 = vpop.f32.mrb[0].mxu0
  %v2297 = vadd.f32 %v2218, %v2296
  %v2298 = vpop.f32.mrb[0].mxu0
  %v2299 = vpop.f32.mrb[0].mxu0
  %v2300 = vadd.f32 %v2218, %v2299
  %v2301 = vpop.f32.mrb[0].mxu0
  %2302 = vdwg.mxu0
  %2303 = vst.msk [vmem:[#allocation2] sm:$0xff] %vm1562, %v2273
  %2304 = vst.msk [vmem:[#allocation2 + $0x8] sm:$0xff] %vm1562, %v2276
  %2305 = vst.msk [vmem:[#allocation2 + $0x10] sm:$0xff] %vm1562, %v2281
  %2306 = vst.msk [vmem:[#allocation2 + $0x18] sm:$0xff] %vm1562, %v2284
  %2307 = vst.msk [vmem:[#allocation2 + $0x20] sm:$0xff] %vm1562, %v2289
  %2308 = vst.msk [vmem:[#allocation2 + $0x28] sm:$0xff] %vm1562, %v2292
  %2309 = vst.msk [vmem:[#allocation2 + $0x30] sm:$0xff] %vm1562, %v2297
  %2310 = vst.msk [vmem:[#allocation2 + $0x38] sm:$0xff] %vm1562, %v2300
  %v2311 = vld [vmem:[%s10] sm:$0xf]
  %v2312 = vld [vmem:[%s10 + $0x4] sm:$0xf]
  %v2313 = vld [vmem:[#allocation2] sm:$0xff]
  %v2316 = vunpack.c.l.b16 %v2311
  %v2317 = vunpack.c.l.b16 %v2312
  %v2318 = vpack.c.b16 %v2317, %v2316
  %2320 = vmatprep.subr.bf16.mxu0 0
  %2321 = vmatpush1.bf16.msra.mxu0 %v2318
  %2322 = vmatprep.subr.bf16.mxu0 0
  %2323 = vmatpush1.bf16.msra.mxu0 0
  %2324 = vmatprep.subr.bf16.mxu0 0
  %2325 = vmatpush1.bf16.msra.mxu0 0
  %2326 = vmatprep.subr.bf16.mxu0 0
  %2327 = vmatpush1.bf16.msra.mxu0 0
  %2328 = vmatprep.subr.bf16.mxu0 0
  %2329 = vmatpush1.bf16.msra.mxu0 0
  %2330 = vmatprep.subr.bf16.mxu0 0
  %2331 = vmatpush1.bf16.msra.mxu0 0
  %2332 = vmatprep.subr.bf16.mxu0 0
  %2333 = vmatpush1.bf16.msra.mxu0 0
  %2334 = vmatprep.subr.bf16.mxu0 0
  %2335 = vmatpush1.bf16.msra.mxu0 0
  %2336 = vmatprep.subr.bf16.mxu0 0
  %2337 = vmatpush1.bf16.msra.mxu0 0
  %2338 = vmatprep.subr.bf16.mxu0 0
  %2339 = vmatpush1.bf16.msra.mxu0 0
  %2340 = vmatprep.subr.bf16.mxu0 0
  %2341 = vmatpush1.bf16.msra.mxu0 0
  %2342 = vmatprep.subr.bf16.mxu0 0
  %2343 = vmatpush1.bf16.msra.mxu0 0
  %2344 = vmatprep.subr.bf16.mxu0 0
  %2345 = vmatpush1.bf16.msra.mxu0 0
  %2346 = vmatprep.subr.bf16.mxu0 0
  %2347 = vmatpush1.bf16.msra.mxu0 0
  %2348 = vmatprep.subr.bf16.mxu0 0
  %2349 = vmatpush1.bf16.msra.mxu0 0
  %2350 = vmatprep.subr.bf16.mxu0 0
  %2351 = vmatpush1.bf16.msra.mxu0 0
  %2352 = vmatprep.mubr.bf16.mxu0 0
  %2353 = vmatmul.mubr.bf16.gmra.mrb[0].mxu0 %v1581
  %v2354 = vpop.f32.mrb[0].mxu0
  %v2355 = vadd.f32 0.0, %v2354
  %v2356 = vpop.f32.mrb[0].mxu0
  %v2357 = vpop.f32.mrb[0].mxu0
  %v2358 = vpop.f32.mrb[0].mxu0
  %2359 = vdwg.mxu0
  %v2360 = vadd.f32 %v2313, %v2355
  %v2361 = vxor.u32 %v2360, 2147483648
  %v2362 = vmul.f32 %v2361, 1.442695
  %v2363 = vpow.pop %v2362
  %v2364 = vadd.f32 %v2363, 1.0
  %v2365 = vrcp.pop %v2364
  %v2366 = vmul.f32 1.0, %v2365
  %v2367 = vtanh.pop %v2360
  %v2368 = vmul.f32 %v2366, 0.0
  %2370 = vrot.lane.b32.xlu0 %v2367, 96
  %v2371 = vpop.permute.xlu0 %2370
  %v2373 = vmul.f32 %v2366, %v2371
  %2375 = vrot.lane.b32.xlu0 %v2373, 16
  %v2376 = vpop.permute.xlu0 %2375
  %v2378 = vadd.f32 %v2368, %v2376
  %v2379 = vtanh.pop %v2378
  %2381 = vrot.lane.b32.xlu0 %v2379, 32
  %v2382 = vpop.permute.xlu0 %2381
  %v2384 = vmul.f32 %v2366, %v2382
  %2386 = vrot.lane.b32.xlu0 %v2384, 80
  %v2387 = vpop.permute.xlu0 %2386
  %2389 = vst.msk [vmem:[%s11] sm:$0xff] %vm1580, %v2387
  %v2390 = vld [vmem:[%s897] sm:$0xff]
  %v2391 = vpack.c.bf16 %v2384, %v2384
  %2393 = vrot.lane.b32.xlu0 %v2391, 80
  %v2394 = vpop.permute.xlu0 %2393
  %v2396 = vsel %vm1580, %v2394, 0
  %2398 = vmatprep.subr.bf16.mxu0 0
  %2399 = vmatpush1.bf16.msra.mxu0 %v2318
  %2400 = vmatprep.subr.bf16.mxu0 0
  %2401 = vmatpush1.bf16.msra.mxu0 0
  %2402 = vmatprep.subr.bf16.mxu0 0
  %2403 = vmatpush1.bf16.msra.mxu0 0
  %2404 = vmatprep.subr.bf16.mxu0 0
  %2405 = vmatpush1.bf16.msra.mxu0 0
  %2406 = vmatprep.subr.bf16.mxu0 0
  %2407 = vmatpush1.bf16.msra.mxu0 0
  %2408 = vmatprep.subr.bf16.mxu0 0
  %2409 = vmatpush1.bf16.msra.mxu0 0
  %2410 = vmatprep.subr.bf16.mxu0 0
  %2411 = vmatpush1.bf16.msra.mxu0 0
  %2412 = vmatprep.subr.bf16.mxu0 0
  %2413 = vmatpush1.bf16.msra.mxu0 0
  %2414 = vmatprep.subr.bf16.mxu0 0
  %2415 = vmatpush1.bf16.msra.mxu0 0
  %2416 = vmatprep.subr.bf16.mxu0 0
  %2417 = vmatpush1.bf16.msra.mxu0 0
  %2418 = vmatprep.subr.bf16.mxu0 0
  %2419 = vmatpush1.bf16.msra.mxu0 0
  %2420 = vmatprep.subr.bf16.mxu0 0
  %2421 = vmatpush1.bf16.msra.mxu0 0
  %2422 = vmatprep.subr.bf16.mxu0 0
  %2423 = vmatpush1.bf16.msra.mxu0 0
  %2424 = vmatprep.subr.bf16.mxu0 0
  %2425 = vmatpush1.bf16.msra.mxu0 0
  %2426 = vmatprep.subr.bf16.mxu0 0
  %2427 = vmatpush1.bf16.msra.mxu0 0
  %2428 = vmatprep.subr.bf16.mxu0 0
  %2429 = vmatpush1.bf16.msra.mxu0 0
  %2430 = vmatprep.mubr.bf16.mxu0 0
  %2431 = vmatmul.mubr.bf16.gmra.mrb[0].mxu0 %v2396
  %v2432 = vpop.f32.mrb[0].mxu0
  %v2433 = vadd.f32 0.0, %v2432
  %v2434 = vpop.f32.mrb[0].mxu0
  %v2435 = vpop.f32.mrb[0].mxu0
  %v2436 = vpop.f32.mrb[0].mxu0
  %2437 = vdwg.mxu0
  %v2438 = vadd.f32 %v2390, %v2433
  %v2439 = vxor.u32 %v2438, 2147483648
  %v2440 = vmul.f32 %v2439, 1.442695
  %v2441 = vpow.pop %v2440
  %v2442 = vadd.f32 %v2441, 1.0
  %v2443 = vrcp.pop %v2442
  %v2444 = vmul.f32 1.0, %v2443
  %v2445 = vtanh.pop %v2438
  %v2446 = vmul.f32 %v2444, %v2378
  %2448 = vrot.lane.b32.xlu0 %v2445, 96
  %v2449 = vpop.permute.xlu0 %2448
  %v2451 = vmul.f32 %v2444, %v2449
  %2453 = vrot.lane.b32.xlu0 %v2451, 16
  %v2454 = vpop.permute.xlu0 %2453
  %v2456 = vadd.f32 %v2446, %v2454
  %v2457 = vtanh.pop %v2456
  %2459 = vrot.lane.b32.xlu0 %v2457, 32
  %v2460 = vpop.permute.xlu0 %2459
  %v2462 = vmul.f32 %v2444, %v2460
  %2464 = vrot.lane.b32.xlu0 %v2462, 80
  %v2465 = vpop.permute.xlu0 %2464
  %2467 = vst.msk [vmem:[%s208] sm:$0xff] %vm1580, %v2465
  %v2468 = vld [vmem:[%s976] sm:$0xff]
  %v2469 = vpack.c.bf16 %v2462, %v2462
  %2471 = vrot.lane.b32.xlu0 %v2469, 80
  %v2472 = vpop.permute.xlu0 %2471
  %v2474 = vsel %vm1580, %v2472, 0
  %2476 = vmatprep.subr.bf16.mxu0 0
  %2477 = vmatpush1.bf16.msra.mxu0 %v2318
  %2478 = vmatprep.subr.bf16.mxu0 0
  %2479 = vmatpush1.bf16.msra.mxu0 0
  %2480 = vmatprep.subr.bf16.mxu0 0
  %2481 = vmatpush1.bf16.msra.mxu0 0
  %2482 = vmatprep.subr.bf16.mxu0 0
  %2483 = vmatpush1.bf16.msra.mxu0 0
  %2484 = vmatprep.subr.bf16.mxu0 0
  %2485 = vmatpush1.bf16.msra.mxu0 0
  %2486 = vmatprep.subr.bf16.mxu0 0
  %2487 = vmatpush1.bf16.msra.mxu0 0
  %2488 = vmatprep.subr.bf16.mxu0 0
  %2489 = vmatpush1.bf16.msra.mxu0 0
  %2490 = vmatprep.subr.bf16.mxu0 0
  %2491 = vmatpush1.bf16.msra.mxu0 0
  %2492 = vmatprep.subr.bf16.mxu0 0
  %2493 = vmatpush1.bf16.msra.mxu0 0
  %2494 = vmatprep.subr.bf16.mxu0 0
  %2495 = vmatpush1.bf16.msra.mxu0 0
  %2496 = vmatprep.subr.bf16.mxu0 0
  %2497 = vmatpush1.bf16.msra.mxu0 0
  %2498 = vmatprep.subr.bf16.mxu0 0
  %2499 = vmatpush1.bf16.msra.mxu0 0
  %2500 = vmatprep.subr.bf16.mxu0 0
  %2501 = vmatpush1.bf16.msra.mxu0 0
  %2502 = vmatprep.subr.bf16.mxu0 0
  %2503 = vmatpush1.bf16.msra.mxu0 0
  %2504 = vmatprep.subr.bf16.mxu0 0
  %2505 = vmatpush1.bf16.msra.mxu0 0
  %2506 = vmatprep.subr.bf16.mxu0 0
  %2507 = vmatpush1.bf16.msra.mxu0 0
  %2508 = vmatprep.mubr.bf16.mxu0 0
  %2509 = vmatmul.mubr.bf16.gmra.mrb[0].mxu0 %v2474
  %v2510 = vpop.f32.mrb[0].mxu0
  %v2511 = vadd.f32 0.0, %v2510
  %v2512 = vpop.f32.mrb[0].mxu0
  %v2513 = vpop.f32.mrb[0].mxu0
  %v2514 = vpop.f32.mrb[0].mxu0
  %2515 = vdwg.mxu0
  %v2516 = vadd.f32 %v2468, %v2511
  %v2517 = vxor.u32 %v2516, 2147483648
  %v2518 = vmul.f32 %v2517, 1.442695
  %v2519 = vpow.pop %v2518
  %v2520 = vadd.f32 %v2519, 1.0
  %v2521 = vrcp.pop %v2520
  %v2522 = vmul.f32 1.0, %v2521
  %v2523 = vtanh.pop %v2516
  %v2524 = vmul.f32 %v2522, %v2456
  %2526 = vrot.lane.b32.xlu0 %v2523, 96
  %v2527 = vpop.permute.xlu0 %2526
  %v2529 = vmul.f32 %v2522, %v2527
  %2531 = vrot.lane.b32.xlu0 %v2529, 16
  %v2532 = vpop.permute.xlu0 %2531
  %v2534 = vadd.f32 %v2524, %v2532
  %v2535 = vtanh.pop %v2534
  %2537 = vrot.lane.b32.xlu0 %v2535, 32
  %v2538 = vpop.permute.xlu0 %2537
  %v2540 = vmul.f32 %v2522, %v2538
  %2542 = vrot.lane.b32.xlu0 %v2540, 80
  %v2543 = vpop.permute.xlu0 %2542
  %2545 = vst.msk [vmem:[%s288] sm:$0xff] %vm1580, %v2543
  %v2546 = vld [vmem:[%s1055] sm:$0xff]
  %v2547 = vpack.c.bf16 %v2540, %v2540
  %2549 = vrot.lane.b32.xlu0 %v2547, 80
  %v2550 = vpop.permute.xlu0 %2549
  %v2552 = vsel %vm1580, %v2550, 0
  %2554 = vmatprep.subr.bf16.mxu0 0
  %2555 = vmatpush1.bf16.msra.mxu0 %v2318
  %2556 = vmatprep.subr.bf16.mxu0 0
  %2557 = vmatpush1.bf16.msra.mxu0 0
  %2558 = vmatprep.subr.bf16.mxu0 0
  %2559 = vmatpush1.bf16.msra.mxu0 0
  %2560 = vmatprep.subr.bf16.mxu0 0
  %2561 = vmatpush1.bf16.msra.mxu0 0
  %2562 = vmatprep.subr.bf16.mxu0 0
  %2563 = vmatpush1.bf16.msra.mxu0 0
  %2564 = vmatprep.subr.bf16.mxu0 0
  %2565 = vmatpush1.bf16.msra.mxu0 0
  %2566 = vmatprep.subr.bf16.mxu0 0
  %2567 = vmatpush1.bf16.msra.mxu0 0
  %2568 = vmatprep.subr.bf16.mxu0 0
  %2569 = vmatpush1.bf16.msra.mxu0 0
  %2570 = vmatprep.subr.bf16.mxu0 0
  %2571 = vmatpush1.bf16.msra.mxu0 0
  %2572 = vmatprep.subr.bf16.mxu0 0
  %2573 = vmatpush1.bf16.msra.mxu0 0
  %2574 = vmatprep.subr.bf16.mxu0 0
  %2575 = vmatpush1.bf16.msra.mxu0 0
  %2576 = vmatprep.subr.bf16.mxu0 0
  %2577 = vmatpush1.bf16.msra.mxu0 0
  %2578 = vmatprep.subr.bf16.mxu0 0
  %2579 = vmatpush1.bf16.msra.mxu0 0
  %2580 = vmatprep.subr.bf16.mxu0 0
  %2581 = vmatpush1.bf16.msra.mxu0 0
  %2582 = vmatprep.subr.bf16.mxu0 0
  %2583 = vmatpush1.bf16.msra.mxu0 0
  %2584 = vmatprep.subr.bf16.mxu0 0
  %2585 = vmatpush1.bf16.msra.mxu0 0
  %2586 = vmatprep.mubr.bf16.mxu0 0
  %2587 = vmatmul.mubr.bf16.gmra.mrb[0].mxu0 %v2552
  %v2588 = vpop.f32.mrb[0].mxu0
  %v2589 = vadd.f32 0.0, %v2588
  %v2590 = vpop.f32.mrb[0].mxu0
  %v2591 = vpop.f32.mrb[0].mxu0
  %v2592 = vpop.f32.mrb[0].mxu0
  %2593 = vdwg.mxu0
  %v2594 = vadd.f32 %v2546, %v2589
  %v2595 = vxor.u32 %v2594, 2147483648
  %v2596 = vmul.f32 %v2595, 1.442695
  %v2597 = vpow.pop %v2596
  %v2598 = vadd.f32 %v2597, 1.0
  %v2599 = vrcp.pop %v2598
  %v2600 = vmul.f32 1.0, %v2599
  %v2601 = vtanh.pop %v2594
  %v2602 = vmul.f32 %v2600, %v2534
  %2604 = vrot.lane.b32.xlu0 %v2601, 96
  %v2605 = vpop.permute.xlu0 %2604
  %v2607 = vmul.f32 %v2600, %v2605
  %2609 = vrot.lane.b32.xlu0 %v2607, 16
  %v2610 = vpop.permute.xlu0 %2609
  %v2612 = vadd.f32 %v2602, %v2610
  %v2613 = vtanh.pop %v2612
  %2615 = vrot.lane.b32.xlu0 %v2613, 32
  %v2616 = vpop.permute.xlu0 %2615
  %v2618 = vmul.f32 %v2600, %v2616
  %2620 = vrot.lane.b32.xlu0 %v2618, 80
  %v2621 = vpop.permute.xlu0 %2620
  %2623 = vst.msk [vmem:[%s368] sm:$0xff] %vm1580, %v2621
  %v2624 = vld [vmem:[%s1134] sm:$0xff]
  %v2625 = vpack.c.bf16 %v2618, %v2618
  %2627 = vrot.lane.b32.xlu0 %v2625, 80
  %v2628 = vpop.permute.xlu0 %2627
  %v2630 = vsel %vm1580, %v2628, 0
  %2632 = vmatprep.subr.bf16.mxu0 0
  %2633 = vmatpush1.bf16.msra.mxu0 %v2318
  %2634 = vmatprep.subr.bf16.mxu0 0
  %2635 = vmatpush1.bf16.msra.mxu0 0
  %2636 = vmatprep.subr.bf16.mxu0 0
  %2637 = vmatpush1.bf16.msra.mxu0 0
  %2638 = vmatprep.subr.bf16.mxu0 0
  %2639 = vmatpush1.bf16.msra.mxu0 0
  %2640 = vmatprep.subr.bf16.mxu0 0
  %2641 = vmatpush1.bf16.msra.mxu0 0
  %2642 = vmatprep.subr.bf16.mxu0 0
  %2643 = vmatpush1.bf16.msra.mxu0 0
  %2644 = vmatprep.subr.bf16.mxu0 0
  %2645 = vmatpush1.bf16.msra.mxu0 0
  %2646 = vmatprep.subr.bf16.mxu0 0
  %2647 = vmatpush1.bf16.msra.mxu0 0
  %2648 = vmatprep.subr.bf16.mxu0 0
  %2649 = vmatpush1.bf16.msra.mxu0 0
  %2650 = vmatprep.subr.bf16.mxu0 0
  %2651 = vmatpush1.bf16.msra.mxu0 0
  %2652 = vmatprep.subr.bf16.mxu0 0
  %2653 = vmatpush1.bf16.msra.mxu0 0
  %2654 = vmatprep.subr.bf16.mxu0 0
  %2655 = vmatpush1.bf16.msra.mxu0 0
  %2656 = vmatprep.subr.bf16.mxu0 0
  %2657 = vmatpush1.bf16.msra.mxu0 0
  %2658 = vmatprep.subr.bf16.mxu0 0
  %2659 = vmatpush1.bf16.msra.mxu0 0
  %2660 = vmatprep.subr.bf16.mxu0 0
  %2661 = vmatpush1.bf16.msra.mxu0 0
  %2662 = vmatprep.subr.bf16.mxu0 0
  %2663 = vmatpush1.bf16.msra.mxu0 0
  %2664 = vmatprep.mubr.bf16.mxu0 0
  %2665 = vmatmul.mubr.bf16.gmra.mrb[0].mxu0 %v2630
  %v2666 = vpop.f32.mrb[0].mxu0
  %v2667 = vadd.f32 0.0, %v2666
  %v2668 = vpop.f32.mrb[0].mxu0
  %v2669 = vpop.f32.mrb[0].mxu0
  %v2670 = vpop.f32.mrb[0].mxu0
  %2671 = vdwg.mxu0
  %v2672 = vadd.f32 %v2624, %v2667
  %v2673 = vxor.u32 %v2672, 2147483648
  %v2674 = vmul.f32 %v2673, 1.442695
  %v2675 = vpow.pop %v2674
  %v2676 = vadd.f32 %v2675, 1.0
  %v2677 = vrcp.pop %v2676
  %v2678 = vmul.f32 1.0, %v2677
  %v2679 = vtanh.pop %v2672
  %v2680 = vmul.f32 %v2678, %v2612
  %2682 = vrot.lane.b32.xlu0 %v2679, 96
  %v2683 = vpop.permute.xlu0 %2682
  %v2685 = vmul.f32 %v2678, %v2683
  %2687 = vrot.lane.b32.xlu0 %v2685, 16
  %v2688 = vpop.permute.xlu0 %2687
  %v2690 = vadd.f32 %v2680, %v2688
  %v2691 = vtanh.pop %v2690
  %2693 = vrot.lane.b32.xlu0 %v2691, 32
  %v2694 = vpop.permute.xlu0 %2693
  %v2696 = vmul.f32 %v2678, %v2694
  %2698 = vrot.lane.b32.xlu0 %v2696, 80
  %v2699 = vpop.permute.xlu0 %2698
  %2701 = vst.msk [vmem:[%s448] sm:$0xff] %vm1580, %v2699
  %v2702 = vld [vmem:[%s1213] sm:$0xff]
  %v2703 = vpack.c.bf16 %v2696, %v2696
  %2705 = vrot.lane.b32.xlu0 %v2703, 80
  %v2706 = vpop.permute.xlu0 %2705
  %v2708 = vsel %vm1580, %v2706, 0
  %2710 = vmatprep.subr.bf16.mxu0 0
  %2711 = vmatpush1.bf16.msra.mxu0 %v2318
  %2712 = vmatprep.subr.bf16.mxu0 0
  %2713 = vmatpush1.bf16.msra.mxu0 0
  %2714 = vmatprep.subr.bf16.mxu0 0
  %2715 = vmatpush1.bf16.msra.mxu0 0
  %2716 = vmatprep.subr.bf16.mxu0 0
  %2717 = vmatpush1.bf16.msra.mxu0 0
  %2718 = vmatprep.subr.bf16.mxu0 0
  %2719 = vmatpush1.bf16.msra.mxu0 0
  %2720 = vmatprep.subr.bf16.mxu0 0
  %2721 = vmatpush1.bf16.msra.mxu0 0
  %2722 = vmatprep.subr.bf16.mxu0 0
  %2723 = vmatpush1.bf16.msra.mxu0 0
  %2724 = vmatprep.subr.bf16.mxu0 0
  %2725 = vmatpush1.bf16.msra.mxu0 0
  %2726 = vmatprep.subr.bf16.mxu0 0
  %2727 = vmatpush1.bf16.msra.mxu0 0
  %2728 = vmatprep.subr.bf16.mxu0 0
  %2729 = vmatpush1.bf16.msra.mxu0 0
  %2730 = vmatprep.subr.bf16.mxu0 0
  %2731 = vmatpush1.bf16.msra.mxu0 0
  %2732 = vmatprep.subr.bf16.mxu0 0
  %2733 = vmatpush1.bf16.msra.mxu0 0
  %2734 = vmatprep.subr.bf16.mxu0 0
  %2735 = vmatpush1.bf16.msra.mxu0 0
  %2736 = vmatprep.subr.bf16.mxu0 0
  %2737 = vmatpush1.bf16.msra.mxu0 0
  %2738 = vmatprep.subr.bf16.mxu0 0
  %2739 = vmatpush1.bf16.msra.mxu0 0
  %2740 = vmatprep.subr.bf16.mxu0 0
  %2741 = vmatpush1.bf16.msra.mxu0 0
  %2742 = vmatprep.mubr.bf16.mxu0 0
  %2743 = vmatmul.mubr.bf16.gmra.mrb[0].mxu0 %v2708
  %v2744 = vpop.f32.mrb[0].mxu0
  %v2745 = vadd.f32 0.0, %v2744
  %v2746 = vpop.f32.mrb[0].mxu0
  %v2747 = vpop.f32.mrb[0].mxu0
  %v2748 = vpop.f32.mrb[0].mxu0
  %2749 = vdwg.mxu0
  %v2750 = vadd.f32 %v2702, %v2745
  %v2751 = vxor.u32 %v2750, 2147483648
  %v2752 = vmul.f32 %v2751, 1.442695
  %v2753 = vpow.pop %v2752
  %v2754 = vadd.f32 %v2753, 1.0
  %v2755 = vrcp.pop %v2754
  %v2756 = vmul.f32 1.0, %v2755
  %v2757 = vtanh.pop %v2750
  %v2758 = vmul.f32 %v2756, %v2690
  %2760 = vrot.lane.b32.xlu0 %v2757, 96
  %v2761 = vpop.permute.xlu0 %2760
  %v2763 = vmul.f32 %v2756, %v2761
  %2765 = vrot.lane.b32.xlu0 %v2763, 16
  %v2766 = vpop.permute.xlu0 %2765
  %v2768 = vadd.f32 %v2758, %v2766
  %v2769 = vtanh.pop %v2768
  %2771 = vrot.lane.b32.xlu0 %v2769, 32
  %v2772 = vpop.permute.xlu0 %2771
  %v2774 = vmul.f32 %v2756, %v2772
  %2776 = vrot.lane.b32.xlu0 %v2774, 80
  %v2777 = vpop.permute.xlu0 %2776
  %2779 = vst.msk [vmem:[%s528] sm:$0xff] %vm1580, %v2777
  %v2780 = vld [vmem:[%s1292] sm:$0xff]
  %v2781 = vpack.c.bf16 %v2774, %v2774
  %2783 = vrot.lane.b32.xlu0 %v2781, 80
  %v2784 = vpop.permute.xlu0 %2783
  %v2786 = vsel %vm1580, %v2784, 0
  %2788 = vmatprep.subr.bf16.mxu0 0
  %2789 = vmatpush1.bf16.msra.mxu0 %v2318
  %2790 = vmatprep.subr.bf16.mxu0 0
  %2791 = vmatpush1.bf16.msra.mxu0 0
  %2792 = vmatprep.subr.bf16.mxu0 0
  %2793 = vmatpush1.bf16.msra.mxu0 0
  %2794 = vmatprep.subr.bf16.mxu0 0
  %2795 = vmatpush1.bf16.msra.mxu0 0
  %2796 = vmatprep.subr.bf16.mxu0 0
  %2797 = vmatpush1.bf16.msra.mxu0 0
  %2798 = vmatprep.subr.bf16.mxu0 0
  %2799 = vmatpush1.bf16.msra.mxu0 0
  %2800 = vmatprep.subr.bf16.mxu0 0
  %2801 = vmatpush1.bf16.msra.mxu0 0
  %2802 = vmatprep.subr.bf16.mxu0 0
  %2803 = vmatpush1.bf16.msra.mxu0 0
  %2804 = vmatprep.subr.bf16.mxu0 0
  %2805 = vmatpush1.bf16.msra.mxu0 0
  %2806 = vmatprep.subr.bf16.mxu0 0
  %2807 = vmatpush1.bf16.msra.mxu0 0
  %2808 = vmatprep.subr.bf16.mxu0 0
  %2809 = vmatpush1.bf16.msra.mxu0 0
  %2810 = vmatprep.subr.bf16.mxu0 0
  %2811 = vmatpush1.bf16.msra.mxu0 0
  %2812 = vmatprep.subr.bf16.mxu0 0
  %2813 = vmatpush1.bf16.msra.mxu0 0
  %2814 = vmatprep.subr.bf16.mxu0 0
  %2815 = vmatpush1.bf16.msra.mxu0 0
  %2816 = vmatprep.subr.bf16.mxu0 0
  %2817 = vmatpush1.bf16.msra.mxu0 0
  %2818 = vmatprep.subr.bf16.mxu0 0
  %2819 = vmatpush1.bf16.msra.mxu0 0
  %2820 = vmatprep.mubr.bf16.mxu0 0
  %2821 = vmatmul.mubr.bf16.gmra.mrb[0].mxu0 %v2786
  %v2822 = vpop.f32.mrb[0].mxu0
  %v2823 = vadd.f32 0.0, %v2822
  %v2824 = vpop.f32.mrb[0].mxu0
  %v2825 = vpop.f32.mrb[0].mxu0
  %v2826 = vpop.f32.mrb[0].mxu0
  %2827 = vdwg.mxu0
  %v2828 = vadd.f32 %v2780, %v2823
  %v2829 = vxor.u32 %v2828, 2147483648
  %v2830 = vmul.f32 %v2829, 1.442695
  %v2831 = vpow.pop %v2830
  %v2832 = vadd.f32 %v2831, 1.0
  %v2833 = vrcp.pop %v2832
  %v2834 = vmul.f32 1.0, %v2833
  %v2835 = vtanh.pop %v2828
  %v2836 = vmul.f32 %v2834, %v2768
  %2838 = vrot.lane.b32.xlu0 %v2835, 96
  %v2839 = vpop.permute.xlu0 %2838
  %v2841 = vmul.f32 %v2834, %v2839
  %2843 = vrot.lane.b32.xlu0 %v2841, 16
  %v2844 = vpop.permute.xlu0 %2843
  %v2846 = vadd.f32 %v2836, %v2844
  %v2847 = vtanh.pop %v2846
  %2849 = vrot.lane.b32.xlu0 %v2847, 32
  %v2850 = vpop.permute.xlu0 %2849
  %v2852 = vmul.f32 %v2834, %v2850
  %2854 = vrot.lane.b32.xlu0 %v2852, 80
  %v2855 = vpop.permute.xlu0 %2854
  %2857 = vst.msk [vmem:[%s608] sm:$0xff] %vm1580, %v2855
  %v2858 = vld [vmem:[%s1371] sm:$0xff]
  %v2859 = vpack.c.bf16 %v2852, %v2852
  %2861 = vrot.lane.b32.xlu0 %v2859, 80
  %v2862 = vpop.permute.xlu0 %2861
  %v2864 = vsel %vm1580, %v2862, 0
  %2866 = vmatprep.subr.bf16.mxu0 0
  %2867 = vmatpush1.bf16.msra.mxu0 %v2318
  %2868 = vmatprep.subr.bf16.mxu0 0
  %2869 = vmatpush1.bf16.msra.mxu0 0
  %2870 = vmatprep.subr.bf16.mxu0 0
  %2871 = vmatpush1.bf16.msra.mxu0 0
  %2872 = vmatprep.subr.bf16.mxu0 0
  %2873 = vmatpush1.bf16.msra.mxu0 0
  %2874 = vmatprep.subr.bf16.mxu0 0
  %2875 = vmatpush1.bf16.msra.mxu0 0
  %2876 = vmatprep.subr.bf16.mxu0 0
  %2877 = vmatpush1.bf16.msra.mxu0 0
  %2878 = vmatprep.subr.bf16.mxu0 0
  %2879 = vmatpush1.bf16.msra.mxu0 0
  %2880 = vmatprep.subr.bf16.mxu0 0
  %2881 = vmatpush1.bf16.msra.mxu0 0
  %2882 = vmatprep.subr.bf16.mxu0 0
  %2883 = vmatpush1.bf16.msra.mxu0 0
  %2884 = vmatprep.subr.bf16.mxu0 0
  %2885 = vmatpush1.bf16.msra.mxu0 0
  %2886 = vmatprep.subr.bf16.mxu0 0
  %2887 = vmatpush1.bf16.msra.mxu0 0
  %2888 = vmatprep.subr.bf16.mxu0 0
  %2889 = vmatpush1.bf16.msra.mxu0 0
  %2890 = vmatprep.subr.bf16.mxu0 0
  %2891 = vmatpush1.bf16.msra.mxu0 0
  %2892 = vmatprep.subr.bf16.mxu0 0
  %2893 = vmatpush1.bf16.msra.mxu0 0
  %2894 = vmatprep.subr.bf16.mxu0 0
  %2895 = vmatpush1.bf16.msra.mxu0 0
  %2896 = vmatprep.subr.bf16.mxu0 0
  %2897 = vmatpush1.bf16.msra.mxu0 0
  %2898 = vmatprep.mubr.bf16.mxu0 0
  %2899 = vmatmul.mubr.bf16.gmra.mrb[0].mxu0 %v2864
  %v2900 = vpop.f32.mrb[0].mxu0
  %v2901 = vadd.f32 0.0, %v2900
  %v2902 = vpop.f32.mrb[0].mxu0
  %v2903 = vpop.f32.mrb[0].mxu0
  %v2904 = vpop.f32.mrb[0].mxu0
  %2905 = vdwg.mxu0
  %v2906 = vadd.f32 %v2858, %v2901
  %v2907 = vxor.u32 %v2906, 2147483648
  %v2908 = vmul.f32 %v2907, 1.442695
  %v2909 = vpow.pop %v2908
  %v2910 = vadd.f32 %v2909, 1.0
  %v2911 = vrcp.pop %v2910
  %v2912 = vmul.f32 1.0, %v2911
  %v2913 = vtanh.pop %v2906
  %v2914 = vmul.f32 %v2912, %v2846
  %2916 = vrot.lane.b32.xlu0 %v2913, 96
  %v2917 = vpop.permute.xlu0 %2916
  %v2919 = vmul.f32 %v2912, %v2917
  %2921 = vrot.lane.b32.xlu0 %v2919, 16
  %v2922 = vpop.permute.xlu0 %2921
  %v2924 = vadd.f32 %v2914, %v2922
  %v2925 = vtanh.pop %v2924
  %2927 = vrot.lane.b32.xlu0 %v2925, 32
  %v2928 = vpop.permute.xlu0 %2927
  %v2930 = vmul.f32 %v2912, %v2928
  %2932 = vrot.lane.b32.xlu0 %v2930, 80
  %v2933 = vpop.permute.xlu0 %2932
  %2935 = vst.msk [vmem:[%s688] sm:$0xff] %vm1580, %v2933
  // Predicated region
  $region46: #{encoder_lstm_forward.1} parent=0 // pred_check
    _
  $region47: #{encoder_lstm_forward.1} parent=0 // pred_check_branch
    %2937 = sbr.rel (0) target = $region49
  $region48: #{encoder_lstm_forward.1} parent=0 // pred_region
    _
  $region49: #{encoder_lstm_forward.1} parent=0 // pred_fallthru
    _
  // Predicated region
  $region50: #{encoder_lstm_forward.1} parent=0 // pred_check
    _
  $region51: #{encoder_lstm_forward.1} parent=0 // pred_check_branch
    %2939 = sbr.rel (0) target = $region53
  $region52: #{encoder_lstm_forward.1} parent=0 // pred_region
    _
  $region53: #{encoder_lstm_forward.1} parent=0 // pred_fallthru
    _

</llo_original>
